<compile_context>
chip_gen: v7x
topology: tpu7x:2x2x1
jax: 0.10.0
libtpu: 0.0.40
codegen_flags: <defaults>
</compile_context>

<pallas_src>
import jax
import jax.numpy as jnp
from jax.experimental import pallas as pl
from jax.experimental.pallas import tpu as pltpu


# ----------------------------------------------------------------------------
# Fused kernel factory: all layers + both directions + full sequence.
# ----------------------------------------------------------------------------
def _make_reencoder_kernel(num_layers, T, B, H):
    """Kernel args: x_ref, (wih_f, whh_f, b_f, wih_b, whh_b, b_b) * L, out_ref."""

    def kernel(*refs):
        x_ref = refs[0]
        w_refs = refs[1:1 + num_layers * 6]
        out_ref = refs[1 + num_layers * 6]      # (T*B, 2H) — also inter-layer buffer

        def run_direction(xw, whh, reverse, col_off):
            # xw: (T*B, 4H) value — hoisted input projection + bias.
            # whh: (H, 4H) value — recurrent weights.
            h = jnp.zeros((B, H), jnp.float32)
            c = jnp.zeros((B, H), jnp.float32)
            steps = range(T - 1, -1, -1) if reverse else range(T)
            for t in steps:                      # static unroll (T known at trace time)
                gates = xw[t * B:(t + 1) * B, :] + jnp.dot(
                    h, whh, preferred_element_type=jnp.float32)   # (B, 4H)
                # PyTorch gate order: i, f, g, o
                i_g = jax.nn.sigmoid(gates[:, 0 * H:1 * H])
                f_g = jax.nn.sigmoid(gates[:, 1 * H:2 * H])
                g_g = jnp.tanh(gates[:, 2 * H:3 * H])
                o_g = jax.nn.sigmoid(gates[:, 3 * H:4 * H])
                c = f_g * c + i_g * g_g
                h = o_g * jnp.tanh(c)
                # Store this timestep's hidden state into the layer-output buffer.
                out_ref[t * B:(t + 1) * B, col_off:col_off + H] = h

        for layer in range(num_layers):
            # Layer input: original sequence for layer 0, previous layer's output after.
            inp = x_ref[...] if layer == 0 else out_ref[...]       # (T*B, D_layer)
            wih_f, whh_f, b_f, wih_b, whh_b, b_b = w_refs[layer * 6:(layer + 1) * 6]

            # Hoisted input projections: one MXU matmul per direction per layer.
            xw_f = jnp.dot(inp, wih_f[...],
                           preferred_element_type=jnp.float32) + b_f[...]   # (T*B, 4H)
            xw_b = jnp.dot(inp, wih_b[...],
                           preferred_element_type=jnp.float32) + b_b[...]   # (T*B, 4H)

            whh_f_v = whh_f[...]
            whh_b_v = whh_b[...]

            run_direction(xw_f, whh_f_v, reverse=False, col_off=0)   # forward  -> cols [0, H)
            run_direction(xw_b, whh_b_v, reverse=True, col_off=H)    # backward -> cols [H, 2H)

    return kernel


# ----------------------------------------------------------------------------
# Wrapper: one pallas_call for the whole ReEncoder forward.
# ----------------------------------------------------------------------------
@jax.jit
def reencoder_forward(G, layers_params):
    """G: (B, T, D_in) batch-first f32.  Returns (B, T, 2H) f32."""
    B, T, D0 = G.shape
    H = layers_params[0][0][1].shape[0]        # whh_t has shape (H, 4H)
    num_layers = len(layers_params)

    # Time-major flattened activations: row index = t*B + b.
    x_flat = jnp.transpose(G, (1, 0, 2)).reshape(T * B, D0)

    flat_weights = []
    for fwd_params, bwd_params in layers_params:
        flat_weights.extend(fwd_params)        # (wih_t, whh_t, b)
        flat_weights.extend(bwd_params)

    kernel = _make_reencoder_kernel(num_layers, T, B, H)

    out_flat = pl.pallas_call(
        kernel,
        out_shape=jax.ShapeDtypeStruct((T * B, 2 * H), jnp.float32),
        in_specs=[pl.BlockSpec(memory_space=pltpu.MemorySpace.VMEM)]
        * (1 + len(flat_weights)),
        out_specs=pl.BlockSpec(memory_space=pltpu.MemorySpace.VMEM),
    )(x_flat, *flat_weights)

    # (T*B, 2H) -> (B, T, 2H) : one tiny layout op on the final 2 KB result.
    return jnp.transpose(out_flat.reshape(T, B, 2 * H), (1, 0, 2))


# ----------------------------------------------------------------------------
# ReEncoder: stacked bidirectional LSTM, dropout in eval mode (identity).
# ----------------------------------------------------------------------------
class ReEncoderPallas:
    def __init__(self, hidden_size, reenc_rnn_layer, key):
        self.hidden_size = hidden_size
        self.num_layers = reenc_rnn_layer
        rnn_in_size = hidden_size * 2 * 4
        H = hidden_size                              # bidirectional -> hidden = hidden_size
        k = 1.0 / jnp.sqrt(jnp.float32(H))           # PyTorch default init range

        layers = []
        for layer in range(reenc_rnn_layer):
            d_in = rnn_in_size if layer == 0 else H * 2
            params = []
            for _ in range(2):                       # fwd, bwd
                key, k1, k2, k3, k4 = jax.random.split(key, 5)
                w_ih = jax.random.uniform(k1, (4 * H, d_in), jnp.float32, -k, k)
                w_hh = jax.random.uniform(k2, (4 * H, H), jnp.float32, -k, k)
                b_ih = jax.random.uniform(k3, (4 * H,), jnp.float32, -k, k)
                b_hh = jax.random.uniform(k4, (4 * H,), jnp.float32, -k, k)
                params.append((w_ih.T, w_hh.T, (b_ih + b_hh)[None, :]))
            layers.append(tuple(params))
        self.layers = tuple(layers)

    def __call__(self, G):
        # dropout is identity (eval / p=0)
        return reencoder_forward(G, self.layers)


# ----------------------------------------------------------------------------
# Pure-JAX reference for verification.
# ----------------------------------------------------------------------------
def _lstm_ref(x_tbd, wih_t, whh_t, b):
    T, B, _ = x_tbd.shape
    H = whh_t.shape[0]

    def step(carry, x_t):
        h, c = carry
        gates = x_t @ wih_t + h @ whh_t + b
        i_g = jax.nn.sigmoid(gates[:, 0 * H:1 * H])
        f_g = jax.nn.sigmoid(gates[:, 1 * H:2 * H])
        g_g = jnp.tanh(gates[:, 2 * H:3 * H])
        o_g = jax.nn.sigmoid(gates[:, 3 * H:4 * H])
        c_new = f_g * c + i_g * g_g
        h_new = o_g * jnp.tanh(c_new)
        return (h_new, c_new), h_new

    init = (jnp.zeros((B, H), jnp.float32), jnp.zeros((B, H), jnp.float32))
    _, hs = jax.lax.scan(step, init, x_tbd)
    return hs


def reencoder_ref(G, model):
    M = G
    for fwd_params, bwd_params in model.layers:
        x_tbd = jnp.transpose(M, (1, 0, 2))
        h_fwd = _lstm_ref(x_tbd, *fwd_params)
        h_bwd = _lstm_ref(x_tbd[::-1], *bwd_params)[::-1]
        M = jnp.transpose(jnp.concatenate([h_fwd, h_bwd], axis=-1), (1, 0, 2))
    return M


if __name__ == "__main__":
    # opt: hidden_size=16, birnn=1, reenc_rnn_layer=2, rnn_type='lstm', dropout=0
    hidden_size = 16
    reenc_rnn_layer = 2
    batch, seq = 2, 8
    rnn_in_size = hidden_size * 2 * 4      # 128

    key = jax.random.PRNGKey(0)
    key, gkey, pkey = jax.random.split(key, 3)
    G = jax.random.normal(gkey, (batch, seq, rnn_in_size), jnp.float32)

    model = ReEncoderPallas(hidden_size, reenc_rnn_layer, pkey)

    M = jax.block_until_ready(model(G))           # (B, T, 2*hidden_size)
    M_ref = jax.block_until_ready(reencoder_ref(G, model))

    assert M.shape == (batch, seq, hidden_size * 2), M.shape
    assert jnp.allclose(M, M_ref, atol=1e-4, rtol=1e-4), "mismatch vs reference"

    print("KERNEL_OK")
</pallas_src>

<mosaic_0001>
module attributes {stable_mosaic.version = 11 : i64} {
  func.func @kernel(%arg0: memref<16x128xf32, #tpu.memory_space<vmem>>, %arg1: memref<128x64xf32, #tpu.memory_space<vmem>>, %arg2: memref<16x64xf32, #tpu.memory_space<vmem>>, %arg3: memref<1x64xf32, #tpu.memory_space<vmem>>, %arg4: memref<128x64xf32, #tpu.memory_space<vmem>>, %arg5: memref<16x64xf32, #tpu.memory_space<vmem>>, %arg6: memref<1x64xf32, #tpu.memory_space<vmem>>, %arg7: memref<32x64xf32, #tpu.memory_space<vmem>>, %arg8: memref<16x64xf32, #tpu.memory_space<vmem>>, %arg9: memref<1x64xf32, #tpu.memory_space<vmem>>, %arg10: memref<32x64xf32, #tpu.memory_space<vmem>>, %arg11: memref<16x64xf32, #tpu.memory_space<vmem>>, %arg12: memref<1x64xf32, #tpu.memory_space<vmem>>, %arg13: memref<16x32xf32, #tpu.memory_space<vmem>>) attributes {dimension_semantics = [], scalar_prefetch = 0 : i64, scratch_operands = 0 : i64, tpu.core_type = #tpu.core_type<tc>} {
    %c0 = arith.constant 0 : index
    %c0_0 = arith.constant 0 : index
    %0 = vector.load %arg0[%c0, %c0_0] : memref<16x128xf32, #tpu.memory_space<vmem>>, vector<16x128xf32>
    %c0_1 = arith.constant 0 : index
    %c0_2 = arith.constant 0 : index
    %1 = vector.load %arg1[%c0_1, %c0_2] : memref<128x64xf32, #tpu.memory_space<vmem>>, vector<128x64xf32>
    %cst = arith.constant dense<0.000000e+00> : vector<16x64xf32>
    %2 = tpu.matmul %0, %1, %cst {dimension_numbers = #tpu.dot_dimension_numbers<[1], [0], [0], [1], [0, 0, 1, 1], [], []>} : vector<16x128xf32>, vector<128x64xf32>, vector<16x64xf32> -> vector<16x64xf32>
    %c0_3 = arith.constant 0 : index
    %c0_4 = arith.constant 0 : index
    %3 = vector.load %arg3[%c0_3, %c0_4] : memref<1x64xf32, #tpu.memory_space<vmem>>, vector<1x64xf32>
    %4 = vector.broadcast %3 : vector<1x64xf32> to vector<16x64xf32>
    %5 = arith.addf %2, %4 : vector<16x64xf32>
    %c0_5 = arith.constant 0 : index
    %c0_6 = arith.constant 0 : index
    %6 = vector.load %arg4[%c0_5, %c0_6] : memref<128x64xf32, #tpu.memory_space<vmem>>, vector<128x64xf32>
    %cst_7 = arith.constant dense<0.000000e+00> : vector<16x64xf32>
    %7 = tpu.matmul %0, %6, %cst_7 {dimension_numbers = #tpu.dot_dimension_numbers<[1], [0], [0], [1], [0, 0, 1, 1], [], []>} : vector<16x128xf32>, vector<128x64xf32>, vector<16x64xf32> -> vector<16x64xf32>
    %c0_8 = arith.constant 0 : index
    %c0_9 = arith.constant 0 : index
    %8 = vector.load %arg6[%c0_8, %c0_9] : memref<1x64xf32, #tpu.memory_space<vmem>>, vector<1x64xf32>
    %9 = vector.broadcast %8 : vector<1x64xf32> to vector<16x64xf32>
    %10 = arith.addf %7, %9 : vector<16x64xf32>
    %c0_10 = arith.constant 0 : index
    %c0_11 = arith.constant 0 : index
    %11 = vector.load %arg2[%c0_10, %c0_11] : memref<16x64xf32, #tpu.memory_space<vmem>>, vector<16x64xf32>
    %c0_12 = arith.constant 0 : index
    %c0_13 = arith.constant 0 : index
    %12 = vector.load %arg5[%c0_12, %c0_13] : memref<16x64xf32, #tpu.memory_space<vmem>>, vector<16x64xf32>
    %cst_14 = arith.constant 0.000000e+00 : f32
    %13 = vector.broadcast %cst_14 : f32 to vector<2x16xf32>
    %cst_15 = arith.constant 0.000000e+00 : f32
    %14 = vector.broadcast %cst_15 : f32 to vector<2x16xf32>
    %15 = vector.extract_strided_slice %5 {offsets = [0, 0], sizes = [2, 64], strides = [1, 1]} : vector<16x64xf32> to vector<2x64xf32>
    %cst_16 = arith.constant dense<0.000000e+00> : vector<2x64xf32>
    %16 = tpu.matmul %13, %11, %cst_16 {dimension_numbers = #tpu.dot_dimension_numbers<[1], [0], [0], [1], [0, 0, 1, 1], [], []>} : vector<2x16xf32>, vector<16x64xf32>, vector<2x64xf32> -> vector<2x64xf32>
    %17 = arith.addf %15, %16 : vector<2x64xf32>
    %18 = vector.extract_strided_slice %17 {offsets = [0, 0], sizes = [2, 16], strides = [1, 1]} : vector<2x64xf32> to vector<2x16xf32>
    %19 = arith.negf %18 : vector<2x16xf32>
    %20 = math.exp %19 : vector<2x16xf32>
    %cst_17 = arith.constant 1.000000e+00 : f32
    %21 = vector.broadcast %cst_17 : f32 to vector<2x16xf32>
    %22 = arith.addf %21, %20 : vector<2x16xf32>
    %23 = arith.divf %21, %22 : vector<2x16xf32>
    %24 = vector.extract_strided_slice %17 {offsets = [0, 16], sizes = [2, 16], strides = [1, 1]} : vector<2x64xf32> to vector<2x16xf32>
    %25 = arith.negf %24 : vector<2x16xf32>
    %26 = math.exp %25 : vector<2x16xf32>
    %cst_18 = arith.constant 1.000000e+00 : f32
    %27 = vector.broadcast %cst_18 : f32 to vector<2x16xf32>
    %28 = arith.addf %27, %26 : vector<2x16xf32>
    %29 = arith.divf %27, %28 : vector<2x16xf32>
    %30 = vector.extract_strided_slice %17 {offsets = [0, 32], sizes = [2, 16], strides = [1, 1]} : vector<2x64xf32> to vector<2x16xf32>
    %31 = math.tanh %30 : vector<2x16xf32>
    %32 = vector.extract_strided_slice %17 {offsets = [0, 48], sizes = [2, 16], strides = [1, 1]} : vector<2x64xf32> to vector<2x16xf32>
    %33 = arith.negf %32 : vector<2x16xf32>
    %34 = math.exp %33 : vector<2x16xf32>
    %cst_19 = arith.constant 1.000000e+00 : f32
    %35 = vector.broadcast %cst_19 : f32 to vector<2x16xf32>
    %36 = arith.addf %35, %34 : vector<2x16xf32>
    %37 = arith.divf %35, %36 : vector<2x16xf32>
    %38 = arith.mulf %29, %14 : vector<2x16xf32>
    %39 = arith.mulf %23, %31 : vector<2x16xf32>
    %40 = arith.addf %38, %39 : vector<2x16xf32>
    %41 = math.tanh %40 : vector<2x16xf32>
    %42 = arith.mulf %37, %41 : vector<2x16xf32>
    %c0_20 = arith.constant 0 : index
    %c0_21 = arith.constant 0 : index
    %43 = vector.load %arg13[%c0_20, %c0_21] : memref<16x32xf32, #tpu.memory_space<vmem>>, vector<2x16xf32>
    tpu.vector_store %arg13[%c0_20, %c0_21], %42 {strides = array<i32>} : memref<16x32xf32, #tpu.memory_space<vmem>>, vector<2x16xf32>,
    %44 = vector.extract_strided_slice %5 {offsets = [2, 0], sizes = [2, 64], strides = [1, 1]} : vector<16x64xf32> to vector<2x64xf32>
    %cst_22 = arith.constant dense<0.000000e+00> : vector<2x64xf32>
    %45 = tpu.matmul %42, %11, %cst_22 {dimension_numbers = #tpu.dot_dimension_numbers<[1], [0], [0], [1], [0, 0, 1, 1], [], []>} : vector<2x16xf32>, vector<16x64xf32>, vector<2x64xf32> -> vector<2x64xf32>
    %46 = arith.addf %44, %45 : vector<2x64xf32>
    %47 = vector.extract_strided_slice %46 {offsets = [0, 0], sizes = [2, 16], strides = [1, 1]} : vector<2x64xf32> to vector<2x16xf32>
    %48 = arith.negf %47 : vector<2x16xf32>
    %49 = math.exp %48 : vector<2x16xf32>
    %cst_23 = arith.constant 1.000000e+00 : f32
    %50 = vector.broadcast %cst_23 : f32 to vector<2x16xf32>
    %51 = arith.addf %50, %49 : vector<2x16xf32>
    %52 = arith.divf %50, %51 : vector<2x16xf32>
    %53 = vector.extract_strided_slice %46 {offsets = [0, 16], sizes = [2, 16], strides = [1, 1]} : vector<2x64xf32> to vector<2x16xf32>
    %54 = arith.negf %53 : vector<2x16xf32>
    %55 = math.exp %54 : vector<2x16xf32>
    %cst_24 = arith.constant 1.000000e+00 : f32
    %56 = vector.broadcast %cst_24 : f32 to vector<2x16xf32>
    %57 = arith.addf %56, %55 : vector<2x16xf32>
    %58 = arith.divf %56, %57 : vector<2x16xf32>
    %59 = vector.extract_strided_slice %46 {offsets = [0, 32], sizes = [2, 16], strides = [1, 1]} : vector<2x64xf32> to vector<2x16xf32>
    %60 = math.tanh %59 : vector<2x16xf32>
    %61 = vector.extract_strided_slice %46 {offsets = [0, 48], sizes = [2, 16], strides = [1, 1]} : vector<2x64xf32> to vector<2x16xf32>
    %62 = arith.negf %61 : vector<2x16xf32>
    %63 = math.exp %62 : vector<2x16xf32>
    %cst_25 = arith.constant 1.000000e+00 : f32
    %64 = vector.broadcast %cst_25 : f32 to vector<2x16xf32>
    %65 = arith.addf %64, %63 : vector<2x16xf32>
    %66 = arith.divf %64, %65 : vector<2x16xf32>
    %67 = arith.mulf %58, %40 : vector<2x16xf32>
    %68 = arith.mulf %52, %60 : vector<2x16xf32>
    %69 = arith.addf %67, %68 : vector<2x16xf32>
    %70 = math.tanh %69 : vector<2x16xf32>
    %71 = arith.mulf %66, %70 : vector<2x16xf32>
    %c2 = arith.constant 2 : index
    %c0_26 = arith.constant 0 : index
    %72 = vector.load %arg13[%c2, %c0_26] : memref<16x32xf32, #tpu.memory_space<vmem>>, vector<2x16xf32>
    tpu.vector_store %arg13[%c2, %c0_26], %71 {strides = array<i32>} : memref<16x32xf32, #tpu.memory_space<vmem>>, vector<2x16xf32>,
    %73 = vector.extract_strided_slice %5 {offsets = [4, 0], sizes = [2, 64], strides = [1, 1]} : vector<16x64xf32> to vector<2x64xf32>
    %cst_27 = arith.constant dense<0.000000e+00> : vector<2x64xf32>
    %74 = tpu.matmul %71, %11, %cst_27 {dimension_numbers = #tpu.dot_dimension_numbers<[1], [0], [0], [1], [0, 0, 1, 1], [], []>} : vector<2x16xf32>, vector<16x64xf32>, vector<2x64xf32> -> vector<2x64xf32>
    %75 = arith.addf %73, %74 : vector<2x64xf32>
    %76 = vector.extract_strided_slice %75 {offsets = [0, 0], sizes = [2, 16], strides = [1, 1]} : vector<2x64xf32> to vector<2x16xf32>
    %77 = arith.negf %76 : vector<2x16xf32>
    %78 = math.exp %77 : vector<2x16xf32>
    %cst_28 = arith.constant 1.000000e+00 : f32
    %79 = vector.broadcast %cst_28 : f32 to vector<2x16xf32>
    %80 = arith.addf %79, %78 : vector<2x16xf32>
    %81 = arith.divf %79, %80 : vector<2x16xf32>
    %82 = vector.extract_strided_slice %75 {offsets = [0, 16], sizes = [2, 16], strides = [1, 1]} : vector<2x64xf32> to vector<2x16xf32>
    %83 = arith.negf %82 : vector<2x16xf32>
    %84 = math.exp %83 : vector<2x16xf32>
    %cst_29 = arith.constant 1.000000e+00 : f32
    %85 = vector.broadcast %cst_29 : f32 to vector<2x16xf32>
    %86 = arith.addf %85, %84 : vector<2x16xf32>
    %87 = arith.divf %85, %86 : vector<2x16xf32>
    %88 = vector.extract_strided_slice %75 {offsets = [0, 32], sizes = [2, 16], strides = [1, 1]} : vector<2x64xf32> to vector<2x16xf32>
    %89 = math.tanh %88 : vector<2x16xf32>
    %90 = vector.extract_strided_slice %75 {offsets = [0, 48], sizes = [2, 16], strides = [1, 1]} : vector<2x64xf32> to vector<2x16xf32>
    %91 = arith.negf %90 : vector<2x16xf32>
    %92 = math.exp %91 : vector<2x16xf32>
    %cst_30 = arith.constant 1.000000e+00 : f32
    %93 = vector.broadcast %cst_30 : f32 to vector<2x16xf32>
    %94 = arith.addf %93, %92 : vector<2x16xf32>
    %95 = arith.divf %93, %94 : vector<2x16xf32>
    %96 = arith.mulf %87, %69 : vector<2x16xf32>
    %97 = arith.mulf %81, %89 : vector<2x16xf32>
    %98 = arith.addf %96, %97 : vector<2x16xf32>
    %99 = math.tanh %98 : vector<2x16xf32>
    %100 = arith.mulf %95, %99 : vector<2x16xf32>
    %c4 = arith.constant 4 : index
    %c0_31 = arith.constant 0 : index
    %101 = vector.load %arg13[%c4, %c0_31] : memref<16x32xf32, #tpu.memory_space<vmem>>, vector<2x16xf32>
    tpu.vector_store %arg13[%c4, %c0_31], %100 {strides = array<i32>} : memref<16x32xf32, #tpu.memory_space<vmem>>, vector<2x16xf32>,
    %102 = vector.extract_strided_slice %5 {offsets = [6, 0], sizes = [2, 64], strides = [1, 1]} : vector<16x64xf32> to vector<2x64xf32>
    %cst_32 = arith.constant dense<0.000000e+00> : vector<2x64xf32>
    %103 = tpu.matmul %100, %11, %cst_32 {dimension_numbers = #tpu.dot_dimension_numbers<[1], [0], [0], [1], [0, 0, 1, 1], [], []>} : vector<2x16xf32>, vector<16x64xf32>, vector<2x64xf32> -> vector<2x64xf32>
    %104 = arith.addf %102, %103 : vector<2x64xf32>
    %105 = vector.extract_strided_slice %104 {offsets = [0, 0], sizes = [2, 16], strides = [1, 1]} : vector<2x64xf32> to vector<2x16xf32>
    %106 = arith.negf %105 : vector<2x16xf32>
    %107 = math.exp %106 : vector<2x16xf32>
    %cst_33 = arith.constant 1.000000e+00 : f32
    %108 = vector.broadcast %cst_33 : f32 to vector<2x16xf32>
    %109 = arith.addf %108, %107 : vector<2x16xf32>
    %110 = arith.divf %108, %109 : vector<2x16xf32>
    %111 = vector.extract_strided_slice %104 {offsets = [0, 16], sizes = [2, 16], strides = [1, 1]} : vector<2x64xf32> to vector<2x16xf32>
    %112 = arith.negf %111 : vector<2x16xf32>
    %113 = math.exp %112 : vector<2x16xf32>
    %cst_34 = arith.constant 1.000000e+00 : f32
    %114 = vector.broadcast %cst_34 : f32 to vector<2x16xf32>
    %115 = arith.addf %114, %113 : vector<2x16xf32>
    %116 = arith.divf %114, %115 : vector<2x16xf32>
    %117 = vector.extract_strided_slice %104 {offsets = [0, 32], sizes = [2, 16], strides = [1, 1]} : vector<2x64xf32> to vector<2x16xf32>
    %118 = math.tanh %117 : vector<2x16xf32>
    %119 = vector.extract_strided_slice %104 {offsets = [0, 48], sizes = [2, 16], strides = [1, 1]} : vector<2x64xf32> to vector<2x16xf32>
    %120 = arith.negf %119 : vector<2x16xf32>
    %121 = math.exp %120 : vector<2x16xf32>
    %cst_35 = arith.constant 1.000000e+00 : f32
    %122 = vector.broadcast %cst_35 : f32 to vector<2x16xf32>
    %123 = arith.addf %122, %121 : vector<2x16xf32>
    %124 = arith.divf %122, %123 : vector<2x16xf32>
    %125 = arith.mulf %116, %98 : vector<2x16xf32>
    %126 = arith.mulf %110, %118 : vector<2x16xf32>
    %127 = arith.addf %125, %126 : vector<2x16xf32>
    %128 = math.tanh %127 : vector<2x16xf32>
    %129 = arith.mulf %124, %128 : vector<2x16xf32>
    %c6 = arith.constant 6 : index
    %c0_36 = arith.constant 0 : index
    %130 = vector.load %arg13[%c6, %c0_36] : memref<16x32xf32, #tpu.memory_space<vmem>>, vector<2x16xf32>
    tpu.vector_store %arg13[%c6, %c0_36], %129 {strides = array<i32>} : memref<16x32xf32, #tpu.memory_space<vmem>>, vector<2x16xf32>,
    %131 = vector.extract_strided_slice %5 {offsets = [8, 0], sizes = [2, 64], strides = [1, 1]} : vector<16x64xf32> to vector<2x64xf32>
    %cst_37 = arith.constant dense<0.000000e+00> : vector<2x64xf32>
    %132 = tpu.matmul %129, %11, %cst_37 {dimension_numbers = #tpu.dot_dimension_numbers<[1], [0], [0], [1], [0, 0, 1, 1], [], []>} : vector<2x16xf32>, vector<16x64xf32>, vector<2x64xf32> -> vector<2x64xf32>
    %133 = arith.addf %131, %132 : vector<2x64xf32>
    %134 = vector.extract_strided_slice %133 {offsets = [0, 0], sizes = [2, 16], strides = [1, 1]} : vector<2x64xf32> to vector<2x16xf32>
    %135 = arith.negf %134 : vector<2x16xf32>
    %136 = math.exp %135 : vector<2x16xf32>
    %cst_38 = arith.constant 1.000000e+00 : f32
    %137 = vector.broadcast %cst_38 : f32 to vector<2x16xf32>
    %138 = arith.addf %137, %136 : vector<2x16xf32>
    %139 = arith.divf %137, %138 : vector<2x16xf32>
    %140 = vector.extract_strided_slice %133 {offsets = [0, 16], sizes = [2, 16], strides = [1, 1]} : vector<2x64xf32> to vector<2x16xf32>
    %141 = arith.negf %140 : vector<2x16xf32>
    %142 = math.exp %141 : vector<2x16xf32>
    %cst_39 = arith.constant 1.000000e+00 : f32
    %143 = vector.broadcast %cst_39 : f32 to vector<2x16xf32>
    %144 = arith.addf %143, %142 : vector<2x16xf32>
    %145 = arith.divf %143, %144 : vector<2x16xf32>
    %146 = vector.extract_strided_slice %133 {offsets = [0, 32], sizes = [2, 16], strides = [1, 1]} : vector<2x64xf32> to vector<2x16xf32>
    %147 = math.tanh %146 : vector<2x16xf32>
    %148 = vector.extract_strided_slice %133 {offsets = [0, 48], sizes = [2, 16], strides = [1, 1]} : vector<2x64xf32> to vector<2x16xf32>
    %149 = arith.negf %148 : vector<2x16xf32>
    %150 = math.exp %149 : vector<2x16xf32>
    %cst_40 = arith.constant 1.000000e+00 : f32
    %151 = vector.broadcast %cst_40 : f32 to vector<2x16xf32>
    %152 = arith.addf %151, %150 : vector<2x16xf32>
    %153 = arith.divf %151, %152 : vector<2x16xf32>
    %154 = arith.mulf %145, %127 : vector<2x16xf32>
    %155 = arith.mulf %139, %147 : vector<2x16xf32>
    %156 = arith.addf %154, %155 : vector<2x16xf32>
    %157 = math.tanh %156 : vector<2x16xf32>
    %158 = arith.mulf %153, %157 : vector<2x16xf32>
    %c8 = arith.constant 8 : index
    %c0_41 = arith.constant 0 : index
    %159 = vector.load %arg13[%c8, %c0_41] : memref<16x32xf32, #tpu.memory_space<vmem>>, vector<2x16xf32>
    tpu.vector_store %arg13[%c8, %c0_41], %158 {strides = array<i32>} : memref<16x32xf32, #tpu.memory_space<vmem>>, vector<2x16xf32>,
    %160 = vector.extract_strided_slice %5 {offsets = [10, 0], sizes = [2, 64], strides = [1, 1]} : vector<16x64xf32> to vector<2x64xf32>
    %cst_42 = arith.constant dense<0.000000e+00> : vector<2x64xf32>
    %161 = tpu.matmul %158, %11, %cst_42 {dimension_numbers = #tpu.dot_dimension_numbers<[1], [0], [0], [1], [0, 0, 1, 1], [], []>} : vector<2x16xf32>, vector<16x64xf32>, vector<2x64xf32> -> vector<2x64xf32>
    %162 = arith.addf %160, %161 : vector<2x64xf32>
    %163 = vector.extract_strided_slice %162 {offsets = [0, 0], sizes = [2, 16], strides = [1, 1]} : vector<2x64xf32> to vector<2x16xf32>
    %164 = arith.negf %163 : vector<2x16xf32>
    %165 = math.exp %164 : vector<2x16xf32>
    %cst_43 = arith.constant 1.000000e+00 : f32
    %166 = vector.broadcast %cst_43 : f32 to vector<2x16xf32>
    %167 = arith.addf %166, %165 : vector<2x16xf32>
    %168 = arith.divf %166, %167 : vector<2x16xf32>
    %169 = vector.extract_strided_slice %162 {offsets = [0, 16], sizes = [2, 16], strides = [1, 1]} : vector<2x64xf32> to vector<2x16xf32>
    %170 = arith.negf %169 : vector<2x16xf32>
    %171 = math.exp %170 : vector<2x16xf32>
    %cst_44 = arith.constant 1.000000e+00 : f32
    %172 = vector.broadcast %cst_44 : f32 to vector<2x16xf32>
    %173 = arith.addf %172, %171 : vector<2x16xf32>
    %174 = arith.divf %172, %173 : vector<2x16xf32>
    %175 = vector.extract_strided_slice %162 {offsets = [0, 32], sizes = [2, 16], strides = [1, 1]} : vector<2x64xf32> to vector<2x16xf32>
    %176 = math.tanh %175 : vector<2x16xf32>
    %177 = vector.extract_strided_slice %162 {offsets = [0, 48], sizes = [2, 16], strides = [1, 1]} : vector<2x64xf32> to vector<2x16xf32>
    %178 = arith.negf %177 : vector<2x16xf32>
    %179 = math.exp %178 : vector<2x16xf32>
    %cst_45 = arith.constant 1.000000e+00 : f32
    %180 = vector.broadcast %cst_45 : f32 to vector<2x16xf32>
    %181 = arith.addf %180, %179 : vector<2x16xf32>
    %182 = arith.divf %180, %181 : vector<2x16xf32>
    %183 = arith.mulf %174, %156 : vector<2x16xf32>
    %184 = arith.mulf %168, %176 : vector<2x16xf32>
    %185 = arith.addf %183, %184 : vector<2x16xf32>
    %186 = math.tanh %185 : vector<2x16xf32>
    %187 = arith.mulf %182, %186 : vector<2x16xf32>
    %c10 = arith.constant 10 : index
    %c0_46 = arith.constant 0 : index
    %188 = vector.load %arg13[%c10, %c0_46] : memref<16x32xf32, #tpu.memory_space<vmem>>, vector<2x16xf32>
    tpu.vector_store %arg13[%c10, %c0_46], %187 {strides = array<i32>} : memref<16x32xf32, #tpu.memory_space<vmem>>, vector<2x16xf32>,
    %189 = vector.extract_strided_slice %5 {offsets = [12, 0], sizes = [2, 64], strides = [1, 1]} : vector<16x64xf32> to vector<2x64xf32>
    %cst_47 = arith.constant dense<0.000000e+00> : vector<2x64xf32>
    %190 = tpu.matmul %187, %11, %cst_47 {dimension_numbers = #tpu.dot_dimension_numbers<[1], [0], [0], [1], [0, 0, 1, 1], [], []>} : vector<2x16xf32>, vector<16x64xf32>, vector<2x64xf32> -> vector<2x64xf32>
    %191 = arith.addf %189, %190 : vector<2x64xf32>
    %192 = vector.extract_strided_slice %191 {offsets = [0, 0], sizes = [2, 16], strides = [1, 1]} : vector<2x64xf32> to vector<2x16xf32>
    %193 = arith.negf %192 : vector<2x16xf32>
    %194 = math.exp %193 : vector<2x16xf32>
    %cst_48 = arith.constant 1.000000e+00 : f32
    %195 = vector.broadcast %cst_48 : f32 to vector<2x16xf32>
    %196 = arith.addf %195, %194 : vector<2x16xf32>
    %197 = arith.divf %195, %196 : vector<2x16xf32>
    %198 = vector.extract_strided_slice %191 {offsets = [0, 16], sizes = [2, 16], strides = [1, 1]} : vector<2x64xf32> to vector<2x16xf32>
    %199 = arith.negf %198 : vector<2x16xf32>
    %200 = math.exp %199 : vector<2x16xf32>
    %cst_49 = arith.constant 1.000000e+00 : f32
    %201 = vector.broadcast %cst_49 : f32 to vector<2x16xf32>
    %202 = arith.addf %201, %200 : vector<2x16xf32>
    %203 = arith.divf %201, %202 : vector<2x16xf32>
    %204 = vector.extract_strided_slice %191 {offsets = [0, 32], sizes = [2, 16], strides = [1, 1]} : vector<2x64xf32> to vector<2x16xf32>
    %205 = math.tanh %204 : vector<2x16xf32>
    %206 = vector.extract_strided_slice %191 {offsets = [0, 48], sizes = [2, 16], strides = [1, 1]} : vector<2x64xf32> to vector<2x16xf32>
    %207 = arith.negf %206 : vector<2x16xf32>
    %208 = math.exp %207 : vector<2x16xf32>
    %cst_50 = arith.constant 1.000000e+00 : f32
    %209 = vector.broadcast %cst_50 : f32 to vector<2x16xf32>
    %210 = arith.addf %209, %208 : vector<2x16xf32>
    %211 = arith.divf %209, %210 : vector<2x16xf32>
    %212 = arith.mulf %203, %185 : vector<2x16xf32>
    %213 = arith.mulf %197, %205 : vector<2x16xf32>
    %214 = arith.addf %212, %213 : vector<2x16xf32>
    %215 = math.tanh %214 : vector<2x16xf32>
    %216 = arith.mulf %211, %215 : vector<2x16xf32>
    %c12 = arith.constant 12 : index
    %c0_51 = arith.constant 0 : index
    %217 = vector.load %arg13[%c12, %c0_51] : memref<16x32xf32, #tpu.memory_space<vmem>>, vector<2x16xf32>
    tpu.vector_store %arg13[%c12, %c0_51], %216 {strides = array<i32>} : memref<16x32xf32, #tpu.memory_space<vmem>>, vector<2x16xf32>,
    %218 = vector.extract_strided_slice %5 {offsets = [14, 0], sizes = [2, 64], strides = [1, 1]} : vector<16x64xf32> to vector<2x64xf32>
    %cst_52 = arith.constant dense<0.000000e+00> : vector<2x64xf32>
    %219 = tpu.matmul %216, %11, %cst_52 {dimension_numbers = #tpu.dot_dimension_numbers<[1], [0], [0], [1], [0, 0, 1, 1], [], []>} : vector<2x16xf32>, vector<16x64xf32>, vector<2x64xf32> -> vector<2x64xf32>
    %220 = arith.addf %218, %219 : vector<2x64xf32>
    %221 = vector.extract_strided_slice %220 {offsets = [0, 0], sizes = [2, 16], strides = [1, 1]} : vector<2x64xf32> to vector<2x16xf32>
    %222 = arith.negf %221 : vector<2x16xf32>
    %223 = math.exp %222 : vector<2x16xf32>
    %cst_53 = arith.constant 1.000000e+00 : f32
    %224 = vector.broadcast %cst_53 : f32 to vector<2x16xf32>
    %225 = arith.addf %224, %223 : vector<2x16xf32>
    %226 = arith.divf %224, %225 : vector<2x16xf32>
    %227 = vector.extract_strided_slice %220 {offsets = [0, 16], sizes = [2, 16], strides = [1, 1]} : vector<2x64xf32> to vector<2x16xf32>
    %228 = arith.negf %227 : vector<2x16xf32>
    %229 = math.exp %228 : vector<2x16xf32>
    %cst_54 = arith.constant 1.000000e+00 : f32
    %230 = vector.broadcast %cst_54 : f32 to vector<2x16xf32>
    %231 = arith.addf %230, %229 : vector<2x16xf32>
    %232 = arith.divf %230, %231 : vector<2x16xf32>
    %233 = vector.extract_strided_slice %220 {offsets = [0, 32], sizes = [2, 16], strides = [1, 1]} : vector<2x64xf32> to vector<2x16xf32>
    %234 = math.tanh %233 : vector<2x16xf32>
    %235 = vector.extract_strided_slice %220 {offsets = [0, 48], sizes = [2, 16], strides = [1, 1]} : vector<2x64xf32> to vector<2x16xf32>
    %236 = arith.negf %235 : vector<2x16xf32>
    %237 = math.exp %236 : vector<2x16xf32>
    %cst_55 = arith.constant 1.000000e+00 : f32
    %238 = vector.broadcast %cst_55 : f32 to vector<2x16xf32>
    %239 = arith.addf %238, %237 : vector<2x16xf32>
    %240 = arith.divf %238, %239 : vector<2x16xf32>
    %241 = arith.mulf %232, %214 : vector<2x16xf32>
    %242 = arith.mulf %226, %234 : vector<2x16xf32>
    %243 = arith.addf %241, %242 : vector<2x16xf32>
    %244 = math.tanh %243 : vector<2x16xf32>
    %245 = arith.mulf %240, %244 : vector<2x16xf32>
    %c14 = arith.constant 14 : index
    %c0_56 = arith.constant 0 : index
    %246 = vector.load %arg13[%c14, %c0_56] : memref<16x32xf32, #tpu.memory_space<vmem>>, vector<2x16xf32>
    tpu.vector_store %arg13[%c14, %c0_56], %245 {strides = array<i32>} : memref<16x32xf32, #tpu.memory_space<vmem>>, vector<2x16xf32>,
    %cst_57 = arith.constant 0.000000e+00 : f32
    %247 = vector.broadcast %cst_57 : f32 to vector<2x16xf32>
    %cst_58 = arith.constant 0.000000e+00 : f32
    %248 = vector.broadcast %cst_58 : f32 to vector<2x16xf32>
    %249 = vector.extract_strided_slice %10 {offsets = [14, 0], sizes = [2, 64], strides = [1, 1]} : vector<16x64xf32> to vector<2x64xf32>
    %cst_59 = arith.constant dense<0.000000e+00> : vector<2x64xf32>
    %250 = tpu.matmul %247, %12, %cst_59 {dimension_numbers = #tpu.dot_dimension_numbers<[1], [0], [0], [1], [0, 0, 1, 1], [], []>} : vector<2x16xf32>, vector<16x64xf32>, vector<2x64xf32> -> vector<2x64xf32>
    %251 = arith.addf %249, %250 : vector<2x64xf32>
    %252 = vector.extract_strided_slice %251 {offsets = [0, 0], sizes = [2, 16], strides = [1, 1]} : vector<2x64xf32> to vector<2x16xf32>
    %253 = arith.negf %252 : vector<2x16xf32>
    %254 = math.exp %253 : vector<2x16xf32>
    %cst_60 = arith.constant 1.000000e+00 : f32
    %255 = vector.broadcast %cst_60 : f32 to vector<2x16xf32>
    %256 = arith.addf %255, %254 : vector<2x16xf32>
    %257 = arith.divf %255, %256 : vector<2x16xf32>
    %258 = vector.extract_strided_slice %251 {offsets = [0, 16], sizes = [2, 16], strides = [1, 1]} : vector<2x64xf32> to vector<2x16xf32>
    %259 = arith.negf %258 : vector<2x16xf32>
    %260 = math.exp %259 : vector<2x16xf32>
    %cst_61 = arith.constant 1.000000e+00 : f32
    %261 = vector.broadcast %cst_61 : f32 to vector<2x16xf32>
    %262 = arith.addf %261, %260 : vector<2x16xf32>
    %263 = arith.divf %261, %262 : vector<2x16xf32>
    %264 = vector.extract_strided_slice %251 {offsets = [0, 32], sizes = [2, 16], strides = [1, 1]} : vector<2x64xf32> to vector<2x16xf32>
    %265 = math.tanh %264 : vector<2x16xf32>
    %266 = vector.extract_strided_slice %251 {offsets = [0, 48], sizes = [2, 16], strides = [1, 1]} : vector<2x64xf32> to vector<2x16xf32>
    %267 = arith.negf %266 : vector<2x16xf32>
    %268 = math.exp %267 : vector<2x16xf32>
    %cst_62 = arith.constant 1.000000e+00 : f32
    %269 = vector.broadcast %cst_62 : f32 to vector<2x16xf32>
    %270 = arith.addf %269, %268 : vector<2x16xf32>
    %271 = arith.divf %269, %270 : vector<2x16xf32>
    %272 = arith.mulf %263, %248 : vector<2x16xf32>
    %273 = arith.mulf %257, %265 : vector<2x16xf32>
    %274 = arith.addf %272, %273 : vector<2x16xf32>
    %275 = math.tanh %274 : vector<2x16xf32>
    %276 = arith.mulf %271, %275 : vector<2x16xf32>
    %c14_63 = arith.constant 14 : index
    %c16 = arith.constant 16 : index
    %277 = vector.load %arg13[%c14_63, %c16] : memref<16x32xf32, #tpu.memory_space<vmem>>, vector<2x16xf32>
    tpu.vector_store %arg13[%c14_63, %c16], %276 {strides = array<i32>} : memref<16x32xf32, #tpu.memory_space<vmem>>, vector<2x16xf32>,
    %278 = vector.extract_strided_slice %10 {offsets = [12, 0], sizes = [2, 64], strides = [1, 1]} : vector<16x64xf32> to vector<2x64xf32>
    %cst_64 = arith.constant dense<0.000000e+00> : vector<2x64xf32>
    %279 = tpu.matmul %276, %12, %cst_64 {dimension_numbers = #tpu.dot_dimension_numbers<[1], [0], [0], [1], [0, 0, 1, 1], [], []>} : vector<2x16xf32>, vector<16x64xf32>, vector<2x64xf32> -> vector<2x64xf32>
    %280 = arith.addf %278, %279 : vector<2x64xf32>
    %281 = vector.extract_strided_slice %280 {offsets = [0, 0], sizes = [2, 16], strides = [1, 1]} : vector<2x64xf32> to vector<2x16xf32>
    %282 = arith.negf %281 : vector<2x16xf32>
    %283 = math.exp %282 : vector<2x16xf32>
    %cst_65 = arith.constant 1.000000e+00 : f32
    %284 = vector.broadcast %cst_65 : f32 to vector<2x16xf32>
    %285 = arith.addf %284, %283 : vector<2x16xf32>
    %286 = arith.divf %284, %285 : vector<2x16xf32>
    %287 = vector.extract_strided_slice %280 {offsets = [0, 16], sizes = [2, 16], strides = [1, 1]} : vector<2x64xf32> to vector<2x16xf32>
    %288 = arith.negf %287 : vector<2x16xf32>
    %289 = math.exp %288 : vector<2x16xf32>
    %cst_66 = arith.constant 1.000000e+00 : f32
    %290 = vector.broadcast %cst_66 : f32 to vector<2x16xf32>
    %291 = arith.addf %290, %289 : vector<2x16xf32>
    %292 = arith.divf %290, %291 : vector<2x16xf32>
    %293 = vector.extract_strided_slice %280 {offsets = [0, 32], sizes = [2, 16], strides = [1, 1]} : vector<2x64xf32> to vector<2x16xf32>
    %294 = math.tanh %293 : vector<2x16xf32>
    %295 = vector.extract_strided_slice %280 {offsets = [0, 48], sizes = [2, 16], strides = [1, 1]} : vector<2x64xf32> to vector<2x16xf32>
    %296 = arith.negf %295 : vector<2x16xf32>
    %297 = math.exp %296 : vector<2x16xf32>
    %cst_67 = arith.constant 1.000000e+00 : f32
    %298 = vector.broadcast %cst_67 : f32 to vector<2x16xf32>
    %299 = arith.addf %298, %297 : vector<2x16xf32>
    %300 = arith.divf %298, %299 : vector<2x16xf32>
    %301 = arith.mulf %292, %274 : vector<2x16xf32>
    %302 = arith.mulf %286, %294 : vector<2x16xf32>
    %303 = arith.addf %301, %302 : vector<2x16xf32>
    %304 = math.tanh %303 : vector<2x16xf32>
    %305 = arith.mulf %300, %304 : vector<2x16xf32>
    %c12_68 = arith.constant 12 : index
    %c16_69 = arith.constant 16 : index
    %306 = vector.load %arg13[%c12_68, %c16_69] : memref<16x32xf32, #tpu.memory_space<vmem>>, vector<2x16xf32>
    tpu.vector_store %arg13[%c12_68, %c16_69], %305 {strides = array<i32>} : memref<16x32xf32, #tpu.memory_space<vmem>>, vector<2x16xf32>,
    %307 = vector.extract_strided_slice %10 {offsets = [10, 0], sizes = [2, 64], strides = [1, 1]} : vector<16x64xf32> to vector<2x64xf32>
    %cst_70 = arith.constant dense<0.000000e+00> : vector<2x64xf32>
    %308 = tpu.matmul %305, %12, %cst_70 {dimension_numbers = #tpu.dot_dimension_numbers<[1], [0], [0], [1], [0, 0, 1, 1], [], []>} : vector<2x16xf32>, vector<16x64xf32>, vector<2x64xf32> -> vector<2x64xf32>
    %309 = arith.addf %307, %308 : vector<2x64xf32>
    %310 = vector.extract_strided_slice %309 {offsets = [0, 0], sizes = [2, 16], strides = [1, 1]} : vector<2x64xf32> to vector<2x16xf32>
    %311 = arith.negf %310 : vector<2x16xf32>
    %312 = math.exp %311 : vector<2x16xf32>
    %cst_71 = arith.constant 1.000000e+00 : f32
    %313 = vector.broadcast %cst_71 : f32 to vector<2x16xf32>
    %314 = arith.addf %313, %312 : vector<2x16xf32>
    %315 = arith.divf %313, %314 : vector<2x16xf32>
    %316 = vector.extract_strided_slice %309 {offsets = [0, 16], sizes = [2, 16], strides = [1, 1]} : vector<2x64xf32> to vector<2x16xf32>
    %317 = arith.negf %316 : vector<2x16xf32>
    %318 = math.exp %317 : vector<2x16xf32>
    %cst_72 = arith.constant 1.000000e+00 : f32
    %319 = vector.broadcast %cst_72 : f32 to vector<2x16xf32>
    %320 = arith.addf %319, %318 : vector<2x16xf32>
    %321 = arith.divf %319, %320 : vector<2x16xf32>
    %322 = vector.extract_strided_slice %309 {offsets = [0, 32], sizes = [2, 16], strides = [1, 1]} : vector<2x64xf32> to vector<2x16xf32>
    %323 = math.tanh %322 : vector<2x16xf32>
    %324 = vector.extract_strided_slice %309 {offsets = [0, 48], sizes = [2, 16], strides = [1, 1]} : vector<2x64xf32> to vector<2x16xf32>
    %325 = arith.negf %324 : vector<2x16xf32>
    %326 = math.exp %325 : vector<2x16xf32>
    %cst_73 = arith.constant 1.000000e+00 : f32
    %327 = vector.broadcast %cst_73 : f32 to vector<2x16xf32>
    %328 = arith.addf %327, %326 : vector<2x16xf32>
    %329 = arith.divf %327, %328 : vector<2x16xf32>
    %330 = arith.mulf %321, %303 : vector<2x16xf32>
    %331 = arith.mulf %315, %323 : vector<2x16xf32>
    %332 = arith.addf %330, %331 : vector<2x16xf32>
    %333 = math.tanh %332 : vector<2x16xf32>
    %334 = arith.mulf %329, %333 : vector<2x16xf32>
    %c10_74 = arith.constant 10 : index
    %c16_75 = arith.constant 16 : index
    %335 = vector.load %arg13[%c10_74, %c16_75] : memref<16x32xf32, #tpu.memory_space<vmem>>, vector<2x16xf32>
    tpu.vector_store %arg13[%c10_74, %c16_75], %334 {strides = array<i32>} : memref<16x32xf32, #tpu.memory_space<vmem>>, vector<2x16xf32>,
    %336 = vector.extract_strided_slice %10 {offsets = [8, 0], sizes = [2, 64], strides = [1, 1]} : vector<16x64xf32> to vector<2x64xf32>
    %cst_76 = arith.constant dense<0.000000e+00> : vector<2x64xf32>
    %337 = tpu.matmul %334, %12, %cst_76 {dimension_numbers = #tpu.dot_dimension_numbers<[1], [0], [0], [1], [0, 0, 1, 1], [], []>} : vector<2x16xf32>, vector<16x64xf32>, vector<2x64xf32> -> vector<2x64xf32>
    %338 = arith.addf %336, %337 : vector<2x64xf32>
    %339 = vector.extract_strided_slice %338 {offsets = [0, 0], sizes = [2, 16], strides = [1, 1]} : vector<2x64xf32> to vector<2x16xf32>
    %340 = arith.negf %339 : vector<2x16xf32>
    %341 = math.exp %340 : vector<2x16xf32>
    %cst_77 = arith.constant 1.000000e+00 : f32
    %342 = vector.broadcast %cst_77 : f32 to vector<2x16xf32>
    %343 = arith.addf %342, %341 : vector<2x16xf32>
    %344 = arith.divf %342, %343 : vector<2x16xf32>
    %345 = vector.extract_strided_slice %338 {offsets = [0, 16], sizes = [2, 16], strides = [1, 1]} : vector<2x64xf32> to vector<2x16xf32>
    %346 = arith.negf %345 : vector<2x16xf32>
    %347 = math.exp %346 : vector<2x16xf32>
    %cst_78 = arith.constant 1.000000e+00 : f32
    %348 = vector.broadcast %cst_78 : f32 to vector<2x16xf32>
    %349 = arith.addf %348, %347 : vector<2x16xf32>
    %350 = arith.divf %348, %349 : vector<2x16xf32>
    %351 = vector.extract_strided_slice %338 {offsets = [0, 32], sizes = [2, 16], strides = [1, 1]} : vector<2x64xf32> to vector<2x16xf32>
    %352 = math.tanh %351 : vector<2x16xf32>
    %353 = vector.extract_strided_slice %338 {offsets = [0, 48], sizes = [2, 16], strides = [1, 1]} : vector<2x64xf32> to vector<2x16xf32>
    %354 = arith.negf %353 : vector<2x16xf32>
    %355 = math.exp %354 : vector<2x16xf32>
    %cst_79 = arith.constant 1.000000e+00 : f32
    %356 = vector.broadcast %cst_79 : f32 to vector<2x16xf32>
    %357 = arith.addf %356, %355 : vector<2x16xf32>
    %358 = arith.divf %356, %357 : vector<2x16xf32>
    %359 = arith.mulf %350, %332 : vector<2x16xf32>
    %360 = arith.mulf %344, %352 : vector<2x16xf32>
    %361 = arith.addf %359, %360 : vector<2x16xf32>
    %362 = math.tanh %361 : vector<2x16xf32>
    %363 = arith.mulf %358, %362 : vector<2x16xf32>
    %c8_80 = arith.constant 8 : index
    %c16_81 = arith.constant 16 : index
    %364 = vector.load %arg13[%c8_80, %c16_81] : memref<16x32xf32, #tpu.memory_space<vmem>>, vector<2x16xf32>
    tpu.vector_store %arg13[%c8_80, %c16_81], %363 {strides = array<i32>} : memref<16x32xf32, #tpu.memory_space<vmem>>, vector<2x16xf32>,
    %365 = vector.extract_strided_slice %10 {offsets = [6, 0], sizes = [2, 64], strides = [1, 1]} : vector<16x64xf32> to vector<2x64xf32>
    %cst_82 = arith.constant dense<0.000000e+00> : vector<2x64xf32>
    %366 = tpu.matmul %363, %12, %cst_82 {dimension_numbers = #tpu.dot_dimension_numbers<[1], [0], [0], [1], [0, 0, 1, 1], [], []>} : vector<2x16xf32>, vector<16x64xf32>, vector<2x64xf32> -> vector<2x64xf32>
    %367 = arith.addf %365, %366 : vector<2x64xf32>
    %368 = vector.extract_strided_slice %367 {offsets = [0, 0], sizes = [2, 16], strides = [1, 1]} : vector<2x64xf32> to vector<2x16xf32>
    %369 = arith.negf %368 : vector<2x16xf32>
    %370 = math.exp %369 : vector<2x16xf32>
    %cst_83 = arith.constant 1.000000e+00 : f32
    %371 = vector.broadcast %cst_83 : f32 to vector<2x16xf32>
    %372 = arith.addf %371, %370 : vector<2x16xf32>
    %373 = arith.divf %371, %372 : vector<2x16xf32>
    %374 = vector.extract_strided_slice %367 {offsets = [0, 16], sizes = [2, 16], strides = [1, 1]} : vector<2x64xf32> to vector<2x16xf32>
    %375 = arith.negf %374 : vector<2x16xf32>
    %376 = math.exp %375 : vector<2x16xf32>
    %cst_84 = arith.constant 1.000000e+00 : f32
    %377 = vector.broadcast %cst_84 : f32 to vector<2x16xf32>
    %378 = arith.addf %377, %376 : vector<2x16xf32>
    %379 = arith.divf %377, %378 : vector<2x16xf32>
    %380 = vector.extract_strided_slice %367 {offsets = [0, 32], sizes = [2, 16], strides = [1, 1]} : vector<2x64xf32> to vector<2x16xf32>
    %381 = math.tanh %380 : vector<2x16xf32>
    %382 = vector.extract_strided_slice %367 {offsets = [0, 48], sizes = [2, 16], strides = [1, 1]} : vector<2x64xf32> to vector<2x16xf32>
    %383 = arith.negf %382 : vector<2x16xf32>
    %384 = math.exp %383 : vector<2x16xf32>
    %cst_85 = arith.constant 1.000000e+00 : f32
    %385 = vector.broadcast %cst_85 : f32 to vector<2x16xf32>
    %386 = arith.addf %385, %384 : vector<2x16xf32>
    %387 = arith.divf %385, %386 : vector<2x16xf32>
    %388 = arith.mulf %379, %361 : vector<2x16xf32>
    %389 = arith.mulf %373, %381 : vector<2x16xf32>
    %390 = arith.addf %388, %389 : vector<2x16xf32>
    %391 = math.tanh %390 : vector<2x16xf32>
    %392 = arith.mulf %387, %391 : vector<2x16xf32>
    %c6_86 = arith.constant 6 : index
    %c16_87 = arith.constant 16 : index
    %393 = vector.load %arg13[%c6_86, %c16_87] : memref<16x32xf32, #tpu.memory_space<vmem>>, vector<2x16xf32>
    tpu.vector_store %arg13[%c6_86, %c16_87], %392 {strides = array<i32>} : memref<16x32xf32, #tpu.memory_space<vmem>>, vector<2x16xf32>,
    %394 = vector.extract_strided_slice %10 {offsets = [4, 0], sizes = [2, 64], strides = [1, 1]} : vector<16x64xf32> to vector<2x64xf32>
    %cst_88 = arith.constant dense<0.000000e+00> : vector<2x64xf32>
    %395 = tpu.matmul %392, %12, %cst_88 {dimension_numbers = #tpu.dot_dimension_numbers<[1], [0], [0], [1], [0, 0, 1, 1], [], []>} : vector<2x16xf32>, vector<16x64xf32>, vector<2x64xf32> -> vector<2x64xf32>
    %396 = arith.addf %394, %395 : vector<2x64xf32>
    %397 = vector.extract_strided_slice %396 {offsets = [0, 0], sizes = [2, 16], strides = [1, 1]} : vector<2x64xf32> to vector<2x16xf32>
    %398 = arith.negf %397 : vector<2x16xf32>
    %399 = math.exp %398 : vector<2x16xf32>
    %cst_89 = arith.constant 1.000000e+00 : f32
    %400 = vector.broadcast %cst_89 : f32 to vector<2x16xf32>
    %401 = arith.addf %400, %399 : vector<2x16xf32>
    %402 = arith.divf %400, %401 : vector<2x16xf32>
    %403 = vector.extract_strided_slice %396 {offsets = [0, 16], sizes = [2, 16], strides = [1, 1]} : vector<2x64xf32> to vector<2x16xf32>
    %404 = arith.negf %403 : vector<2x16xf32>
    %405 = math.exp %404 : vector<2x16xf32>
    %cst_90 = arith.constant 1.000000e+00 : f32
    %406 = vector.broadcast %cst_90 : f32 to vector<2x16xf32>
    %407 = arith.addf %406, %405 : vector<2x16xf32>
    %408 = arith.divf %406, %407 : vector<2x16xf32>
    %409 = vector.extract_strided_slice %396 {offsets = [0, 32], sizes = [2, 16], strides = [1, 1]} : vector<2x64xf32> to vector<2x16xf32>
    %410 = math.tanh %409 : vector<2x16xf32>
    %411 = vector.extract_strided_slice %396 {offsets = [0, 48], sizes = [2, 16], strides = [1, 1]} : vector<2x64xf32> to vector<2x16xf32>
    %412 = arith.negf %411 : vector<2x16xf32>
    %413 = math.exp %412 : vector<2x16xf32>
    %cst_91 = arith.constant 1.000000e+00 : f32
    %414 = vector.broadcast %cst_91 : f32 to vector<2x16xf32>
    %415 = arith.addf %414, %413 : vector<2x16xf32>
    %416 = arith.divf %414, %415 : vector<2x16xf32>
    %417 = arith.mulf %408, %390 : vector<2x16xf32>
    %418 = arith.mulf %402, %410 : vector<2x16xf32>
    %419 = arith.addf %417, %418 : vector<2x16xf32>
    %420 = math.tanh %419 : vector<2x16xf32>
    %421 = arith.mulf %416, %420 : vector<2x16xf32>
    %c4_92 = arith.constant 4 : index
    %c16_93 = arith.constant 16 : index
    %422 = vector.load %arg13[%c4_92, %c16_93] : memref<16x32xf32, #tpu.memory_space<vmem>>, vector<2x16xf32>
    tpu.vector_store %arg13[%c4_92, %c16_93], %421 {strides = array<i32>} : memref<16x32xf32, #tpu.memory_space<vmem>>, vector<2x16xf32>,
    %423 = vector.extract_strided_slice %10 {offsets = [2, 0], sizes = [2, 64], strides = [1, 1]} : vector<16x64xf32> to vector<2x64xf32>
    %cst_94 = arith.constant dense<0.000000e+00> : vector<2x64xf32>
    %424 = tpu.matmul %421, %12, %cst_94 {dimension_numbers = #tpu.dot_dimension_numbers<[1], [0], [0], [1], [0, 0, 1, 1], [], []>} : vector<2x16xf32>, vector<16x64xf32>, vector<2x64xf32> -> vector<2x64xf32>
    %425 = arith.addf %423, %424 : vector<2x64xf32>
    %426 = vector.extract_strided_slice %425 {offsets = [0, 0], sizes = [2, 16], strides = [1, 1]} : vector<2x64xf32> to vector<2x16xf32>
    %427 = arith.negf %426 : vector<2x16xf32>
    %428 = math.exp %427 : vector<2x16xf32>
    %cst_95 = arith.constant 1.000000e+00 : f32
    %429 = vector.broadcast %cst_95 : f32 to vector<2x16xf32>
    %430 = arith.addf %429, %428 : vector<2x16xf32>
    %431 = arith.divf %429, %430 : vector<2x16xf32>
    %432 = vector.extract_strided_slice %425 {offsets = [0, 16], sizes = [2, 16], strides = [1, 1]} : vector<2x64xf32> to vector<2x16xf32>
    %433 = arith.negf %432 : vector<2x16xf32>
    %434 = math.exp %433 : vector<2x16xf32>
    %cst_96 = arith.constant 1.000000e+00 : f32
    %435 = vector.broadcast %cst_96 : f32 to vector<2x16xf32>
    %436 = arith.addf %435, %434 : vector<2x16xf32>
    %437 = arith.divf %435, %436 : vector<2x16xf32>
    %438 = vector.extract_strided_slice %425 {offsets = [0, 32], sizes = [2, 16], strides = [1, 1]} : vector<2x64xf32> to vector<2x16xf32>
    %439 = math.tanh %438 : vector<2x16xf32>
    %440 = vector.extract_strided_slice %425 {offsets = [0, 48], sizes = [2, 16], strides = [1, 1]} : vector<2x64xf32> to vector<2x16xf32>
    %441 = arith.negf %440 : vector<2x16xf32>
    %442 = math.exp %441 : vector<2x16xf32>
    %cst_97 = arith.constant 1.000000e+00 : f32
    %443 = vector.broadcast %cst_97 : f32 to vector<2x16xf32>
    %444 = arith.addf %443, %442 : vector<2x16xf32>
    %445 = arith.divf %443, %444 : vector<2x16xf32>
    %446 = arith.mulf %437, %419 : vector<2x16xf32>
    %447 = arith.mulf %431, %439 : vector<2x16xf32>
    %448 = arith.addf %446, %447 : vector<2x16xf32>
    %449 = math.tanh %448 : vector<2x16xf32>
    %450 = arith.mulf %445, %449 : vector<2x16xf32>
    %c2_98 = arith.constant 2 : index
    %c16_99 = arith.constant 16 : index
    %451 = vector.load %arg13[%c2_98, %c16_99] : memref<16x32xf32, #tpu.memory_space<vmem>>, vector<2x16xf32>
    tpu.vector_store %arg13[%c2_98, %c16_99], %450 {strides = array<i32>} : memref<16x32xf32, #tpu.memory_space<vmem>>, vector<2x16xf32>,
    %452 = vector.extract_strided_slice %10 {offsets = [0, 0], sizes = [2, 64], strides = [1, 1]} : vector<16x64xf32> to vector<2x64xf32>
    %cst_100 = arith.constant dense<0.000000e+00> : vector<2x64xf32>
    %453 = tpu.matmul %450, %12, %cst_100 {dimension_numbers = #tpu.dot_dimension_numbers<[1], [0], [0], [1], [0, 0, 1, 1], [], []>} : vector<2x16xf32>, vector<16x64xf32>, vector<2x64xf32> -> vector<2x64xf32>
    %454 = arith.addf %452, %453 : vector<2x64xf32>
    %455 = vector.extract_strided_slice %454 {offsets = [0, 0], sizes = [2, 16], strides = [1, 1]} : vector<2x64xf32> to vector<2x16xf32>
    %456 = arith.negf %455 : vector<2x16xf32>
    %457 = math.exp %456 : vector<2x16xf32>
    %cst_101 = arith.constant 1.000000e+00 : f32
    %458 = vector.broadcast %cst_101 : f32 to vector<2x16xf32>
    %459 = arith.addf %458, %457 : vector<2x16xf32>
    %460 = arith.divf %458, %459 : vector<2x16xf32>
    %461 = vector.extract_strided_slice %454 {offsets = [0, 16], sizes = [2, 16], strides = [1, 1]} : vector<2x64xf32> to vector<2x16xf32>
    %462 = arith.negf %461 : vector<2x16xf32>
    %463 = math.exp %462 : vector<2x16xf32>
    %cst_102 = arith.constant 1.000000e+00 : f32
    %464 = vector.broadcast %cst_102 : f32 to vector<2x16xf32>
    %465 = arith.addf %464, %463 : vector<2x16xf32>
    %466 = arith.divf %464, %465 : vector<2x16xf32>
    %467 = vector.extract_strided_slice %454 {offsets = [0, 32], sizes = [2, 16], strides = [1, 1]} : vector<2x64xf32> to vector<2x16xf32>
    %468 = math.tanh %467 : vector<2x16xf32>
    %469 = vector.extract_strided_slice %454 {offsets = [0, 48], sizes = [2, 16], strides = [1, 1]} : vector<2x64xf32> to vector<2x16xf32>
    %470 = arith.negf %469 : vector<2x16xf32>
    %471 = math.exp %470 : vector<2x16xf32>
    %cst_103 = arith.constant 1.000000e+00 : f32
    %472 = vector.broadcast %cst_103 : f32 to vector<2x16xf32>
    %473 = arith.addf %472, %471 : vector<2x16xf32>
    %474 = arith.divf %472, %473 : vector<2x16xf32>
    %475 = arith.mulf %466, %448 : vector<2x16xf32>
    %476 = arith.mulf %460, %468 : vector<2x16xf32>
    %477 = arith.addf %475, %476 : vector<2x16xf32>
    %478 = math.tanh %477 : vector<2x16xf32>
    %479 = arith.mulf %474, %478 : vector<2x16xf32>
    %c0_104 = arith.constant 0 : index
    %c16_105 = arith.constant 16 : index
    %480 = vector.load %arg13[%c0_104, %c16_105] : memref<16x32xf32, #tpu.memory_space<vmem>>, vector<2x16xf32>
    tpu.vector_store %arg13[%c0_104, %c16_105], %479 {strides = array<i32>} : memref<16x32xf32, #tpu.memory_space<vmem>>, vector<2x16xf32>,
    %c0_106 = arith.constant 0 : index
    %c0_107 = arith.constant 0 : index
    %481 = vector.load %arg13[%c0_106, %c0_107] : memref<16x32xf32, #tpu.memory_space<vmem>>, vector<16x32xf32>
    %c0_108 = arith.constant 0 : index
    %c0_109 = arith.constant 0 : index
    %482 = vector.load %arg7[%c0_108, %c0_109] : memref<32x64xf32, #tpu.memory_space<vmem>>, vector<32x64xf32>
    %cst_110 = arith.constant dense<0.000000e+00> : vector<16x64xf32>
    %483 = tpu.matmul %481, %482, %cst_110 {dimension_numbers = #tpu.dot_dimension_numbers<[1], [0], [0], [1], [0, 0, 1, 1], [], []>} : vector<16x32xf32>, vector<32x64xf32>, vector<16x64xf32> -> vector<16x64xf32>
    %c0_111 = arith.constant 0 : index
    %c0_112 = arith.constant 0 : index
    %484 = vector.load %arg9[%c0_111, %c0_112] : memref<1x64xf32, #tpu.memory_space<vmem>>, vector<1x64xf32>
    %485 = vector.broadcast %484 : vector<1x64xf32> to vector<16x64xf32>
    %486 = arith.addf %483, %485 : vector<16x64xf32>
    %c0_113 = arith.constant 0 : index
    %c0_114 = arith.constant 0 : index
    %487 = vector.load %arg10[%c0_113, %c0_114] : memref<32x64xf32, #tpu.memory_space<vmem>>, vector<32x64xf32>
    %cst_115 = arith.constant dense<0.000000e+00> : vector<16x64xf32>
    %488 = tpu.matmul %481, %487, %cst_115 {dimension_numbers = #tpu.dot_dimension_numbers<[1], [0], [0], [1], [0, 0, 1, 1], [], []>} : vector<16x32xf32>, vector<32x64xf32>, vector<16x64xf32> -> vector<16x64xf32>
    %c0_116 = arith.constant 0 : index
    %c0_117 = arith.constant 0 : index
    %489 = vector.load %arg12[%c0_116, %c0_117] : memref<1x64xf32, #tpu.memory_space<vmem>>, vector<1x64xf32>
    %490 = vector.broadcast %489 : vector<1x64xf32> to vector<16x64xf32>
    %491 = arith.addf %488, %490 : vector<16x64xf32>
    %c0_118 = arith.constant 0 : index
    %c0_119 = arith.constant 0 : index
    %492 = vector.load %arg8[%c0_118, %c0_119] : memref<16x64xf32, #tpu.memory_space<vmem>>, vector<16x64xf32>
    %c0_120 = arith.constant 0 : index
    %c0_121 = arith.constant 0 : index
    %493 = vector.load %arg11[%c0_120, %c0_121] : memref<16x64xf32, #tpu.memory_space<vmem>>, vector<16x64xf32>
    %cst_122 = arith.constant 0.000000e+00 : f32
    %494 = vector.broadcast %cst_122 : f32 to vector<2x16xf32>
    %cst_123 = arith.constant 0.000000e+00 : f32
    %495 = vector.broadcast %cst_123 : f32 to vector<2x16xf32>
    %496 = vector.extract_strided_slice %486 {offsets = [0, 0], sizes = [2, 64], strides = [1, 1]} : vector<16x64xf32> to vector<2x64xf32>
    %cst_124 = arith.constant dense<0.000000e+00> : vector<2x64xf32>
    %497 = tpu.matmul %494, %492, %cst_124 {dimension_numbers = #tpu.dot_dimension_numbers<[1], [0], [0], [1], [0, 0, 1, 1], [], []>} : vector<2x16xf32>, vector<16x64xf32>, vector<2x64xf32> -> vector<2x64xf32>
    %498 = arith.addf %496, %497 : vector<2x64xf32>
    %499 = vector.extract_strided_slice %498 {offsets = [0, 0], sizes = [2, 16], strides = [1, 1]} : vector<2x64xf32> to vector<2x16xf32>
    %500 = arith.negf %499 : vector<2x16xf32>
    %501 = math.exp %500 : vector<2x16xf32>
    %cst_125 = arith.constant 1.000000e+00 : f32
    %502 = vector.broadcast %cst_125 : f32 to vector<2x16xf32>
    %503 = arith.addf %502, %501 : vector<2x16xf32>
    %504 = arith.divf %502, %503 : vector<2x16xf32>
    %505 = vector.extract_strided_slice %498 {offsets = [0, 16], sizes = [2, 16], strides = [1, 1]} : vector<2x64xf32> to vector<2x16xf32>
    %506 = arith.negf %505 : vector<2x16xf32>
    %507 = math.exp %506 : vector<2x16xf32>
    %cst_126 = arith.constant 1.000000e+00 : f32
    %508 = vector.broadcast %cst_126 : f32 to vector<2x16xf32>
    %509 = arith.addf %508, %507 : vector<2x16xf32>
    %510 = arith.divf %508, %509 : vector<2x16xf32>
    %511 = vector.extract_strided_slice %498 {offsets = [0, 32], sizes = [2, 16], strides = [1, 1]} : vector<2x64xf32> to vector<2x16xf32>
    %512 = math.tanh %511 : vector<2x16xf32>
    %513 = vector.extract_strided_slice %498 {offsets = [0, 48], sizes = [2, 16], strides = [1, 1]} : vector<2x64xf32> to vector<2x16xf32>
    %514 = arith.negf %513 : vector<2x16xf32>
    %515 = math.exp %514 : vector<2x16xf32>
    %cst_127 = arith.constant 1.000000e+00 : f32
    %516 = vector.broadcast %cst_127 : f32 to vector<2x16xf32>
    %517 = arith.addf %516, %515 : vector<2x16xf32>
    %518 = arith.divf %516, %517 : vector<2x16xf32>
    %519 = arith.mulf %510, %495 : vector<2x16xf32>
    %520 = arith.mulf %504, %512 : vector<2x16xf32>
    %521 = arith.addf %519, %520 : vector<2x16xf32>
    %522 = math.tanh %521 : vector<2x16xf32>
    %523 = arith.mulf %518, %522 : vector<2x16xf32>
    %c0_128 = arith.constant 0 : index
    %c0_129 = arith.constant 0 : index
    %524 = vector.load %arg13[%c0_128, %c0_129] : memref<16x32xf32, #tpu.memory_space<vmem>>, vector<2x16xf32>
    tpu.vector_store %arg13[%c0_128, %c0_129], %523 {strides = array<i32>} : memref<16x32xf32, #tpu.memory_space<vmem>>, vector<2x16xf32>,
    %525 = vector.extract_strided_slice %486 {offsets = [2, 0], sizes = [2, 64], strides = [1, 1]} : vector<16x64xf32> to vector<2x64xf32>
    %cst_130 = arith.constant dense<0.000000e+00> : vector<2x64xf32>
    %526 = tpu.matmul %523, %492, %cst_130 {dimension_numbers = #tpu.dot_dimension_numbers<[1], [0], [0], [1], [0, 0, 1, 1], [], []>} : vector<2x16xf32>, vector<16x64xf32>, vector<2x64xf32> -> vector<2x64xf32>
    %527 = arith.addf %525, %526 : vector<2x64xf32>
    %528 = vector.extract_strided_slice %527 {offsets = [0, 0], sizes = [2, 16], strides = [1, 1]} : vector<2x64xf32> to vector<2x16xf32>
    %529 = arith.negf %528 : vector<2x16xf32>
    %530 = math.exp %529 : vector<2x16xf32>
    %cst_131 = arith.constant 1.000000e+00 : f32
    %531 = vector.broadcast %cst_131 : f32 to vector<2x16xf32>
    %532 = arith.addf %531, %530 : vector<2x16xf32>
    %533 = arith.divf %531, %532 : vector<2x16xf32>
    %534 = vector.extract_strided_slice %527 {offsets = [0, 16], sizes = [2, 16], strides = [1, 1]} : vector<2x64xf32> to vector<2x16xf32>
    %535 = arith.negf %534 : vector<2x16xf32>
    %536 = math.exp %535 : vector<2x16xf32>
    %cst_132 = arith.constant 1.000000e+00 : f32
    %537 = vector.broadcast %cst_132 : f32 to vector<2x16xf32>
    %538 = arith.addf %537, %536 : vector<2x16xf32>
    %539 = arith.divf %537, %538 : vector<2x16xf32>
    %540 = vector.extract_strided_slice %527 {offsets = [0, 32], sizes = [2, 16], strides = [1, 1]} : vector<2x64xf32> to vector<2x16xf32>
    %541 = math.tanh %540 : vector<2x16xf32>
    %542 = vector.extract_strided_slice %527 {offsets = [0, 48], sizes = [2, 16], strides = [1, 1]} : vector<2x64xf32> to vector<2x16xf32>
    %543 = arith.negf %542 : vector<2x16xf32>
    %544 = math.exp %543 : vector<2x16xf32>
    %cst_133 = arith.constant 1.000000e+00 : f32
    %545 = vector.broadcast %cst_133 : f32 to vector<2x16xf32>
    %546 = arith.addf %545, %544 : vector<2x16xf32>
    %547 = arith.divf %545, %546 : vector<2x16xf32>
    %548 = arith.mulf %539, %521 : vector<2x16xf32>
    %549 = arith.mulf %533, %541 : vector<2x16xf32>
    %550 = arith.addf %548, %549 : vector<2x16xf32>
    %551 = math.tanh %550 : vector<2x16xf32>
    %552 = arith.mulf %547, %551 : vector<2x16xf32>
    %c2_134 = arith.constant 2 : index
    %c0_135 = arith.constant 0 : index
    %553 = vector.load %arg13[%c2_134, %c0_135] : memref<16x32xf32, #tpu.memory_space<vmem>>, vector<2x16xf32>
    tpu.vector_store %arg13[%c2_134, %c0_135], %552 {strides = array<i32>} : memref<16x32xf32, #tpu.memory_space<vmem>>, vector<2x16xf32>,
    %554 = vector.extract_strided_slice %486 {offsets = [4, 0], sizes = [2, 64], strides = [1, 1]} : vector<16x64xf32> to vector<2x64xf32>
    %cst_136 = arith.constant dense<0.000000e+00> : vector<2x64xf32>
    %555 = tpu.matmul %552, %492, %cst_136 {dimension_numbers = #tpu.dot_dimension_numbers<[1], [0], [0], [1], [0, 0, 1, 1], [], []>} : vector<2x16xf32>, vector<16x64xf32>, vector<2x64xf32> -> vector<2x64xf32>
    %556 = arith.addf %554, %555 : vector<2x64xf32>
    %557 = vector.extract_strided_slice %556 {offsets = [0, 0], sizes = [2, 16], strides = [1, 1]} : vector<2x64xf32> to vector<2x16xf32>
    %558 = arith.negf %557 : vector<2x16xf32>
    %559 = math.exp %558 : vector<2x16xf32>
    %cst_137 = arith.constant 1.000000e+00 : f32
    %560 = vector.broadcast %cst_137 : f32 to vector<2x16xf32>
    %561 = arith.addf %560, %559 : vector<2x16xf32>
    %562 = arith.divf %560, %561 : vector<2x16xf32>
    %563 = vector.extract_strided_slice %556 {offsets = [0, 16], sizes = [2, 16], strides = [1, 1]} : vector<2x64xf32> to vector<2x16xf32>
    %564 = arith.negf %563 : vector<2x16xf32>
    %565 = math.exp %564 : vector<2x16xf32>
    %cst_138 = arith.constant 1.000000e+00 : f32
    %566 = vector.broadcast %cst_138 : f32 to vector<2x16xf32>
    %567 = arith.addf %566, %565 : vector<2x16xf32>
    %568 = arith.divf %566, %567 : vector<2x16xf32>
    %569 = vector.extract_strided_slice %556 {offsets = [0, 32], sizes = [2, 16], strides = [1, 1]} : vector<2x64xf32> to vector<2x16xf32>
    %570 = math.tanh %569 : vector<2x16xf32>
    %571 = vector.extract_strided_slice %556 {offsets = [0, 48], sizes = [2, 16], strides = [1, 1]} : vector<2x64xf32> to vector<2x16xf32>
    %572 = arith.negf %571 : vector<2x16xf32>
    %573 = math.exp %572 : vector<2x16xf32>
    %cst_139 = arith.constant 1.000000e+00 : f32
    %574 = vector.broadcast %cst_139 : f32 to vector<2x16xf32>
    %575 = arith.addf %574, %573 : vector<2x16xf32>
    %576 = arith.divf %574, %575 : vector<2x16xf32>
    %577 = arith.mulf %568, %550 : vector<2x16xf32>
    %578 = arith.mulf %562, %570 : vector<2x16xf32>
    %579 = arith.addf %577, %578 : vector<2x16xf32>
    %580 = math.tanh %579 : vector<2x16xf32>
    %581 = arith.mulf %576, %580 : vector<2x16xf32>
    %c4_140 = arith.constant 4 : index
    %c0_141 = arith.constant 0 : index
    %582 = vector.load %arg13[%c4_140, %c0_141] : memref<16x32xf32, #tpu.memory_space<vmem>>, vector<2x16xf32>
    tpu.vector_store %arg13[%c4_140, %c0_141], %581 {strides = array<i32>} : memref<16x32xf32, #tpu.memory_space<vmem>>, vector<2x16xf32>,
    %583 = vector.extract_strided_slice %486 {offsets = [6, 0], sizes = [2, 64], strides = [1, 1]} : vector<16x64xf32> to vector<2x64xf32>
    %cst_142 = arith.constant dense<0.000000e+00> : vector<2x64xf32>
    %584 = tpu.matmul %581, %492, %cst_142 {dimension_numbers = #tpu.dot_dimension_numbers<[1], [0], [0], [1], [0, 0, 1, 1], [], []>} : vector<2x16xf32>, vector<16x64xf32>, vector<2x64xf32> -> vector<2x64xf32>
    %585 = arith.addf %583, %584 : vector<2x64xf32>
    %586 = vector.extract_strided_slice %585 {offsets = [0, 0], sizes = [2, 16], strides = [1, 1]} : vector<2x64xf32> to vector<2x16xf32>
    %587 = arith.negf %586 : vector<2x16xf32>
    %588 = math.exp %587 : vector<2x16xf32>
    %cst_143 = arith.constant 1.000000e+00 : f32
    %589 = vector.broadcast %cst_143 : f32 to vector<2x16xf32>
    %590 = arith.addf %589, %588 : vector<2x16xf32>
    %591 = arith.divf %589, %590 : vector<2x16xf32>
    %592 = vector.extract_strided_slice %585 {offsets = [0, 16], sizes = [2, 16], strides = [1, 1]} : vector<2x64xf32> to vector<2x16xf32>
    %593 = arith.negf %592 : vector<2x16xf32>
    %594 = math.exp %593 : vector<2x16xf32>
    %cst_144 = arith.constant 1.000000e+00 : f32
    %595 = vector.broadcast %cst_144 : f32 to vector<2x16xf32>
    %596 = arith.addf %595, %594 : vector<2x16xf32>
    %597 = arith.divf %595, %596 : vector<2x16xf32>
    %598 = vector.extract_strided_slice %585 {offsets = [0, 32], sizes = [2, 16], strides = [1, 1]} : vector<2x64xf32> to vector<2x16xf32>
    %599 = math.tanh %598 : vector<2x16xf32>
    %600 = vector.extract_strided_slice %585 {offsets = [0, 48], sizes = [2, 16], strides = [1, 1]} : vector<2x64xf32> to vector<2x16xf32>
    %601 = arith.negf %600 : vector<2x16xf32>
    %602 = math.exp %601 : vector<2x16xf32>
    %cst_145 = arith.constant 1.000000e+00 : f32
    %603 = vector.broadcast %cst_145 : f32 to vector<2x16xf32>
    %604 = arith.addf %603, %602 : vector<2x16xf32>
    %605 = arith.divf %603, %604 : vector<2x16xf32>
    %606 = arith.mulf %597, %579 : vector<2x16xf32>
    %607 = arith.mulf %591, %599 : vector<2x16xf32>
    %608 = arith.addf %606, %607 : vector<2x16xf32>
    %609 = math.tanh %608 : vector<2x16xf32>
    %610 = arith.mulf %605, %609 : vector<2x16xf32>
    %c6_146 = arith.constant 6 : index
    %c0_147 = arith.constant 0 : index
    %611 = vector.load %arg13[%c6_146, %c0_147] : memref<16x32xf32, #tpu.memory_space<vmem>>, vector<2x16xf32>
    tpu.vector_store %arg13[%c6_146, %c0_147], %610 {strides = array<i32>} : memref<16x32xf32, #tpu.memory_space<vmem>>, vector<2x16xf32>,
    %612 = vector.extract_strided_slice %486 {offsets = [8, 0], sizes = [2, 64], strides = [1, 1]} : vector<16x64xf32> to vector<2x64xf32>
    %cst_148 = arith.constant dense<0.000000e+00> : vector<2x64xf32>
    %613 = tpu.matmul %610, %492, %cst_148 {dimension_numbers = #tpu.dot_dimension_numbers<[1], [0], [0], [1], [0, 0, 1, 1], [], []>} : vector<2x16xf32>, vector<16x64xf32>, vector<2x64xf32> -> vector<2x64xf32>
    %614 = arith.addf %612, %613 : vector<2x64xf32>
    %615 = vector.extract_strided_slice %614 {offsets = [0, 0], sizes = [2, 16], strides = [1, 1]} : vector<2x64xf32> to vector<2x16xf32>
    %616 = arith.negf %615 : vector<2x16xf32>
    %617 = math.exp %616 : vector<2x16xf32>
    %cst_149 = arith.constant 1.000000e+00 : f32
    %618 = vector.broadcast %cst_149 : f32 to vector<2x16xf32>
    %619 = arith.addf %618, %617 : vector<2x16xf32>
    %620 = arith.divf %618, %619 : vector<2x16xf32>
    %621 = vector.extract_strided_slice %614 {offsets = [0, 16], sizes = [2, 16], strides = [1, 1]} : vector<2x64xf32> to vector<2x16xf32>
    %622 = arith.negf %621 : vector<2x16xf32>
    %623 = math.exp %622 : vector<2x16xf32>
    %cst_150 = arith.constant 1.000000e+00 : f32
    %624 = vector.broadcast %cst_150 : f32 to vector<2x16xf32>
    %625 = arith.addf %624, %623 : vector<2x16xf32>
    %626 = arith.divf %624, %625 : vector<2x16xf32>
    %627 = vector.extract_strided_slice %614 {offsets = [0, 32], sizes = [2, 16], strides = [1, 1]} : vector<2x64xf32> to vector<2x16xf32>
    %628 = math.tanh %627 : vector<2x16xf32>
    %629 = vector.extract_strided_slice %614 {offsets = [0, 48], sizes = [2, 16], strides = [1, 1]} : vector<2x64xf32> to vector<2x16xf32>
    %630 = arith.negf %629 : vector<2x16xf32>
    %631 = math.exp %630 : vector<2x16xf32>
    %cst_151 = arith.constant 1.000000e+00 : f32
    %632 = vector.broadcast %cst_151 : f32 to vector<2x16xf32>
    %633 = arith.addf %632, %631 : vector<2x16xf32>
    %634 = arith.divf %632, %633 : vector<2x16xf32>
    %635 = arith.mulf %626, %608 : vector<2x16xf32>
    %636 = arith.mulf %620, %628 : vector<2x16xf32>
    %637 = arith.addf %635, %636 : vector<2x16xf32>
    %638 = math.tanh %637 : vector<2x16xf32>
    %639 = arith.mulf %634, %638 : vector<2x16xf32>
    %c8_152 = arith.constant 8 : index
    %c0_153 = arith.constant 0 : index
    %640 = vector.load %arg13[%c8_152, %c0_153] : memref<16x32xf32, #tpu.memory_space<vmem>>, vector<2x16xf32>
    tpu.vector_store %arg13[%c8_152, %c0_153], %639 {strides = array<i32>} : memref<16x32xf32, #tpu.memory_space<vmem>>, vector<2x16xf32>,
    %641 = vector.extract_strided_slice %486 {offsets = [10, 0], sizes = [2, 64], strides = [1, 1]} : vector<16x64xf32> to vector<2x64xf32>
    %cst_154 = arith.constant dense<0.000000e+00> : vector<2x64xf32>
    %642 = tpu.matmul %639, %492, %cst_154 {dimension_numbers = #tpu.dot_dimension_numbers<[1], [0], [0], [1], [0, 0, 1, 1], [], []>} : vector<2x16xf32>, vector<16x64xf32>, vector<2x64xf32> -> vector<2x64xf32>
    %643 = arith.addf %641, %642 : vector<2x64xf32>
    %644 = vector.extract_strided_slice %643 {offsets = [0, 0], sizes = [2, 16], strides = [1, 1]} : vector<2x64xf32> to vector<2x16xf32>
    %645 = arith.negf %644 : vector<2x16xf32>
    %646 = math.exp %645 : vector<2x16xf32>
    %cst_155 = arith.constant 1.000000e+00 : f32
    %647 = vector.broadcast %cst_155 : f32 to vector<2x16xf32>
    %648 = arith.addf %647, %646 : vector<2x16xf32>
    %649 = arith.divf %647, %648 : vector<2x16xf32>
    %650 = vector.extract_strided_slice %643 {offsets = [0, 16], sizes = [2, 16], strides = [1, 1]} : vector<2x64xf32> to vector<2x16xf32>
    %651 = arith.negf %650 : vector<2x16xf32>
    %652 = math.exp %651 : vector<2x16xf32>
    %cst_156 = arith.constant 1.000000e+00 : f32
    %653 = vector.broadcast %cst_156 : f32 to vector<2x16xf32>
    %654 = arith.addf %653, %652 : vector<2x16xf32>
    %655 = arith.divf %653, %654 : vector<2x16xf32>
    %656 = vector.extract_strided_slice %643 {offsets = [0, 32], sizes = [2, 16], strides = [1, 1]} : vector<2x64xf32> to vector<2x16xf32>
    %657 = math.tanh %656 : vector<2x16xf32>
    %658 = vector.extract_strided_slice %643 {offsets = [0, 48], sizes = [2, 16], strides = [1, 1]} : vector<2x64xf32> to vector<2x16xf32>
    %659 = arith.negf %658 : vector<2x16xf32>
    %660 = math.exp %659 : vector<2x16xf32>
    %cst_157 = arith.constant 1.000000e+00 : f32
    %661 = vector.broadcast %cst_157 : f32 to vector<2x16xf32>
    %662 = arith.addf %661, %660 : vector<2x16xf32>
    %663 = arith.divf %661, %662 : vector<2x16xf32>
    %664 = arith.mulf %655, %637 : vector<2x16xf32>
    %665 = arith.mulf %649, %657 : vector<2x16xf32>
    %666 = arith.addf %664, %665 : vector<2x16xf32>
    %667 = math.tanh %666 : vector<2x16xf32>
    %668 = arith.mulf %663, %667 : vector<2x16xf32>
    %c10_158 = arith.constant 10 : index
    %c0_159 = arith.constant 0 : index
    %669 = vector.load %arg13[%c10_158, %c0_159] : memref<16x32xf32, #tpu.memory_space<vmem>>, vector<2x16xf32>
    tpu.vector_store %arg13[%c10_158, %c0_159], %668 {strides = array<i32>} : memref<16x32xf32, #tpu.memory_space<vmem>>, vector<2x16xf32>,
    %670 = vector.extract_strided_slice %486 {offsets = [12, 0], sizes = [2, 64], strides = [1, 1]} : vector<16x64xf32> to vector<2x64xf32>
    %cst_160 = arith.constant dense<0.000000e+00> : vector<2x64xf32>
    %671 = tpu.matmul %668, %492, %cst_160 {dimension_numbers = #tpu.dot_dimension_numbers<[1], [0], [0], [1], [0, 0, 1, 1], [], []>} : vector<2x16xf32>, vector<16x64xf32>, vector<2x64xf32> -> vector<2x64xf32>
    %672 = arith.addf %670, %671 : vector<2x64xf32>
    %673 = vector.extract_strided_slice %672 {offsets = [0, 0], sizes = [2, 16], strides = [1, 1]} : vector<2x64xf32> to vector<2x16xf32>
    %674 = arith.negf %673 : vector<2x16xf32>
    %675 = math.exp %674 : vector<2x16xf32>
    %cst_161 = arith.constant 1.000000e+00 : f32
    %676 = vector.broadcast %cst_161 : f32 to vector<2x16xf32>
    %677 = arith.addf %676, %675 : vector<2x16xf32>
    %678 = arith.divf %676, %677 : vector<2x16xf32>
    %679 = vector.extract_strided_slice %672 {offsets = [0, 16], sizes = [2, 16], strides = [1, 1]} : vector<2x64xf32> to vector<2x16xf32>
    %680 = arith.negf %679 : vector<2x16xf32>
    %681 = math.exp %680 : vector<2x16xf32>
    %cst_162 = arith.constant 1.000000e+00 : f32
    %682 = vector.broadcast %cst_162 : f32 to vector<2x16xf32>
    %683 = arith.addf %682, %681 : vector<2x16xf32>
    %684 = arith.divf %682, %683 : vector<2x16xf32>
    %685 = vector.extract_strided_slice %672 {offsets = [0, 32], sizes = [2, 16], strides = [1, 1]} : vector<2x64xf32> to vector<2x16xf32>
    %686 = math.tanh %685 : vector<2x16xf32>
    %687 = vector.extract_strided_slice %672 {offsets = [0, 48], sizes = [2, 16], strides = [1, 1]} : vector<2x64xf32> to vector<2x16xf32>
    %688 = arith.negf %687 : vector<2x16xf32>
    %689 = math.exp %688 : vector<2x16xf32>
    %cst_163 = arith.constant 1.000000e+00 : f32
    %690 = vector.broadcast %cst_163 : f32 to vector<2x16xf32>
    %691 = arith.addf %690, %689 : vector<2x16xf32>
    %692 = arith.divf %690, %691 : vector<2x16xf32>
    %693 = arith.mulf %684, %666 : vector<2x16xf32>
    %694 = arith.mulf %678, %686 : vector<2x16xf32>
    %695 = arith.addf %693, %694 : vector<2x16xf32>
    %696 = math.tanh %695 : vector<2x16xf32>
    %697 = arith.mulf %692, %696 : vector<2x16xf32>
    %c12_164 = arith.constant 12 : index
    %c0_165 = arith.constant 0 : index
    %698 = vector.load %arg13[%c12_164, %c0_165] : memref<16x32xf32, #tpu.memory_space<vmem>>, vector<2x16xf32>
    tpu.vector_store %arg13[%c12_164, %c0_165], %697 {strides = array<i32>} : memref<16x32xf32, #tpu.memory_space<vmem>>, vector<2x16xf32>,
    %699 = vector.extract_strided_slice %486 {offsets = [14, 0], sizes = [2, 64], strides = [1, 1]} : vector<16x64xf32> to vector<2x64xf32>
    %cst_166 = arith.constant dense<0.000000e+00> : vector<2x64xf32>
    %700 = tpu.matmul %697, %492, %cst_166 {dimension_numbers = #tpu.dot_dimension_numbers<[1], [0], [0], [1], [0, 0, 1, 1], [], []>} : vector<2x16xf32>, vector<16x64xf32>, vector<2x64xf32> -> vector<2x64xf32>
    %701 = arith.addf %699, %700 : vector<2x64xf32>
    %702 = vector.extract_strided_slice %701 {offsets = [0, 0], sizes = [2, 16], strides = [1, 1]} : vector<2x64xf32> to vector<2x16xf32>
    %703 = arith.negf %702 : vector<2x16xf32>
    %704 = math.exp %703 : vector<2x16xf32>
    %cst_167 = arith.constant 1.000000e+00 : f32
    %705 = vector.broadcast %cst_167 : f32 to vector<2x16xf32>
    %706 = arith.addf %705, %704 : vector<2x16xf32>
    %707 = arith.divf %705, %706 : vector<2x16xf32>
    %708 = vector.extract_strided_slice %701 {offsets = [0, 16], sizes = [2, 16], strides = [1, 1]} : vector<2x64xf32> to vector<2x16xf32>
    %709 = arith.negf %708 : vector<2x16xf32>
    %710 = math.exp %709 : vector<2x16xf32>
    %cst_168 = arith.constant 1.000000e+00 : f32
    %711 = vector.broadcast %cst_168 : f32 to vector<2x16xf32>
    %712 = arith.addf %711, %710 : vector<2x16xf32>
    %713 = arith.divf %711, %712 : vector<2x16xf32>
    %714 = vector.extract_strided_slice %701 {offsets = [0, 32], sizes = [2, 16], strides = [1, 1]} : vector<2x64xf32> to vector<2x16xf32>
    %715 = math.tanh %714 : vector<2x16xf32>
    %716 = vector.extract_strided_slice %701 {offsets = [0, 48], sizes = [2, 16], strides = [1, 1]} : vector<2x64xf32> to vector<2x16xf32>
    %717 = arith.negf %716 : vector<2x16xf32>
    %718 = math.exp %717 : vector<2x16xf32>
    %cst_169 = arith.constant 1.000000e+00 : f32
    %719 = vector.broadcast %cst_169 : f32 to vector<2x16xf32>
    %720 = arith.addf %719, %718 : vector<2x16xf32>
    %721 = arith.divf %719, %720 : vector<2x16xf32>
    %722 = arith.mulf %713, %695 : vector<2x16xf32>
    %723 = arith.mulf %707, %715 : vector<2x16xf32>
    %724 = arith.addf %722, %723 : vector<2x16xf32>
    %725 = math.tanh %724 : vector<2x16xf32>
    %726 = arith.mulf %721, %725 : vector<2x16xf32>
    %c14_170 = arith.constant 14 : index
    %c0_171 = arith.constant 0 : index
    %727 = vector.load %arg13[%c14_170, %c0_171] : memref<16x32xf32, #tpu.memory_space<vmem>>, vector<2x16xf32>
    tpu.vector_store %arg13[%c14_170, %c0_171], %726 {strides = array<i32>} : memref<16x32xf32, #tpu.memory_space<vmem>>, vector<2x16xf32>,
    %cst_172 = arith.constant 0.000000e+00 : f32
    %728 = vector.broadcast %cst_172 : f32 to vector<2x16xf32>
    %cst_173 = arith.constant 0.000000e+00 : f32
    %729 = vector.broadcast %cst_173 : f32 to vector<2x16xf32>
    %730 = vector.extract_strided_slice %491 {offsets = [14, 0], sizes = [2, 64], strides = [1, 1]} : vector<16x64xf32> to vector<2x64xf32>
    %cst_174 = arith.constant dense<0.000000e+00> : vector<2x64xf32>
    %731 = tpu.matmul %728, %493, %cst_174 {dimension_numbers = #tpu.dot_dimension_numbers<[1], [0], [0], [1], [0, 0, 1, 1], [], []>} : vector<2x16xf32>, vector<16x64xf32>, vector<2x64xf32> -> vector<2x64xf32>
    %732 = arith.addf %730, %731 : vector<2x64xf32>
    %733 = vector.extract_strided_slice %732 {offsets = [0, 0], sizes = [2, 16], strides = [1, 1]} : vector<2x64xf32> to vector<2x16xf32>
    %734 = arith.negf %733 : vector<2x16xf32>
    %735 = math.exp %734 : vector<2x16xf32>
    %cst_175 = arith.constant 1.000000e+00 : f32
    %736 = vector.broadcast %cst_175 : f32 to vector<2x16xf32>
    %737 = arith.addf %736, %735 : vector<2x16xf32>
    %738 = arith.divf %736, %737 : vector<2x16xf32>
    %739 = vector.extract_strided_slice %732 {offsets = [0, 16], sizes = [2, 16], strides = [1, 1]} : vector<2x64xf32> to vector<2x16xf32>
    %740 = arith.negf %739 : vector<2x16xf32>
    %741 = math.exp %740 : vector<2x16xf32>
    %cst_176 = arith.constant 1.000000e+00 : f32
    %742 = vector.broadcast %cst_176 : f32 to vector<2x16xf32>
    %743 = arith.addf %742, %741 : vector<2x16xf32>
    %744 = arith.divf %742, %743 : vector<2x16xf32>
    %745 = vector.extract_strided_slice %732 {offsets = [0, 32], sizes = [2, 16], strides = [1, 1]} : vector<2x64xf32> to vector<2x16xf32>
    %746 = math.tanh %745 : vector<2x16xf32>
    %747 = vector.extract_strided_slice %732 {offsets = [0, 48], sizes = [2, 16], strides = [1, 1]} : vector<2x64xf32> to vector<2x16xf32>
    %748 = arith.negf %747 : vector<2x16xf32>
    %749 = math.exp %748 : vector<2x16xf32>
    %cst_177 = arith.constant 1.000000e+00 : f32
    %750 = vector.broadcast %cst_177 : f32 to vector<2x16xf32>
    %751 = arith.addf %750, %749 : vector<2x16xf32>
    %752 = arith.divf %750, %751 : vector<2x16xf32>
    %753 = arith.mulf %744, %729 : vector<2x16xf32>
    %754 = arith.mulf %738, %746 : vector<2x16xf32>
    %755 = arith.addf %753, %754 : vector<2x16xf32>
    %756 = math.tanh %755 : vector<2x16xf32>
    %757 = arith.mulf %752, %756 : vector<2x16xf32>
    %c14_178 = arith.constant 14 : index
    %c16_179 = arith.constant 16 : index
    %758 = vector.load %arg13[%c14_178, %c16_179] : memref<16x32xf32, #tpu.memory_space<vmem>>, vector<2x16xf32>
    tpu.vector_store %arg13[%c14_178, %c16_179], %757 {strides = array<i32>} : memref<16x32xf32, #tpu.memory_space<vmem>>, vector<2x16xf32>,
    %759 = vector.extract_strided_slice %491 {offsets = [12, 0], sizes = [2, 64], strides = [1, 1]} : vector<16x64xf32> to vector<2x64xf32>
    %cst_180 = arith.constant dense<0.000000e+00> : vector<2x64xf32>
    %760 = tpu.matmul %757, %493, %cst_180 {dimension_numbers = #tpu.dot_dimension_numbers<[1], [0], [0], [1], [0, 0, 1, 1], [], []>} : vector<2x16xf32>, vector<16x64xf32>, vector<2x64xf32> -> vector<2x64xf32>
    %761 = arith.addf %759, %760 : vector<2x64xf32>
    %762 = vector.extract_strided_slice %761 {offsets = [0, 0], sizes = [2, 16], strides = [1, 1]} : vector<2x64xf32> to vector<2x16xf32>
    %763 = arith.negf %762 : vector<2x16xf32>
    %764 = math.exp %763 : vector<2x16xf32>
    %cst_181 = arith.constant 1.000000e+00 : f32
    %765 = vector.broadcast %cst_181 : f32 to vector<2x16xf32>
    %766 = arith.addf %765, %764 : vector<2x16xf32>
    %767 = arith.divf %765, %766 : vector<2x16xf32>
    %768 = vector.extract_strided_slice %761 {offsets = [0, 16], sizes = [2, 16], strides = [1, 1]} : vector<2x64xf32> to vector<2x16xf32>
    %769 = arith.negf %768 : vector<2x16xf32>
    %770 = math.exp %769 : vector<2x16xf32>
    %cst_182 = arith.constant 1.000000e+00 : f32
    %771 = vector.broadcast %cst_182 : f32 to vector<2x16xf32>
    %772 = arith.addf %771, %770 : vector<2x16xf32>
    %773 = arith.divf %771, %772 : vector<2x16xf32>
    %774 = vector.extract_strided_slice %761 {offsets = [0, 32], sizes = [2, 16], strides = [1, 1]} : vector<2x64xf32> to vector<2x16xf32>
    %775 = math.tanh %774 : vector<2x16xf32>
    %776 = vector.extract_strided_slice %761 {offsets = [0, 48], sizes = [2, 16], strides = [1, 1]} : vector<2x64xf32> to vector<2x16xf32>
    %777 = arith.negf %776 : vector<2x16xf32>
    %778 = math.exp %777 : vector<2x16xf32>
    %cst_183 = arith.constant 1.000000e+00 : f32
    %779 = vector.broadcast %cst_183 : f32 to vector<2x16xf32>
    %780 = arith.addf %779, %778 : vector<2x16xf32>
    %781 = arith.divf %779, %780 : vector<2x16xf32>
    %782 = arith.mulf %773, %755 : vector<2x16xf32>
    %783 = arith.mulf %767, %775 : vector<2x16xf32>
    %784 = arith.addf %782, %783 : vector<2x16xf32>
    %785 = math.tanh %784 : vector<2x16xf32>
    %786 = arith.mulf %781, %785 : vector<2x16xf32>
    %c12_184 = arith.constant 12 : index
    %c16_185 = arith.constant 16 : index
    %787 = vector.load %arg13[%c12_184, %c16_185] : memref<16x32xf32, #tpu.memory_space<vmem>>, vector<2x16xf32>
    tpu.vector_store %arg13[%c12_184, %c16_185], %786 {strides = array<i32>} : memref<16x32xf32, #tpu.memory_space<vmem>>, vector<2x16xf32>,
    %788 = vector.extract_strided_slice %491 {offsets = [10, 0], sizes = [2, 64], strides = [1, 1]} : vector<16x64xf32> to vector<2x64xf32>
    %cst_186 = arith.constant dense<0.000000e+00> : vector<2x64xf32>
    %789 = tpu.matmul %786, %493, %cst_186 {dimension_numbers = #tpu.dot_dimension_numbers<[1], [0], [0], [1], [0, 0, 1, 1], [], []>} : vector<2x16xf32>, vector<16x64xf32>, vector<2x64xf32> -> vector<2x64xf32>
    %790 = arith.addf %788, %789 : vector<2x64xf32>
    %791 = vector.extract_strided_slice %790 {offsets = [0, 0], sizes = [2, 16], strides = [1, 1]} : vector<2x64xf32> to vector<2x16xf32>
    %792 = arith.negf %791 : vector<2x16xf32>
    %793 = math.exp %792 : vector<2x16xf32>
    %cst_187 = arith.constant 1.000000e+00 : f32
    %794 = vector.broadcast %cst_187 : f32 to vector<2x16xf32>
    %795 = arith.addf %794, %793 : vector<2x16xf32>
    %796 = arith.divf %794, %795 : vector<2x16xf32>
    %797 = vector.extract_strided_slice %790 {offsets = [0, 16], sizes = [2, 16], strides = [1, 1]} : vector<2x64xf32> to vector<2x16xf32>
    %798 = arith.negf %797 : vector<2x16xf32>
    %799 = math.exp %798 : vector<2x16xf32>
    %cst_188 = arith.constant 1.000000e+00 : f32
    %800 = vector.broadcast %cst_188 : f32 to vector<2x16xf32>
    %801 = arith.addf %800, %799 : vector<2x16xf32>
    %802 = arith.divf %800, %801 : vector<2x16xf32>
    %803 = vector.extract_strided_slice %790 {offsets = [0, 32], sizes = [2, 16], strides = [1, 1]} : vector<2x64xf32> to vector<2x16xf32>
    %804 = math.tanh %803 : vector<2x16xf32>
    %805 = vector.extract_strided_slice %790 {offsets = [0, 48], sizes = [2, 16], strides = [1, 1]} : vector<2x64xf32> to vector<2x16xf32>
    %806 = arith.negf %805 : vector<2x16xf32>
    %807 = math.exp %806 : vector<2x16xf32>
    %cst_189 = arith.constant 1.000000e+00 : f32
    %808 = vector.broadcast %cst_189 : f32 to vector<2x16xf32>
    %809 = arith.addf %808, %807 : vector<2x16xf32>
    %810 = arith.divf %808, %809 : vector<2x16xf32>
    %811 = arith.mulf %802, %784 : vector<2x16xf32>
    %812 = arith.mulf %796, %804 : vector<2x16xf32>
    %813 = arith.addf %811, %812 : vector<2x16xf32>
    %814 = math.tanh %813 : vector<2x16xf32>
    %815 = arith.mulf %810, %814 : vector<2x16xf32>
    %c10_190 = arith.constant 10 : index
    %c16_191 = arith.constant 16 : index
    %816 = vector.load %arg13[%c10_190, %c16_191] : memref<16x32xf32, #tpu.memory_space<vmem>>, vector<2x16xf32>
    tpu.vector_store %arg13[%c10_190, %c16_191], %815 {strides = array<i32>} : memref<16x32xf32, #tpu.memory_space<vmem>>, vector<2x16xf32>,
    %817 = vector.extract_strided_slice %491 {offsets = [8, 0], sizes = [2, 64], strides = [1, 1]} : vector<16x64xf32> to vector<2x64xf32>
    %cst_192 = arith.constant dense<0.000000e+00> : vector<2x64xf32>
    %818 = tpu.matmul %815, %493, %cst_192 {dimension_numbers = #tpu.dot_dimension_numbers<[1], [0], [0], [1], [0, 0, 1, 1], [], []>} : vector<2x16xf32>, vector<16x64xf32>, vector<2x64xf32> -> vector<2x64xf32>
    %819 = arith.addf %817, %818 : vector<2x64xf32>
    %820 = vector.extract_strided_slice %819 {offsets = [0, 0], sizes = [2, 16], strides = [1, 1]} : vector<2x64xf32> to vector<2x16xf32>
    %821 = arith.negf %820 : vector<2x16xf32>
    %822 = math.exp %821 : vector<2x16xf32>
    %cst_193 = arith.constant 1.000000e+00 : f32
    %823 = vector.broadcast %cst_193 : f32 to vector<2x16xf32>
    %824 = arith.addf %823, %822 : vector<2x16xf32>
    %825 = arith.divf %823, %824 : vector<2x16xf32>
    %826 = vector.extract_strided_slice %819 {offsets = [0, 16], sizes = [2, 16], strides = [1, 1]} : vector<2x64xf32> to vector<2x16xf32>
    %827 = arith.negf %826 : vector<2x16xf32>
    %828 = math.exp %827 : vector<2x16xf32>
    %cst_194 = arith.constant 1.000000e+00 : f32
    %829 = vector.broadcast %cst_194 : f32 to vector<2x16xf32>
    %830 = arith.addf %829, %828 : vector<2x16xf32>
    %831 = arith.divf %829, %830 : vector<2x16xf32>
    %832 = vector.extract_strided_slice %819 {offsets = [0, 32], sizes = [2, 16], strides = [1, 1]} : vector<2x64xf32> to vector<2x16xf32>
    %833 = math.tanh %832 : vector<2x16xf32>
    %834 = vector.extract_strided_slice %819 {offsets = [0, 48], sizes = [2, 16], strides = [1, 1]} : vector<2x64xf32> to vector<2x16xf32>
    %835 = arith.negf %834 : vector<2x16xf32>
    %836 = math.exp %835 : vector<2x16xf32>
    %cst_195 = arith.constant 1.000000e+00 : f32
    %837 = vector.broadcast %cst_195 : f32 to vector<2x16xf32>
    %838 = arith.addf %837, %836 : vector<2x16xf32>
    %839 = arith.divf %837, %838 : vector<2x16xf32>
    %840 = arith.mulf %831, %813 : vector<2x16xf32>
    %841 = arith.mulf %825, %833 : vector<2x16xf32>
    %842 = arith.addf %840, %841 : vector<2x16xf32>
    %843 = math.tanh %842 : vector<2x16xf32>
    %844 = arith.mulf %839, %843 : vector<2x16xf32>
    %c8_196 = arith.constant 8 : index
    %c16_197 = arith.constant 16 : index
    %845 = vector.load %arg13[%c8_196, %c16_197] : memref<16x32xf32, #tpu.memory_space<vmem>>, vector<2x16xf32>
    tpu.vector_store %arg13[%c8_196, %c16_197], %844 {strides = array<i32>} : memref<16x32xf32, #tpu.memory_space<vmem>>, vector<2x16xf32>,
    %846 = vector.extract_strided_slice %491 {offsets = [6, 0], sizes = [2, 64], strides = [1, 1]} : vector<16x64xf32> to vector<2x64xf32>
    %cst_198 = arith.constant dense<0.000000e+00> : vector<2x64xf32>
    %847 = tpu.matmul %844, %493, %cst_198 {dimension_numbers = #tpu.dot_dimension_numbers<[1], [0], [0], [1], [0, 0, 1, 1], [], []>} : vector<2x16xf32>, vector<16x64xf32>, vector<2x64xf32> -> vector<2x64xf32>
    %848 = arith.addf %846, %847 : vector<2x64xf32>
    %849 = vector.extract_strided_slice %848 {offsets = [0, 0], sizes = [2, 16], strides = [1, 1]} : vector<2x64xf32> to vector<2x16xf32>
    %850 = arith.negf %849 : vector<2x16xf32>
    %851 = math.exp %850 : vector<2x16xf32>
    %cst_199 = arith.constant 1.000000e+00 : f32
    %852 = vector.broadcast %cst_199 : f32 to vector<2x16xf32>
    %853 = arith.addf %852, %851 : vector<2x16xf32>
    %854 = arith.divf %852, %853 : vector<2x16xf32>
    %855 = vector.extract_strided_slice %848 {offsets = [0, 16], sizes = [2, 16], strides = [1, 1]} : vector<2x64xf32> to vector<2x16xf32>
    %856 = arith.negf %855 : vector<2x16xf32>
    %857 = math.exp %856 : vector<2x16xf32>
    %cst_200 = arith.constant 1.000000e+00 : f32
    %858 = vector.broadcast %cst_200 : f32 to vector<2x16xf32>
    %859 = arith.addf %858, %857 : vector<2x16xf32>
    %860 = arith.divf %858, %859 : vector<2x16xf32>
    %861 = vector.extract_strided_slice %848 {offsets = [0, 32], sizes = [2, 16], strides = [1, 1]} : vector<2x64xf32> to vector<2x16xf32>
    %862 = math.tanh %861 : vector<2x16xf32>
    %863 = vector.extract_strided_slice %848 {offsets = [0, 48], sizes = [2, 16], strides = [1, 1]} : vector<2x64xf32> to vector<2x16xf32>
    %864 = arith.negf %863 : vector<2x16xf32>
    %865 = math.exp %864 : vector<2x16xf32>
    %cst_201 = arith.constant 1.000000e+00 : f32
    %866 = vector.broadcast %cst_201 : f32 to vector<2x16xf32>
    %867 = arith.addf %866, %865 : vector<2x16xf32>
    %868 = arith.divf %866, %867 : vector<2x16xf32>
    %869 = arith.mulf %860, %842 : vector<2x16xf32>
    %870 = arith.mulf %854, %862 : vector<2x16xf32>
    %871 = arith.addf %869, %870 : vector<2x16xf32>
    %872 = math.tanh %871 : vector<2x16xf32>
    %873 = arith.mulf %868, %872 : vector<2x16xf32>
    %c6_202 = arith.constant 6 : index
    %c16_203 = arith.constant 16 : index
    %874 = vector.load %arg13[%c6_202, %c16_203] : memref<16x32xf32, #tpu.memory_space<vmem>>, vector<2x16xf32>
    tpu.vector_store %arg13[%c6_202, %c16_203], %873 {strides = array<i32>} : memref<16x32xf32, #tpu.memory_space<vmem>>, vector<2x16xf32>,
    %875 = vector.extract_strided_slice %491 {offsets = [4, 0], sizes = [2, 64], strides = [1, 1]} : vector<16x64xf32> to vector<2x64xf32>
    %cst_204 = arith.constant dense<0.000000e+00> : vector<2x64xf32>
    %876 = tpu.matmul %873, %493, %cst_204 {dimension_numbers = #tpu.dot_dimension_numbers<[1], [0], [0], [1], [0, 0, 1, 1], [], []>} : vector<2x16xf32>, vector<16x64xf32>, vector<2x64xf32> -> vector<2x64xf32>
    %877 = arith.addf %875, %876 : vector<2x64xf32>
    %878 = vector.extract_strided_slice %877 {offsets = [0, 0], sizes = [2, 16], strides = [1, 1]} : vector<2x64xf32> to vector<2x16xf32>
    %879 = arith.negf %878 : vector<2x16xf32>
    %880 = math.exp %879 : vector<2x16xf32>
    %cst_205 = arith.constant 1.000000e+00 : f32
    %881 = vector.broadcast %cst_205 : f32 to vector<2x16xf32>
    %882 = arith.addf %881, %880 : vector<2x16xf32>
    %883 = arith.divf %881, %882 : vector<2x16xf32>
    %884 = vector.extract_strided_slice %877 {offsets = [0, 16], sizes = [2, 16], strides = [1, 1]} : vector<2x64xf32> to vector<2x16xf32>
    %885 = arith.negf %884 : vector<2x16xf32>
    %886 = math.exp %885 : vector<2x16xf32>
    %cst_206 = arith.constant 1.000000e+00 : f32
    %887 = vector.broadcast %cst_206 : f32 to vector<2x16xf32>
    %888 = arith.addf %887, %886 : vector<2x16xf32>
    %889 = arith.divf %887, %888 : vector<2x16xf32>
    %890 = vector.extract_strided_slice %877 {offsets = [0, 32], sizes = [2, 16], strides = [1, 1]} : vector<2x64xf32> to vector<2x16xf32>
    %891 = math.tanh %890 : vector<2x16xf32>
    %892 = vector.extract_strided_slice %877 {offsets = [0, 48], sizes = [2, 16], strides = [1, 1]} : vector<2x64xf32> to vector<2x16xf32>
    %893 = arith.negf %892 : vector<2x16xf32>
    %894 = math.exp %893 : vector<2x16xf32>
    %cst_207 = arith.constant 1.000000e+00 : f32
    %895 = vector.broadcast %cst_207 : f32 to vector<2x16xf32>
    %896 = arith.addf %895, %894 : vector<2x16xf32>
    %897 = arith.divf %895, %896 : vector<2x16xf32>
    %898 = arith.mulf %889, %871 : vector<2x16xf32>
    %899 = arith.mulf %883, %891 : vector<2x16xf32>
    %900 = arith.addf %898, %899 : vector<2x16xf32>
    %901 = math.tanh %900 : vector<2x16xf32>
    %902 = arith.mulf %897, %901 : vector<2x16xf32>
    %c4_208 = arith.constant 4 : index
    %c16_209 = arith.constant 16 : index
    %903 = vector.load %arg13[%c4_208, %c16_209] : memref<16x32xf32, #tpu.memory_space<vmem>>, vector<2x16xf32>
    tpu.vector_store %arg13[%c4_208, %c16_209], %902 {strides = array<i32>} : memref<16x32xf32, #tpu.memory_space<vmem>>, vector<2x16xf32>,
    %904 = vector.extract_strided_slice %491 {offsets = [2, 0], sizes = [2, 64], strides = [1, 1]} : vector<16x64xf32> to vector<2x64xf32>
    %cst_210 = arith.constant dense<0.000000e+00> : vector<2x64xf32>
    %905 = tpu.matmul %902, %493, %cst_210 {dimension_numbers = #tpu.dot_dimension_numbers<[1], [0], [0], [1], [0, 0, 1, 1], [], []>} : vector<2x16xf32>, vector<16x64xf32>, vector<2x64xf32> -> vector<2x64xf32>
    %906 = arith.addf %904, %905 : vector<2x64xf32>
    %907 = vector.extract_strided_slice %906 {offsets = [0, 0], sizes = [2, 16], strides = [1, 1]} : vector<2x64xf32> to vector<2x16xf32>
    %908 = arith.negf %907 : vector<2x16xf32>
    %909 = math.exp %908 : vector<2x16xf32>
    %cst_211 = arith.constant 1.000000e+00 : f32
    %910 = vector.broadcast %cst_211 : f32 to vector<2x16xf32>
    %911 = arith.addf %910, %909 : vector<2x16xf32>
    %912 = arith.divf %910, %911 : vector<2x16xf32>
    %913 = vector.extract_strided_slice %906 {offsets = [0, 16], sizes = [2, 16], strides = [1, 1]} : vector<2x64xf32> to vector<2x16xf32>
    %914 = arith.negf %913 : vector<2x16xf32>
    %915 = math.exp %914 : vector<2x16xf32>
    %cst_212 = arith.constant 1.000000e+00 : f32
    %916 = vector.broadcast %cst_212 : f32 to vector<2x16xf32>
    %917 = arith.addf %916, %915 : vector<2x16xf32>
    %918 = arith.divf %916, %917 : vector<2x16xf32>
    %919 = vector.extract_strided_slice %906 {offsets = [0, 32], sizes = [2, 16], strides = [1, 1]} : vector<2x64xf32> to vector<2x16xf32>
    %920 = math.tanh %919 : vector<2x16xf32>
    %921 = vector.extract_strided_slice %906 {offsets = [0, 48], sizes = [2, 16], strides = [1, 1]} : vector<2x64xf32> to vector<2x16xf32>
    %922 = arith.negf %921 : vector<2x16xf32>
    %923 = math.exp %922 : vector<2x16xf32>
    %cst_213 = arith.constant 1.000000e+00 : f32
    %924 = vector.broadcast %cst_213 : f32 to vector<2x16xf32>
    %925 = arith.addf %924, %923 : vector<2x16xf32>
    %926 = arith.divf %924, %925 : vector<2x16xf32>
    %927 = arith.mulf %918, %900 : vector<2x16xf32>
    %928 = arith.mulf %912, %920 : vector<2x16xf32>
    %929 = arith.addf %927, %928 : vector<2x16xf32>
    %930 = math.tanh %929 : vector<2x16xf32>
    %931 = arith.mulf %926, %930 : vector<2x16xf32>
    %c2_214 = arith.constant 2 : index
    %c16_215 = arith.constant 16 : index
    %932 = vector.load %arg13[%c2_214, %c16_215] : memref<16x32xf32, #tpu.memory_space<vmem>>, vector<2x16xf32>
    tpu.vector_store %arg13[%c2_214, %c16_215], %931 {strides = array<i32>} : memref<16x32xf32, #tpu.memory_space<vmem>>, vector<2x16xf32>,
    %933 = vector.extract_strided_slice %491 {offsets = [0, 0], sizes = [2, 64], strides = [1, 1]} : vector<16x64xf32> to vector<2x64xf32>
    %cst_216 = arith.constant dense<0.000000e+00> : vector<2x64xf32>
    %934 = tpu.matmul %931, %493, %cst_216 {dimension_numbers = #tpu.dot_dimension_numbers<[1], [0], [0], [1], [0, 0, 1, 1], [], []>} : vector<2x16xf32>, vector<16x64xf32>, vector<2x64xf32> -> vector<2x64xf32>
    %935 = arith.addf %933, %934 : vector<2x64xf32>
    %936 = vector.extract_strided_slice %935 {offsets = [0, 0], sizes = [2, 16], strides = [1, 1]} : vector<2x64xf32> to vector<2x16xf32>
    %937 = arith.negf %936 : vector<2x16xf32>
    %938 = math.exp %937 : vector<2x16xf32>
    %cst_217 = arith.constant 1.000000e+00 : f32
    %939 = vector.broadcast %cst_217 : f32 to vector<2x16xf32>
    %940 = arith.addf %939, %938 : vector<2x16xf32>
    %941 = arith.divf %939, %940 : vector<2x16xf32>
    %942 = vector.extract_strided_slice %935 {offsets = [0, 16], sizes = [2, 16], strides = [1, 1]} : vector<2x64xf32> to vector<2x16xf32>
    %943 = arith.negf %942 : vector<2x16xf32>
    %944 = math.exp %943 : vector<2x16xf32>
    %cst_218 = arith.constant 1.000000e+00 : f32
    %945 = vector.broadcast %cst_218 : f32 to vector<2x16xf32>
    %946 = arith.addf %945, %944 : vector<2x16xf32>
    %947 = arith.divf %945, %946 : vector<2x16xf32>
    %948 = vector.extract_strided_slice %935 {offsets = [0, 32], sizes = [2, 16], strides = [1, 1]} : vector<2x64xf32> to vector<2x16xf32>
    %949 = math.tanh %948 : vector<2x16xf32>
    %950 = vector.extract_strided_slice %935 {offsets = [0, 48], sizes = [2, 16], strides = [1, 1]} : vector<2x64xf32> to vector<2x16xf32>
    %951 = arith.negf %950 : vector<2x16xf32>
    %952 = math.exp %951 : vector<2x16xf32>
    %cst_219 = arith.constant 1.000000e+00 : f32
    %953 = vector.broadcast %cst_219 : f32 to vector<2x16xf32>
    %954 = arith.addf %953, %952 : vector<2x16xf32>
    %955 = arith.divf %953, %954 : vector<2x16xf32>
    %956 = arith.mulf %947, %929 : vector<2x16xf32>
    %957 = arith.mulf %941, %949 : vector<2x16xf32>
    %958 = arith.addf %956, %957 : vector<2x16xf32>
    %959 = math.tanh %958 : vector<2x16xf32>
    %960 = arith.mulf %955, %959 : vector<2x16xf32>
    %c0_220 = arith.constant 0 : index
    %c16_221 = arith.constant 16 : index
    %961 = vector.load %arg13[%c0_220, %c16_221] : memref<16x32xf32, #tpu.memory_space<vmem>>, vector<2x16xf32>
    tpu.vector_store %arg13[%c0_220, %c16_221], %960 {strides = array<i32>} : memref<16x32xf32, #tpu.memory_space<vmem>>, vector<2x16xf32>,
    return
  }
}

</mosaic_0001>

<llo_original>
// kernel: reencoder_forward.1
$region0: #{reencoder_forward.1}
  #allocation0 [shape = 'u32[]', space=smem, size = 0x4, offset = 0x4, fixed_abs, tag = 'smem constant byte address 0x4 - core index']
  #allocation1 [shape = 'u32[144,128]{1,0:T(1,128)}', space=vmem, size = 0x12000, scoped, tag = 'internal scratch']
  %s0 = inlined_call_operand.vmem [shape: f32[16,128], index: 0, kind: input, shape index: {}]
  %s1 = inlined_call_operand.vmem [shape: f32[128,64], index: 1, kind: input, shape index: {}]
  %s2 = inlined_call_operand.vmem [shape: f32[16,64], index: 2, kind: input, shape index: {}]
  %s3 = inlined_call_operand.vmem [shape: f32[1,64], index: 3, kind: input, shape index: {}]
  %s4 = inlined_call_operand.vmem [shape: f32[128,64], index: 4, kind: input, shape index: {}]
  %s5 = inlined_call_operand.vmem [shape: f32[16,64], index: 5, kind: input, shape index: {}]
  %s6 = inlined_call_operand.vmem [shape: f32[1,64], index: 6, kind: input, shape index: {}]
  %s7 = inlined_call_operand.vmem [shape: f32[32,64], index: 7, kind: input, shape index: {}]
  %s8 = inlined_call_operand.vmem [shape: f32[16,64], index: 8, kind: input, shape index: {}]
  %s9 = inlined_call_operand.vmem [shape: f32[1,64], index: 9, kind: input, shape index: {}]
  %s10 = inlined_call_operand.vmem [shape: f32[32,64], index: 10, kind: input, shape index: {}]
  %s11 = inlined_call_operand.vmem [shape: f32[16,64], index: 11, kind: input, shape index: {}]
  %s12 = inlined_call_operand.vmem [shape: f32[1,64], index: 12, kind: input, shape index: {}]
  %s13 = inlined_call_operand.vmem [shape: f32[16,32], index: 13, kind: output, shape index: {}]
  %s14 = sld [smem:[#allocation0]]
  $region62: #{reencoder_forward.1} parent=0
    _
  %s16 = ssub.s32 1, %s14
  %s17 = scalar_select 0, %s16, %s14
  // Predicated region
  $region2: #{reencoder_forward.1} parent=0 // pred_check
    _
  $region3: #{reencoder_forward.1} parent=0 // pred_check_branch
    %19 = sbr.rel (0) target = $region5
  $region4: #{reencoder_forward.1} parent=0 // pred_region
    _
  $region5: #{reencoder_forward.1} parent=0 // pred_fallthru
    _
  // Predicated region
  $region6: #{reencoder_forward.1} parent=0 // pred_check
    _
  $region7: #{reencoder_forward.1} parent=0 // pred_check_branch
    %21 = sbr.rel (0) target = $region9
  $region8: #{reencoder_forward.1} parent=0 // pred_region
    _
  $region9: #{reencoder_forward.1} parent=0 // pred_fallthru
    _
  // Predicated region
  $region10: #{reencoder_forward.1} parent=0 // pred_check
    _
  $region11: #{reencoder_forward.1} parent=0 // pred_check_branch
    %23 = sbr.rel (0) target = $region13
  $region12: #{reencoder_forward.1} parent=0 // pred_region
    _
  $region13: #{reencoder_forward.1} parent=0 // pred_fallthru
    _
  // Predicated region
  $region14: #{reencoder_forward.1} parent=0 // pred_check
    _
  $region15: #{reencoder_forward.1} parent=0 // pred_check_branch
    %25 = sbr.rel (0) target = $region17
  $region16: #{reencoder_forward.1} parent=0 // pred_region
    _
  $region17: #{reencoder_forward.1} parent=0 // pred_fallthru
    _
  // Predicated region
  $region18: #{reencoder_forward.1} parent=0 // pred_check
    _
  $region19: #{reencoder_forward.1} parent=0 // pred_check_branch
    %27 = sbr.rel (0) target = $region21
  $region20: #{reencoder_forward.1} parent=0 // pred_region
    _
  $region21: #{reencoder_forward.1} parent=0 // pred_fallthru
    _
  // Predicated region
  $region22: #{reencoder_forward.1} parent=0 // pred_check
    _
  $region23: #{reencoder_forward.1} parent=0 // pred_check_branch
    %29 = sbr.rel (0) target = $region25
  $region24: #{reencoder_forward.1} parent=0 // pred_region
    _
  $region25: #{reencoder_forward.1} parent=0 // pred_fallthru
    _
  // Predicated region
  $region26: #{reencoder_forward.1} parent=0 // pred_check
    _
  $region27: #{reencoder_forward.1} parent=0 // pred_check_branch
    %31 = sbr.rel (0) target = $region29
  $region28: #{reencoder_forward.1} parent=0 // pred_region
    _
  $region29: #{reencoder_forward.1} parent=0 // pred_fallthru
    _
  // Predicated region
  $region30: #{reencoder_forward.1} parent=0 // pred_check
    _
  $region31: #{reencoder_forward.1} parent=0 // pred_check_branch
    %33 = sbr.rel (0) target = $region33
  $region32: #{reencoder_forward.1} parent=0 // pred_region
    _
  $region33: #{reencoder_forward.1} parent=0 // pred_fallthru
    _
  // Predicated region
  $region34: #{reencoder_forward.1} parent=0 // pred_check
    _
  $region35: #{reencoder_forward.1} parent=0 // pred_check_branch
    %35 = sbr.rel (0) target = $region37
  $region36: #{reencoder_forward.1} parent=0 // pred_region
    _
  $region37: #{reencoder_forward.1} parent=0 // pred_fallthru
    _
  // Predicated region
  $region38: #{reencoder_forward.1} parent=0 // pred_check
    _
  $region39: #{reencoder_forward.1} parent=0 // pred_check_branch
    %37 = sbr.rel (0) target = $region41
  $region40: #{reencoder_forward.1} parent=0 // pred_region
    _
  $region41: #{reencoder_forward.1} parent=0 // pred_fallthru
    _
  // Predicated region
  $region42: #{reencoder_forward.1} parent=0 // pred_check
    _
  $region43: #{reencoder_forward.1} parent=0 // pred_check_branch
    %39 = sbr.rel (0) target = $region45
  $region44: #{reencoder_forward.1} parent=0 // pred_region
    _
  $region45: #{reencoder_forward.1} parent=0 // pred_fallthru
    _
  // Predicated region
  $region46: #{reencoder_forward.1} parent=0 // pred_check
    _
  $region47: #{reencoder_forward.1} parent=0 // pred_check_branch
    %41 = sbr.rel (0) target = $region49
  $region48: #{reencoder_forward.1} parent=0 // pred_region
    _
  $region49: #{reencoder_forward.1} parent=0 // pred_fallthru
    _
  // Predicated region
  $region50: #{reencoder_forward.1} parent=0 // pred_check
    _
  $region51: #{reencoder_forward.1} parent=0 // pred_check_branch
    %43 = sbr.rel (0) target = $region53
  $region52: #{reencoder_forward.1} parent=0 // pred_region
    _
  $region53: #{reencoder_forward.1} parent=0 // pred_fallthru
    _
  %v44 = vld [vmem:[%s0] sm:$0xff]
  %v45 = vld [vmem:[%s0 + $0x8] sm:$0xff]
  %v46 = vld [vmem:[%s1] sm:$0xff]
  %v47 = vld [vmem:[%s1 + $0x8] sm:$0xff]
  %v48 = vld [vmem:[%s1 + $0x10] sm:$0xff]
  %v49 = vld [vmem:[%s1 + $0x18] sm:$0xff]
  %v50 = vld [vmem:[%s1 + $0x20] sm:$0xff]
  %v51 = vld [vmem:[%s1 + $0x28] sm:$0xff]
  %v52 = vld [vmem:[%s1 + $0x30] sm:$0xff]
  %v53 = vld [vmem:[%s1 + $0x38] sm:$0xff]
  %v54 = vld [vmem:[%s1 + $0x40] sm:$0xff]
  %v55 = vld [vmem:[%s1 + $0x48] sm:$0xff]
  %v56 = vld [vmem:[%s1 + $0x50] sm:$0xff]
  %v57 = vld [vmem:[%s1 + $0x58] sm:$0xff]
  %v58 = vld [vmem:[%s1 + $0x60] sm:$0xff]
  %v59 = vld [vmem:[%s1 + $0x68] sm:$0xff]
  %v60 = vld [vmem:[%s1 + $0x70] sm:$0xff]
  %v61 = vld [vmem:[%s1 + $0x78] sm:$0xff]
  %v62 = vld [vmem:[%s3] sm:$0x1]
  %v64 = vlaneseq
  %v65 = vshrl.u32 %v64, 7
  %v66 = vsub.s32 0, %v65
  %v67 = vrot.slane %v62, %v66
  %69 = vmatprep.subr.mxu0 0.0
  %70 = vmatpush1.msra.mxu0 %v46
  %71 = vmatprep.subr.mxu0 0.0
  %72 = vmatpush1.msra.mxu0 %v47
  %73 = vmatprep.subr.mxu0 0.0
  %74 = vmatpush1.msra.mxu0 %v48
  %75 = vmatprep.subr.mxu0 0.0
  %76 = vmatpush1.msra.mxu0 %v49
  %77 = vmatprep.subr.mxu0 0.0
  %78 = vmatpush1.msra.mxu0 %v50
  %79 = vmatprep.subr.mxu0 0.0
  %80 = vmatpush1.msra.mxu0 %v51
  %81 = vmatprep.subr.mxu0 0.0
  %82 = vmatpush1.msra.mxu0 %v52
  %83 = vmatprep.subr.mxu0 0.0
  %84 = vmatpush1.msra.mxu0 %v53
  %85 = vmatprep.subr.mxu0 0.0
  %86 = vmatpush1.msra.mxu0 %v54
  %87 = vmatprep.subr.mxu0 0.0
  %88 = vmatpush1.msra.mxu0 %v55
  %89 = vmatprep.subr.mxu0 0.0
  %90 = vmatpush1.msra.mxu0 %v56
  %91 = vmatprep.subr.mxu0 0.0
  %92 = vmatpush1.msra.mxu0 %v57
  %93 = vmatprep.subr.mxu0 0.0
  %94 = vmatpush1.msra.mxu0 %v58
  %95 = vmatprep.subr.mxu0 0.0
  %96 = vmatpush1.msra.mxu0 %v59
  %97 = vmatprep.subr.mxu0 0.0
  %98 = vmatpush1.msra.mxu0 %v60
  %99 = vmatprep.subr.mxu0 0.0
  %100 = vmatpush1.msra.mxu0 %v61
  %101 = vmatprep.subr.mxu0 0.0
  %102 = vmatpush1.msra.mxu0 0.0
  %103 = vmatprep.subr.mxu0 0.0
  %104 = vmatpush1.msra.mxu0 0.0
  %105 = vmatprep.subr.mxu0 0.0
  %106 = vmatpush1.msra.mxu0 0.0
  %107 = vmatprep.subr.mxu0 0.0
  %108 = vmatpush1.msra.mxu0 0.0
  %109 = vmatprep.subr.mxu0 0.0
  %110 = vmatpush1.msra.mxu0 0.0
  %111 = vmatprep.subr.mxu0 0.0
  %112 = vmatpush1.msra.mxu0 0.0
  %113 = vmatprep.subr.mxu0 0.0
  %114 = vmatpush1.msra.mxu0 0.0
  %115 = vmatprep.subr.mxu0 0.0
  %116 = vmatpush1.msra.mxu0 0.0
  %117 = vmatprep.subr.mxu0 0.0
  %118 = vmatpush1.msra.mxu0 0.0
  %119 = vmatprep.subr.mxu0 0.0
  %120 = vmatpush1.msra.mxu0 0.0
  %121 = vmatprep.subr.mxu0 0.0
  %122 = vmatpush1.msra.mxu0 0.0
  %123 = vmatprep.subr.mxu0 0.0
  %124 = vmatpush1.msra.mxu0 0.0
  %125 = vmatprep.subr.mxu0 0.0
  %126 = vmatpush1.msra.mxu0 0.0
  %127 = vmatprep.subr.mxu0 0.0
  %128 = vmatpush1.msra.mxu0 0.0
  %129 = vmatprep.subr.mxu0 0.0
  %130 = vmatpush1.msra.mxu0 0.0
  %131 = vmatprep.subr.mxu0 0.0
  %132 = vmatpush1.msra.mxu0 0.0
  %133 = vmatprep.mubr.f32.mxu0 0.0
  %134 = vmatmul.mubr.f32.gmra.mrb[0].mxu0 %v44
  %v135 = vpop.f32.mrb[0].mxu0
  %v136 = vadd.f32 %v67, %v135
  %v137 = vpop.f32.mrb[0].mxu0
  %138 = vmatprep.mubr.f32.mxu0 0.0
  %139 = vmatmul.mubr.f32.gmra.mrb[0].mxu0 %v45
  %v140 = vpop.f32.mrb[0].mxu0
  %v141 = vadd.f32 %v67, %v140
  %v142 = vpop.f32.mrb[0].mxu0
  %143 = vdwg.mxu0
  %v144 = vld [vmem:[%s4] sm:$0xff]
  %v145 = vld [vmem:[%s4 + $0x8] sm:$0xff]
  %v146 = vld [vmem:[%s4 + $0x10] sm:$0xff]
  %v147 = vld [vmem:[%s4 + $0x18] sm:$0xff]
  %v148 = vld [vmem:[%s4 + $0x20] sm:$0xff]
  %v149 = vld [vmem:[%s4 + $0x28] sm:$0xff]
  %v150 = vld [vmem:[%s4 + $0x30] sm:$0xff]
  %v151 = vld [vmem:[%s4 + $0x38] sm:$0xff]
  %v152 = vld [vmem:[%s4 + $0x40] sm:$0xff]
  %v153 = vld [vmem:[%s4 + $0x48] sm:$0xff]
  %v154 = vld [vmem:[%s4 + $0x50] sm:$0xff]
  %v155 = vld [vmem:[%s4 + $0x58] sm:$0xff]
  %v156 = vld [vmem:[%s4 + $0x60] sm:$0xff]
  %v157 = vld [vmem:[%s4 + $0x68] sm:$0xff]
  %v158 = vld [vmem:[%s4 + $0x70] sm:$0xff]
  %v159 = vld [vmem:[%s4 + $0x78] sm:$0xff]
  %v160 = vld [vmem:[%s6] sm:$0x1]
  %v162 = vlaneseq
  %v163 = vshrl.u32 %v162, 7
  %v164 = vsub.s32 0, %v163
  %v165 = vrot.slane %v160, %v164
  %167 = vmatprep.subr.mxu0 0.0
  %168 = vmatpush1.msra.mxu0 %v144
  %169 = vmatprep.subr.mxu0 0.0
  %170 = vmatpush1.msra.mxu0 %v145
  %171 = vmatprep.subr.mxu0 0.0
  %172 = vmatpush1.msra.mxu0 %v146
  %173 = vmatprep.subr.mxu0 0.0
  %174 = vmatpush1.msra.mxu0 %v147
  %175 = vmatprep.subr.mxu0 0.0
  %176 = vmatpush1.msra.mxu0 %v148
  %177 = vmatprep.subr.mxu0 0.0
  %178 = vmatpush1.msra.mxu0 %v149
  %179 = vmatprep.subr.mxu0 0.0
  %180 = vmatpush1.msra.mxu0 %v150
  %181 = vmatprep.subr.mxu0 0.0
  %182 = vmatpush1.msra.mxu0 %v151
  %183 = vmatprep.subr.mxu0 0.0
  %184 = vmatpush1.msra.mxu0 %v152
  %185 = vmatprep.subr.mxu0 0.0
  %186 = vmatpush1.msra.mxu0 %v153
  %187 = vmatprep.subr.mxu0 0.0
  %188 = vmatpush1.msra.mxu0 %v154
  %189 = vmatprep.subr.mxu0 0.0
  %190 = vmatpush1.msra.mxu0 %v155
  %191 = vmatprep.subr.mxu0 0.0
  %192 = vmatpush1.msra.mxu0 %v156
  %193 = vmatprep.subr.mxu0 0.0
  %194 = vmatpush1.msra.mxu0 %v157
  %195 = vmatprep.subr.mxu0 0.0
  %196 = vmatpush1.msra.mxu0 %v158
  %197 = vmatprep.subr.mxu0 0.0
  %198 = vmatpush1.msra.mxu0 %v159
  %199 = vmatprep.subr.mxu0 0.0
  %200 = vmatpush1.msra.mxu0 0.0
  %201 = vmatprep.subr.mxu0 0.0
  %202 = vmatpush1.msra.mxu0 0.0
  %203 = vmatprep.subr.mxu0 0.0
  %204 = vmatpush1.msra.mxu0 0.0
  %205 = vmatprep.subr.mxu0 0.0
  %206 = vmatpush1.msra.mxu0 0.0
  %207 = vmatprep.subr.mxu0 0.0
  %208 = vmatpush1.msra.mxu0 0.0
  %209 = vmatprep.subr.mxu0 0.0
  %210 = vmatpush1.msra.mxu0 0.0
  %211 = vmatprep.subr.mxu0 0.0
  %212 = vmatpush1.msra.mxu0 0.0
  %213 = vmatprep.subr.mxu0 0.0
  %214 = vmatpush1.msra.mxu0 0.0
  %215 = vmatprep.subr.mxu0 0.0
  %216 = vmatpush1.msra.mxu0 0.0
  %217 = vmatprep.subr.mxu0 0.0
  %218 = vmatpush1.msra.mxu0 0.0
  %219 = vmatprep.subr.mxu0 0.0
  %220 = vmatpush1.msra.mxu0 0.0
  %221 = vmatprep.subr.mxu0 0.0
  %222 = vmatpush1.msra.mxu0 0.0
  %223 = vmatprep.subr.mxu0 0.0
  %224 = vmatpush1.msra.mxu0 0.0
  %225 = vmatprep.subr.mxu0 0.0
  %226 = vmatpush1.msra.mxu0 0.0
  %227 = vmatprep.subr.mxu0 0.0
  %228 = vmatpush1.msra.mxu0 0.0
  %229 = vmatprep.subr.mxu0 0.0
  %230 = vmatpush1.msra.mxu0 0.0
  %231 = vmatprep.mubr.f32.mxu0 0.0
  %232 = vmatmul.mubr.f32.gmra.mrb[0].mxu0 %v44
  %v233 = vpop.f32.mrb[0].mxu0
  %v234 = vadd.f32 %v165, %v233
  %v235 = vpop.f32.mrb[0].mxu0
  %236 = vmatprep.mubr.f32.mxu0 0.0
  %237 = vmatmul.mubr.f32.gmra.mrb[0].mxu0 %v45
  %v238 = vpop.f32.mrb[0].mxu0
  %v239 = vadd.f32 %v165, %v238
  %v240 = vpop.f32.mrb[0].mxu0
  %241 = vdwg.mxu0
  %v242 = vld [vmem:[%s2] sm:$0xff]
  %v243 = vld [vmem:[%s2 + $0x8] sm:$0xff]
  %v244 = vld [vmem:[%s5] sm:$0xff]
  %v245 = vld [vmem:[%s5 + $0x8] sm:$0xff]
  %vm246 = vcmask 130048
  %v248 = vsel %vm246, 0.0, 0
  %250 = vmatprep.subr.mxu0 0.0
  %251 = vmatpush1.msra.mxu0 %v242
  %252 = vmatprep.subr.mxu0 0.0
  %253 = vmatpush1.msra.mxu0 %v243
  %254 = vmatprep.subr.mxu0 0.0
  %255 = vmatpush1.msra.mxu0 0.0
  %256 = vmatprep.subr.mxu0 0.0
  %257 = vmatpush1.msra.mxu0 0.0
  %258 = vmatprep.subr.mxu0 0.0
  %259 = vmatpush1.msra.mxu0 0.0
  %260 = vmatprep.subr.mxu0 0.0
  %261 = vmatpush1.msra.mxu0 0.0
  %262 = vmatprep.subr.mxu0 0.0
  %263 = vmatpush1.msra.mxu0 0.0
  %264 = vmatprep.subr.mxu0 0.0
  %265 = vmatpush1.msra.mxu0 0.0
  %266 = vmatprep.subr.mxu0 0.0
  %267 = vmatpush1.msra.mxu0 0.0
  %268 = vmatprep.subr.mxu0 0.0
  %269 = vmatpush1.msra.mxu0 0.0
  %270 = vmatprep.subr.mxu0 0.0
  %271 = vmatpush1.msra.mxu0 0.0
  %272 = vmatprep.subr.mxu0 0.0
  %273 = vmatpush1.msra.mxu0 0.0
  %274 = vmatprep.subr.mxu0 0.0
  %275 = vmatpush1.msra.mxu0 0.0
  %276 = vmatprep.subr.mxu0 0.0
  %277 = vmatpush1.msra.mxu0 0.0
  %278 = vmatprep.subr.mxu0 0.0
  %279 = vmatpush1.msra.mxu0 0.0
  %280 = vmatprep.subr.mxu0 0.0
  %281 = vmatpush1.msra.mxu0 0.0
  %282 = vmatprep.subr.mxu0 0.0
  %283 = vmatpush1.msra.mxu0 0.0
  %284 = vmatprep.subr.mxu0 0.0
  %285 = vmatpush1.msra.mxu0 0.0
  %286 = vmatprep.subr.mxu0 0.0
  %287 = vmatpush1.msra.mxu0 0.0
  %288 = vmatprep.subr.mxu0 0.0
  %289 = vmatpush1.msra.mxu0 0.0
  %290 = vmatprep.subr.mxu0 0.0
  %291 = vmatpush1.msra.mxu0 0.0
  %292 = vmatprep.subr.mxu0 0.0
  %293 = vmatpush1.msra.mxu0 0.0
  %294 = vmatprep.subr.mxu0 0.0
  %295 = vmatpush1.msra.mxu0 0.0
  %296 = vmatprep.subr.mxu0 0.0
  %297 = vmatpush1.msra.mxu0 0.0
  %298 = vmatprep.subr.mxu0 0.0
  %299 = vmatpush1.msra.mxu0 0.0
  %300 = vmatprep.subr.mxu0 0.0
  %301 = vmatpush1.msra.mxu0 0.0
  %302 = vmatprep.subr.mxu0 0.0
  %303 = vmatpush1.msra.mxu0 0.0
  %304 = vmatprep.subr.mxu0 0.0
  %305 = vmatpush1.msra.mxu0 0.0
  %306 = vmatprep.subr.mxu0 0.0
  %307 = vmatpush1.msra.mxu0 0.0
  %308 = vmatprep.subr.mxu0 0.0
  %309 = vmatpush1.msra.mxu0 0.0
  %310 = vmatprep.subr.mxu0 0.0
  %311 = vmatpush1.msra.mxu0 0.0
  %312 = vmatprep.subr.mxu0 0.0
  %313 = vmatpush1.msra.mxu0 0.0
  %314 = vmatprep.mubr.f32.mxu0 0.0
  %315 = vmatmul.mubr.f32.gmra.mrb[0].mxu0 %v248
  %v316 = vpop.f32.mrb[0].mxu0
  %v317 = vadd.f32 0.0, %v316
  %v318 = vpop.f32.mrb[0].mxu0
  %319 = vdwg.mxu0
  %v320 = vadd.f32 %v136, %v317
  %v321 = vxor.u32 %v320, 2147483648
  %v322 = vmul.f32 %v321, 1.442695
  %v323 = vpow.pop %v322
  %v324 = vadd.f32 %v323, 1.0
  %v325 = vrcp.pop %v324
  %v326 = vmul.f32 1.0, %v325
  %v327 = vtanh.pop %v320
  %v328 = vmul.f32 %v326, 0.0
  %330 = vrot.lane.b32.xlu0 %v327, 96
  %v331 = vpop.permute.xlu0 %330
  %v333 = vmul.f32 %v326, %v331
  %335 = vrot.lane.b32.xlu0 %v333, 16
  %v336 = vpop.permute.xlu0 %335
  %v338 = vadd.f32 %v328, %v336
  %v339 = vtanh.pop %v338
  %341 = vrot.lane.b32.xlu0 %v339, 32
  %v342 = vpop.permute.xlu0 %341
  %v344 = vmul.f32 %v326, %v342
  %346 = vrot.lane.b32.xlu0 %v344, 80
  %v347 = vpop.permute.xlu0 %346
  %vm349 = vcmask 123904
  %350 = vst.msk [vmem:[%s13] sm:$0x3] %vm349, %v347
  %v351 = vsel %vm246, %v347, 0
  %353 = vmatprep.subr.mxu0 0.0
  %354 = vmatpush1.msra.mxu0 %v242
  %355 = vmatprep.subr.mxu0 0.0
  %356 = vmatpush1.msra.mxu0 %v243
  %357 = vmatprep.subr.mxu0 0.0
  %358 = vmatpush1.msra.mxu0 0.0
  %359 = vmatprep.subr.mxu0 0.0
  %360 = vmatpush1.msra.mxu0 0.0
  %361 = vmatprep.subr.mxu0 0.0
  %362 = vmatpush1.msra.mxu0 0.0
  %363 = vmatprep.subr.mxu0 0.0
  %364 = vmatpush1.msra.mxu0 0.0
  %365 = vmatprep.subr.mxu0 0.0
  %366 = vmatpush1.msra.mxu0 0.0
  %367 = vmatprep.subr.mxu0 0.0
  %368 = vmatpush1.msra.mxu0 0.0
  %369 = vmatprep.subr.mxu0 0.0
  %370 = vmatpush1.msra.mxu0 0.0
  %371 = vmatprep.subr.mxu0 0.0
  %372 = vmatpush1.msra.mxu0 0.0
  %373 = vmatprep.subr.mxu0 0.0
  %374 = vmatpush1.msra.mxu0 0.0
  %375 = vmatprep.subr.mxu0 0.0
  %376 = vmatpush1.msra.mxu0 0.0
  %377 = vmatprep.subr.mxu0 0.0
  %378 = vmatpush1.msra.mxu0 0.0
  %379 = vmatprep.subr.mxu0 0.0
  %380 = vmatpush1.msra.mxu0 0.0
  %381 = vmatprep.subr.mxu0 0.0
  %382 = vmatpush1.msra.mxu0 0.0
  %383 = vmatprep.subr.mxu0 0.0
  %384 = vmatpush1.msra.mxu0 0.0
  %385 = vmatprep.subr.mxu0 0.0
  %386 = vmatpush1.msra.mxu0 0.0
  %387 = vmatprep.subr.mxu0 0.0
  %388 = vmatpush1.msra.mxu0 0.0
  %389 = vmatprep.subr.mxu0 0.0
  %390 = vmatpush1.msra.mxu0 0.0
  %391 = vmatprep.subr.mxu0 0.0
  %392 = vmatpush1.msra.mxu0 0.0
  %393 = vmatprep.subr.mxu0 0.0
  %394 = vmatpush1.msra.mxu0 0.0
  %395 = vmatprep.subr.mxu0 0.0
  %396 = vmatpush1.msra.mxu0 0.0
  %397 = vmatprep.subr.mxu0 0.0
  %398 = vmatpush1.msra.mxu0 0.0
  %399 = vmatprep.subr.mxu0 0.0
  %400 = vmatpush1.msra.mxu0 0.0
  %401 = vmatprep.subr.mxu0 0.0
  %402 = vmatpush1.msra.mxu0 0.0
  %403 = vmatprep.subr.mxu0 0.0
  %404 = vmatpush1.msra.mxu0 0.0
  %405 = vmatprep.subr.mxu0 0.0
  %406 = vmatpush1.msra.mxu0 0.0
  %407 = vmatprep.subr.mxu0 0.0
  %408 = vmatpush1.msra.mxu0 0.0
  %409 = vmatprep.subr.mxu0 0.0
  %410 = vmatpush1.msra.mxu0 0.0
  %411 = vmatprep.subr.mxu0 0.0
  %412 = vmatpush1.msra.mxu0 0.0
  %413 = vmatprep.subr.mxu0 0.0
  %414 = vmatpush1.msra.mxu0 0.0
  %415 = vmatprep.subr.mxu0 0.0
  %416 = vmatpush1.msra.mxu0 0.0
  %417 = vmatprep.mubr.f32.mxu0 0.0
  %418 = vmatmul.mubr.f32.gmra.mrb[0].mxu0 %v351
  %v419 = vpop.f32.mrb[0].mxu0
  %v420 = vadd.f32 0.0, %v419
  %v421 = vpop.f32.mrb[0].mxu0
  %422 = vdwg.mxu0
  %v424 = vrot.slane %v420, 6
  %v426 = vadd.f32 %v136, %v424
  %v427 = vxor.u32 %v426, 2147483648
  %v428 = vmul.f32 %v427, 1.442695
  %v429 = vpow.pop %v428
  %v430 = vadd.f32 %v429, 1.0
  %v431 = vrcp.pop %v430
  %v432 = vmul.f32 1.0, %v431
  %v433 = vtanh.pop %v426
  %v435 = vrot.slane %v338, 6
  %v437 = vmul.f32 %v432, %v435
  %439 = vrot.lane.b32.xlu0 %v433, 96
  %v440 = vpop.permute.xlu0 %439
  %v442 = vmul.f32 %v432, %v440
  %444 = vrot.lane.b32.xlu0 %v442, 16
  %v445 = vpop.permute.xlu0 %444
  %v447 = vadd.f32 %v437, %v445
  %v448 = vtanh.pop %v447
  %450 = vrot.lane.b32.xlu0 %v448, 32
  %v451 = vpop.permute.xlu0 %450
  %v453 = vmul.f32 %v432, %v451
  %455 = vrot.lane.b32.xlu0 %v453, 80
  %v456 = vpop.permute.xlu0 %455
  %vm458 = vcmask 125954
  %459 = vst.msk [vmem:[%s13] sm:$0xc] %vm458, %v456
  %v460 = vrot.slane %v453, 2
  %461 = vrot.lane.b32.xlu0 %v460, 80
  %v462 = vpop.permute.xlu0 %461
  %v463 = vsel %vm246, %v462, 0
  %465 = vmatprep.subr.mxu0 0.0
  %466 = vmatpush1.msra.mxu0 %v242
  %467 = vmatprep.subr.mxu0 0.0
  %468 = vmatpush1.msra.mxu0 %v243
  %469 = vmatprep.subr.mxu0 0.0
  %470 = vmatpush1.msra.mxu0 0.0
  %471 = vmatprep.subr.mxu0 0.0
  %472 = vmatpush1.msra.mxu0 0.0
  %473 = vmatprep.subr.mxu0 0.0
  %474 = vmatpush1.msra.mxu0 0.0
  %475 = vmatprep.subr.mxu0 0.0
  %476 = vmatpush1.msra.mxu0 0.0
  %477 = vmatprep.subr.mxu0 0.0
  %478 = vmatpush1.msra.mxu0 0.0
  %479 = vmatprep.subr.mxu0 0.0
  %480 = vmatpush1.msra.mxu0 0.0
  %481 = vmatprep.subr.mxu0 0.0
  %482 = vmatpush1.msra.mxu0 0.0
  %483 = vmatprep.subr.mxu0 0.0
  %484 = vmatpush1.msra.mxu0 0.0
  %485 = vmatprep.subr.mxu0 0.0
  %486 = vmatpush1.msra.mxu0 0.0
  %487 = vmatprep.subr.mxu0 0.0
  %488 = vmatpush1.msra.mxu0 0.0
  %489 = vmatprep.subr.mxu0 0.0
  %490 = vmatpush1.msra.mxu0 0.0
  %491 = vmatprep.subr.mxu0 0.0
  %492 = vmatpush1.msra.mxu0 0.0
  %493 = vmatprep.subr.mxu0 0.0
  %494 = vmatpush1.msra.mxu0 0.0
  %495 = vmatprep.subr.mxu0 0.0
  %496 = vmatpush1.msra.mxu0 0.0
  %497 = vmatprep.subr.mxu0 0.0
  %498 = vmatpush1.msra.mxu0 0.0
  %499 = vmatprep.subr.mxu0 0.0
  %500 = vmatpush1.msra.mxu0 0.0
  %501 = vmatprep.subr.mxu0 0.0
  %502 = vmatpush1.msra.mxu0 0.0
  %503 = vmatprep.subr.mxu0 0.0
  %504 = vmatpush1.msra.mxu0 0.0
  %505 = vmatprep.subr.mxu0 0.0
  %506 = vmatpush1.msra.mxu0 0.0
  %507 = vmatprep.subr.mxu0 0.0
  %508 = vmatpush1.msra.mxu0 0.0
  %509 = vmatprep.subr.mxu0 0.0
  %510 = vmatpush1.msra.mxu0 0.0
  %511 = vmatprep.subr.mxu0 0.0
  %512 = vmatpush1.msra.mxu0 0.0
  %513 = vmatprep.subr.mxu0 0.0
  %514 = vmatpush1.msra.mxu0 0.0
  %515 = vmatprep.subr.mxu0 0.0
  %516 = vmatpush1.msra.mxu0 0.0
  %517 = vmatprep.subr.mxu0 0.0
  %518 = vmatpush1.msra.mxu0 0.0
  %519 = vmatprep.subr.mxu0 0.0
  %520 = vmatpush1.msra.mxu0 0.0
  %521 = vmatprep.subr.mxu0 0.0
  %522 = vmatpush1.msra.mxu0 0.0
  %523 = vmatprep.subr.mxu0 0.0
  %524 = vmatpush1.msra.mxu0 0.0
  %525 = vmatprep.subr.mxu0 0.0
  %526 = vmatpush1.msra.mxu0 0.0
  %527 = vmatprep.subr.mxu0 0.0
  %528 = vmatpush1.msra.mxu0 0.0
  %529 = vmatprep.mubr.f32.mxu0 0.0
  %530 = vmatmul.mubr.f32.gmra.mrb[0].mxu0 %v463
  %v531 = vpop.f32.mrb[0].mxu0
  %v532 = vadd.f32 0.0, %v531
  %v533 = vpop.f32.mrb[0].mxu0
  %534 = vdwg.mxu0
  %v536 = vrot.slane %v532, 4
  %v538 = vadd.f32 %v136, %v536
  %v539 = vxor.u32 %v538, 2147483648
  %v540 = vmul.f32 %v539, 1.442695
  %v541 = vpow.pop %v540
  %v542 = vadd.f32 %v541, 1.0
  %v543 = vrcp.pop %v542
  %v544 = vmul.f32 1.0, %v543
  %v545 = vtanh.pop %v538
  %v547 = vrot.slane %v447, 6
  %v549 = vmul.f32 %v544, %v547
  %551 = vrot.lane.b32.xlu0 %v545, 96
  %v552 = vpop.permute.xlu0 %551
  %v554 = vmul.f32 %v544, %v552
  %556 = vrot.lane.b32.xlu0 %v554, 16
  %v557 = vpop.permute.xlu0 %556
  %v559 = vadd.f32 %v549, %v557
  %v560 = vtanh.pop %v559
  %562 = vrot.lane.b32.xlu0 %v560, 32
  %v563 = vpop.permute.xlu0 %562
  %v565 = vmul.f32 %v544, %v563
  %567 = vrot.lane.b32.xlu0 %v565, 80
  %v568 = vpop.permute.xlu0 %567
  %vm570 = vcmask 128004
  %571 = vst.msk [vmem:[%s13] sm:$0x30] %vm570, %v568
  %v572 = vrot.slane %v565, 4
  %573 = vrot.lane.b32.xlu0 %v572, 80
  %v574 = vpop.permute.xlu0 %573
  %v575 = vsel %vm246, %v574, 0
  %577 = vmatprep.subr.mxu0 0.0
  %578 = vmatpush1.msra.mxu0 %v242
  %579 = vmatprep.subr.mxu0 0.0
  %580 = vmatpush1.msra.mxu0 %v243
  %581 = vmatprep.subr.mxu0 0.0
  %582 = vmatpush1.msra.mxu0 0.0
  %583 = vmatprep.subr.mxu0 0.0
  %584 = vmatpush1.msra.mxu0 0.0
  %585 = vmatprep.subr.mxu0 0.0
  %586 = vmatpush1.msra.mxu0 0.0
  %587 = vmatprep.subr.mxu0 0.0
  %588 = vmatpush1.msra.mxu0 0.0
  %589 = vmatprep.subr.mxu0 0.0
  %590 = vmatpush1.msra.mxu0 0.0
  %591 = vmatprep.subr.mxu0 0.0
  %592 = vmatpush1.msra.mxu0 0.0
  %593 = vmatprep.subr.mxu0 0.0
  %594 = vmatpush1.msra.mxu0 0.0
  %595 = vmatprep.subr.mxu0 0.0
  %596 = vmatpush1.msra.mxu0 0.0
  %597 = vmatprep.subr.mxu0 0.0
  %598 = vmatpush1.msra.mxu0 0.0
  %599 = vmatprep.subr.mxu0 0.0
  %600 = vmatpush1.msra.mxu0 0.0
  %601 = vmatprep.subr.mxu0 0.0
  %602 = vmatpush1.msra.mxu0 0.0
  %603 = vmatprep.subr.mxu0 0.0
  %604 = vmatpush1.msra.mxu0 0.0
  %605 = vmatprep.subr.mxu0 0.0
  %606 = vmatpush1.msra.mxu0 0.0
  %607 = vmatprep.subr.mxu0 0.0
  %608 = vmatpush1.msra.mxu0 0.0
  %609 = vmatprep.subr.mxu0 0.0
  %610 = vmatpush1.msra.mxu0 0.0
  %611 = vmatprep.subr.mxu0 0.0
  %612 = vmatpush1.msra.mxu0 0.0
  %613 = vmatprep.subr.mxu0 0.0
  %614 = vmatpush1.msra.mxu0 0.0
  %615 = vmatprep.subr.mxu0 0.0
  %616 = vmatpush1.msra.mxu0 0.0
  %617 = vmatprep.subr.mxu0 0.0
  %618 = vmatpush1.msra.mxu0 0.0
  %619 = vmatprep.subr.mxu0 0.0
  %620 = vmatpush1.msra.mxu0 0.0
  %621 = vmatprep.subr.mxu0 0.0
  %622 = vmatpush1.msra.mxu0 0.0
  %623 = vmatprep.subr.mxu0 0.0
  %624 = vmatpush1.msra.mxu0 0.0
  %625 = vmatprep.subr.mxu0 0.0
  %626 = vmatpush1.msra.mxu0 0.0
  %627 = vmatprep.subr.mxu0 0.0
  %628 = vmatpush1.msra.mxu0 0.0
  %629 = vmatprep.subr.mxu0 0.0
  %630 = vmatpush1.msra.mxu0 0.0
  %631 = vmatprep.subr.mxu0 0.0
  %632 = vmatpush1.msra.mxu0 0.0
  %633 = vmatprep.subr.mxu0 0.0
  %634 = vmatpush1.msra.mxu0 0.0
  %635 = vmatprep.subr.mxu0 0.0
  %636 = vmatpush1.msra.mxu0 0.0
  %637 = vmatprep.subr.mxu0 0.0
  %638 = vmatpush1.msra.mxu0 0.0
  %639 = vmatprep.subr.mxu0 0.0
  %640 = vmatpush1.msra.mxu0 0.0
  %641 = vmatprep.mubr.f32.mxu0 0.0
  %642 = vmatmul.mubr.f32.gmra.mrb[0].mxu0 %v575
  %v643 = vpop.f32.mrb[0].mxu0
  %v644 = vadd.f32 0.0, %v643
  %v645 = vpop.f32.mrb[0].mxu0
  %646 = vdwg.mxu0
  %v648 = vrot.slane %v644, 2
  %v650 = vadd.f32 %v136, %v648
  %v651 = vxor.u32 %v650, 2147483648
  %v652 = vmul.f32 %v651, 1.442695
  %v653 = vpow.pop %v652
  %v654 = vadd.f32 %v653, 1.0
  %v655 = vrcp.pop %v654
  %v656 = vmul.f32 1.0, %v655
  %v657 = vtanh.pop %v650
  %v659 = vrot.slane %v559, 6
  %v661 = vmul.f32 %v656, %v659
  %663 = vrot.lane.b32.xlu0 %v657, 96
  %v664 = vpop.permute.xlu0 %663
  %v666 = vmul.f32 %v656, %v664
  %668 = vrot.lane.b32.xlu0 %v666, 16
  %v669 = vpop.permute.xlu0 %668
  %v671 = vadd.f32 %v661, %v669
  %v672 = vtanh.pop %v671
  %674 = vrot.lane.b32.xlu0 %v672, 32
  %v675 = vpop.permute.xlu0 %674
  %v677 = vmul.f32 %v656, %v675
  %679 = vrot.lane.b32.xlu0 %v677, 80
  %v680 = vpop.permute.xlu0 %679
  %vm682 = vcmask 130054
  %683 = vst.msk [vmem:[%s13] sm:$0xc0] %vm682, %v680
  %v684 = vrot.slane %v677, 6
  %685 = vrot.lane.b32.xlu0 %v684, 80
  %v686 = vpop.permute.xlu0 %685
  %v687 = vsel %vm246, %v686, 0
  %689 = vmatprep.subr.mxu0 0.0
  %690 = vmatpush1.msra.mxu0 %v242
  %691 = vmatprep.subr.mxu0 0.0
  %692 = vmatpush1.msra.mxu0 %v243
  %693 = vmatprep.subr.mxu0 0.0
  %694 = vmatpush1.msra.mxu0 0.0
  %695 = vmatprep.subr.mxu0 0.0
  %696 = vmatpush1.msra.mxu0 0.0
  %697 = vmatprep.subr.mxu0 0.0
  %698 = vmatpush1.msra.mxu0 0.0
  %699 = vmatprep.subr.mxu0 0.0
  %700 = vmatpush1.msra.mxu0 0.0
  %701 = vmatprep.subr.mxu0 0.0
  %702 = vmatpush1.msra.mxu0 0.0
  %703 = vmatprep.subr.mxu0 0.0
  %704 = vmatpush1.msra.mxu0 0.0
  %705 = vmatprep.subr.mxu0 0.0
  %706 = vmatpush1.msra.mxu0 0.0
  %707 = vmatprep.subr.mxu0 0.0
  %708 = vmatpush1.msra.mxu0 0.0
  %709 = vmatprep.subr.mxu0 0.0
  %710 = vmatpush1.msra.mxu0 0.0
  %711 = vmatprep.subr.mxu0 0.0
  %712 = vmatpush1.msra.mxu0 0.0
  %713 = vmatprep.subr.mxu0 0.0
  %714 = vmatpush1.msra.mxu0 0.0
  %715 = vmatprep.subr.mxu0 0.0
  %716 = vmatpush1.msra.mxu0 0.0
  %717 = vmatprep.subr.mxu0 0.0
  %718 = vmatpush1.msra.mxu0 0.0
  %719 = vmatprep.subr.mxu0 0.0
  %720 = vmatpush1.msra.mxu0 0.0
  %721 = vmatprep.subr.mxu0 0.0
  %722 = vmatpush1.msra.mxu0 0.0
  %723 = vmatprep.subr.mxu0 0.0
  %724 = vmatpush1.msra.mxu0 0.0
  %725 = vmatprep.subr.mxu0 0.0
  %726 = vmatpush1.msra.mxu0 0.0
  %727 = vmatprep.subr.mxu0 0.0
  %728 = vmatpush1.msra.mxu0 0.0
  %729 = vmatprep.subr.mxu0 0.0
  %730 = vmatpush1.msra.mxu0 0.0
  %731 = vmatprep.subr.mxu0 0.0
  %732 = vmatpush1.msra.mxu0 0.0
  %733 = vmatprep.subr.mxu0 0.0
  %734 = vmatpush1.msra.mxu0 0.0
  %735 = vmatprep.subr.mxu0 0.0
  %736 = vmatpush1.msra.mxu0 0.0
  %737 = vmatprep.subr.mxu0 0.0
  %738 = vmatpush1.msra.mxu0 0.0
  %739 = vmatprep.subr.mxu0 0.0
  %740 = vmatpush1.msra.mxu0 0.0
  %741 = vmatprep.subr.mxu0 0.0
  %742 = vmatpush1.msra.mxu0 0.0
  %743 = vmatprep.subr.mxu0 0.0
  %744 = vmatpush1.msra.mxu0 0.0
  %745 = vmatprep.subr.mxu0 0.0
  %746 = vmatpush1.msra.mxu0 0.0
  %747 = vmatprep.subr.mxu0 0.0
  %748 = vmatpush1.msra.mxu0 0.0
  %749 = vmatprep.subr.mxu0 0.0
  %750 = vmatpush1.msra.mxu0 0.0
  %751 = vmatprep.subr.mxu0 0.0
  %752 = vmatpush1.msra.mxu0 0.0
  %753 = vmatprep.mubr.f32.mxu0 0.0
  %754 = vmatmul.mubr.f32.gmra.mrb[0].mxu0 %v687
  %v755 = vpop.f32.mrb[0].mxu0
  %v756 = vadd.f32 0.0, %v755
  %v757 = vpop.f32.mrb[0].mxu0
  %758 = vdwg.mxu0
  %v759 = vadd.f32 %v141, %v756
  %v760 = vxor.u32 %v759, 2147483648
  %v761 = vmul.f32 %v760, 1.442695
  %v762 = vpow.pop %v761
  %v763 = vadd.f32 %v762, 1.0
  %v764 = vrcp.pop %v763
  %v765 = vmul.f32 1.0, %v764
  %v766 = vtanh.pop %v759
  %v768 = vrot.slane %v671, 6
  %v770 = vmul.f32 %v765, %v768
  %772 = vrot.lane.b32.xlu0 %v766, 96
  %v773 = vpop.permute.xlu0 %772
  %v775 = vmul.f32 %v765, %v773
  %777 = vrot.lane.b32.xlu0 %v775, 16
  %v778 = vpop.permute.xlu0 %777
  %v780 = vadd.f32 %v770, %v778
  %v781 = vtanh.pop %v780
  %783 = vrot.lane.b32.xlu0 %v781, 32
  %v784 = vpop.permute.xlu0 %783
  %v786 = vmul.f32 %v765, %v784
  %788 = vrot.lane.b32.xlu0 %v786, 80
  %v789 = vpop.permute.xlu0 %788
  %791 = vst.msk [vmem:[%s13 + $0x8] sm:$0x3] %vm349, %v789
  %v792 = vsel %vm246, %v789, 0
  %794 = vmatprep.subr.mxu0 0.0
  %795 = vmatpush1.msra.mxu0 %v242
  %796 = vmatprep.subr.mxu0 0.0
  %797 = vmatpush1.msra.mxu0 %v243
  %798 = vmatprep.subr.mxu0 0.0
  %799 = vmatpush1.msra.mxu0 0.0
  %800 = vmatprep.subr.mxu0 0.0
  %801 = vmatpush1.msra.mxu0 0.0
  %802 = vmatprep.subr.mxu0 0.0
  %803 = vmatpush1.msra.mxu0 0.0
  %804 = vmatprep.subr.mxu0 0.0
  %805 = vmatpush1.msra.mxu0 0.0
  %806 = vmatprep.subr.mxu0 0.0
  %807 = vmatpush1.msra.mxu0 0.0
  %808 = vmatprep.subr.mxu0 0.0
  %809 = vmatpush1.msra.mxu0 0.0
  %810 = vmatprep.subr.mxu0 0.0
  %811 = vmatpush1.msra.mxu0 0.0
  %812 = vmatprep.subr.mxu0 0.0
  %813 = vmatpush1.msra.mxu0 0.0
  %814 = vmatprep.subr.mxu0 0.0
  %815 = vmatpush1.msra.mxu0 0.0
  %816 = vmatprep.subr.mxu0 0.0
  %817 = vmatpush1.msra.mxu0 0.0
  %818 = vmatprep.subr.mxu0 0.0
  %819 = vmatpush1.msra.mxu0 0.0
  %820 = vmatprep.subr.mxu0 0.0
  %821 = vmatpush1.msra.mxu0 0.0
  %822 = vmatprep.subr.mxu0 0.0
  %823 = vmatpush1.msra.mxu0 0.0
  %824 = vmatprep.subr.mxu0 0.0
  %825 = vmatpush1.msra.mxu0 0.0
  %826 = vmatprep.subr.mxu0 0.0
  %827 = vmatpush1.msra.mxu0 0.0
  %828 = vmatprep.subr.mxu0 0.0
  %829 = vmatpush1.msra.mxu0 0.0
  %830 = vmatprep.subr.mxu0 0.0
  %831 = vmatpush1.msra.mxu0 0.0
  %832 = vmatprep.subr.mxu0 0.0
  %833 = vmatpush1.msra.mxu0 0.0
  %834 = vmatprep.subr.mxu0 0.0
  %835 = vmatpush1.msra.mxu0 0.0
  %836 = vmatprep.subr.mxu0 0.0
  %837 = vmatpush1.msra.mxu0 0.0
  %838 = vmatprep.subr.mxu0 0.0
  %839 = vmatpush1.msra.mxu0 0.0
  %840 = vmatprep.subr.mxu0 0.0
  %841 = vmatpush1.msra.mxu0 0.0
  %842 = vmatprep.subr.mxu0 0.0
  %843 = vmatpush1.msra.mxu0 0.0
  %844 = vmatprep.subr.mxu0 0.0
  %845 = vmatpush1.msra.mxu0 0.0
  %846 = vmatprep.subr.mxu0 0.0
  %847 = vmatpush1.msra.mxu0 0.0
  %848 = vmatprep.subr.mxu0 0.0
  %849 = vmatpush1.msra.mxu0 0.0
  %850 = vmatprep.subr.mxu0 0.0
  %851 = vmatpush1.msra.mxu0 0.0
  %852 = vmatprep.subr.mxu0 0.0
  %853 = vmatpush1.msra.mxu0 0.0
  %854 = vmatprep.subr.mxu0 0.0
  %855 = vmatpush1.msra.mxu0 0.0
  %856 = vmatprep.subr.mxu0 0.0
  %857 = vmatpush1.msra.mxu0 0.0
  %858 = vmatprep.mubr.f32.mxu0 0.0
  %859 = vmatmul.mubr.f32.gmra.mrb[0].mxu0 %v792
  %v860 = vpop.f32.mrb[0].mxu0
  %v861 = vadd.f32 0.0, %v860
  %v862 = vpop.f32.mrb[0].mxu0
  %863 = vdwg.mxu0
  %v865 = vrot.slane %v861, 6
  %v867 = vadd.f32 %v141, %v865
  %v868 = vxor.u32 %v867, 2147483648
  %v869 = vmul.f32 %v868, 1.442695
  %v870 = vpow.pop %v869
  %v871 = vadd.f32 %v870, 1.0
  %v872 = vrcp.pop %v871
  %v873 = vmul.f32 1.0, %v872
  %v874 = vtanh.pop %v867
  %v876 = vrot.slane %v780, 6
  %v878 = vmul.f32 %v873, %v876
  %880 = vrot.lane.b32.xlu0 %v874, 96
  %v881 = vpop.permute.xlu0 %880
  %v883 = vmul.f32 %v873, %v881
  %885 = vrot.lane.b32.xlu0 %v883, 16
  %v886 = vpop.permute.xlu0 %885
  %v888 = vadd.f32 %v878, %v886
  %v889 = vtanh.pop %v888
  %891 = vrot.lane.b32.xlu0 %v889, 32
  %v892 = vpop.permute.xlu0 %891
  %v894 = vmul.f32 %v873, %v892
  %896 = vrot.lane.b32.xlu0 %v894, 80
  %v897 = vpop.permute.xlu0 %896
  %899 = vst.msk [vmem:[%s13 + $0x8] sm:$0xc] %vm458, %v897
  %v900 = vrot.slane %v894, 2
  %901 = vrot.lane.b32.xlu0 %v900, 80
  %v902 = vpop.permute.xlu0 %901
  %v903 = vsel %vm246, %v902, 0
  %905 = vmatprep.subr.mxu0 0.0
  %906 = vmatpush1.msra.mxu0 %v242
  %907 = vmatprep.subr.mxu0 0.0
  %908 = vmatpush1.msra.mxu0 %v243
  %909 = vmatprep.subr.mxu0 0.0
  %910 = vmatpush1.msra.mxu0 0.0
  %911 = vmatprep.subr.mxu0 0.0
  %912 = vmatpush1.msra.mxu0 0.0
  %913 = vmatprep.subr.mxu0 0.0
  %914 = vmatpush1.msra.mxu0 0.0
  %915 = vmatprep.subr.mxu0 0.0
  %916 = vmatpush1.msra.mxu0 0.0
  %917 = vmatprep.subr.mxu0 0.0
  %918 = vmatpush1.msra.mxu0 0.0
  %919 = vmatprep.subr.mxu0 0.0
  %920 = vmatpush1.msra.mxu0 0.0
  %921 = vmatprep.subr.mxu0 0.0
  %922 = vmatpush1.msra.mxu0 0.0
  %923 = vmatprep.subr.mxu0 0.0
  %924 = vmatpush1.msra.mxu0 0.0
  %925 = vmatprep.subr.mxu0 0.0
  %926 = vmatpush1.msra.mxu0 0.0
  %927 = vmatprep.subr.mxu0 0.0
  %928 = vmatpush1.msra.mxu0 0.0
  %929 = vmatprep.subr.mxu0 0.0
  %930 = vmatpush1.msra.mxu0 0.0
  %931 = vmatprep.subr.mxu0 0.0
  %932 = vmatpush1.msra.mxu0 0.0
  %933 = vmatprep.subr.mxu0 0.0
  %934 = vmatpush1.msra.mxu0 0.0
  %935 = vmatprep.subr.mxu0 0.0
  %936 = vmatpush1.msra.mxu0 0.0
  %937 = vmatprep.subr.mxu0 0.0
  %938 = vmatpush1.msra.mxu0 0.0
  %939 = vmatprep.subr.mxu0 0.0
  %940 = vmatpush1.msra.mxu0 0.0
  %941 = vmatprep.subr.mxu0 0.0
  %942 = vmatpush1.msra.mxu0 0.0
  %943 = vmatprep.subr.mxu0 0.0
  %944 = vmatpush1.msra.mxu0 0.0
  %945 = vmatprep.subr.mxu0 0.0
  %946 = vmatpush1.msra.mxu0 0.0
  %947 = vmatprep.subr.mxu0 0.0
  %948 = vmatpush1.msra.mxu0 0.0
  %949 = vmatprep.subr.mxu0 0.0
  %950 = vmatpush1.msra.mxu0 0.0
  %951 = vmatprep.subr.mxu0 0.0
  %952 = vmatpush1.msra.mxu0 0.0
  %953 = vmatprep.subr.mxu0 0.0
  %954 = vmatpush1.msra.mxu0 0.0
  %955 = vmatprep.subr.mxu0 0.0
  %956 = vmatpush1.msra.mxu0 0.0
  %957 = vmatprep.subr.mxu0 0.0
  %958 = vmatpush1.msra.mxu0 0.0
  %959 = vmatprep.subr.mxu0 0.0
  %960 = vmatpush1.msra.mxu0 0.0
  %961 = vmatprep.subr.mxu0 0.0
  %962 = vmatpush1.msra.mxu0 0.0
  %963 = vmatprep.subr.mxu0 0.0
  %964 = vmatpush1.msra.mxu0 0.0
  %965 = vmatprep.subr.mxu0 0.0
  %966 = vmatpush1.msra.mxu0 0.0
  %967 = vmatprep.subr.mxu0 0.0
  %968 = vmatpush1.msra.mxu0 0.0
  %969 = vmatprep.mubr.f32.mxu0 0.0
  %970 = vmatmul.mubr.f32.gmra.mrb[0].mxu0 %v903
  %v971 = vpop.f32.mrb[0].mxu0
  %v972 = vadd.f32 0.0, %v971
  %v973 = vpop.f32.mrb[0].mxu0
  %974 = vdwg.mxu0
  %v976 = vrot.slane %v972, 4
  %v978 = vadd.f32 %v141, %v976
  %v979 = vxor.u32 %v978, 2147483648
  %v980 = vmul.f32 %v979, 1.442695
  %v981 = vpow.pop %v980
  %v982 = vadd.f32 %v981, 1.0
  %v983 = vrcp.pop %v982
  %v984 = vmul.f32 1.0, %v983
  %v985 = vtanh.pop %v978
  %v987 = vrot.slane %v888, 6
  %v989 = vmul.f32 %v984, %v987
  %991 = vrot.lane.b32.xlu0 %v985, 96
  %v992 = vpop.permute.xlu0 %991
  %v994 = vmul.f32 %v984, %v992
  %996 = vrot.lane.b32.xlu0 %v994, 16
  %v997 = vpop.permute.xlu0 %996
  %v999 = vadd.f32 %v989, %v997
  %v1000 = vtanh.pop %v999
  %1002 = vrot.lane.b32.xlu0 %v1000, 32
  %v1003 = vpop.permute.xlu0 %1002
  %v1005 = vmul.f32 %v984, %v1003
  %1007 = vrot.lane.b32.xlu0 %v1005, 80
  %v1008 = vpop.permute.xlu0 %1007
  %1010 = vst.msk [vmem:[%s13 + $0x8] sm:$0x30] %vm570, %v1008
  %v1011 = vrot.slane %v1005, 4
  %1012 = vrot.lane.b32.xlu0 %v1011, 80
  %v1013 = vpop.permute.xlu0 %1012
  %v1014 = vsel %vm246, %v1013, 0
  %1016 = vmatprep.subr.mxu0 0.0
  %1017 = vmatpush1.msra.mxu0 %v242
  %1018 = vmatprep.subr.mxu0 0.0
  %1019 = vmatpush1.msra.mxu0 %v243
  %1020 = vmatprep.subr.mxu0 0.0
  %1021 = vmatpush1.msra.mxu0 0.0
  %1022 = vmatprep.subr.mxu0 0.0
  %1023 = vmatpush1.msra.mxu0 0.0
  %1024 = vmatprep.subr.mxu0 0.0
  %1025 = vmatpush1.msra.mxu0 0.0
  %1026 = vmatprep.subr.mxu0 0.0
  %1027 = vmatpush1.msra.mxu0 0.0
  %1028 = vmatprep.subr.mxu0 0.0
  %1029 = vmatpush1.msra.mxu0 0.0
  %1030 = vmatprep.subr.mxu0 0.0
  %1031 = vmatpush1.msra.mxu0 0.0
  %1032 = vmatprep.subr.mxu0 0.0
  %1033 = vmatpush1.msra.mxu0 0.0
  %1034 = vmatprep.subr.mxu0 0.0
  %1035 = vmatpush1.msra.mxu0 0.0
  %1036 = vmatprep.subr.mxu0 0.0
  %1037 = vmatpush1.msra.mxu0 0.0
  %1038 = vmatprep.subr.mxu0 0.0
  %1039 = vmatpush1.msra.mxu0 0.0
  %1040 = vmatprep.subr.mxu0 0.0
  %1041 = vmatpush1.msra.mxu0 0.0
  %1042 = vmatprep.subr.mxu0 0.0
  %1043 = vmatpush1.msra.mxu0 0.0
  %1044 = vmatprep.subr.mxu0 0.0
  %1045 = vmatpush1.msra.mxu0 0.0
  %1046 = vmatprep.subr.mxu0 0.0
  %1047 = vmatpush1.msra.mxu0 0.0
  %1048 = vmatprep.subr.mxu0 0.0
  %1049 = vmatpush1.msra.mxu0 0.0
  %1050 = vmatprep.subr.mxu0 0.0
  %1051 = vmatpush1.msra.mxu0 0.0
  %1052 = vmatprep.subr.mxu0 0.0
  %1053 = vmatpush1.msra.mxu0 0.0
  %1054 = vmatprep.subr.mxu0 0.0
  %1055 = vmatpush1.msra.mxu0 0.0
  %1056 = vmatprep.subr.mxu0 0.0
  %1057 = vmatpush1.msra.mxu0 0.0
  %1058 = vmatprep.subr.mxu0 0.0
  %1059 = vmatpush1.msra.mxu0 0.0
  %1060 = vmatprep.subr.mxu0 0.0
  %1061 = vmatpush1.msra.mxu0 0.0
  %1062 = vmatprep.subr.mxu0 0.0
  %1063 = vmatpush1.msra.mxu0 0.0
  %1064 = vmatprep.subr.mxu0 0.0
  %1065 = vmatpush1.msra.mxu0 0.0
  %1066 = vmatprep.subr.mxu0 0.0
  %1067 = vmatpush1.msra.mxu0 0.0
  %1068 = vmatprep.subr.mxu0 0.0
  %1069 = vmatpush1.msra.mxu0 0.0
  %1070 = vmatprep.subr.mxu0 0.0
  %1071 = vmatpush1.msra.mxu0 0.0
  %1072 = vmatprep.subr.mxu0 0.0
  %1073 = vmatpush1.msra.mxu0 0.0
  %1074 = vmatprep.subr.mxu0 0.0
  %1075 = vmatpush1.msra.mxu0 0.0
  %1076 = vmatprep.subr.mxu0 0.0
  %1077 = vmatpush1.msra.mxu0 0.0
  %1078 = vmatprep.subr.mxu0 0.0
  %1079 = vmatpush1.msra.mxu0 0.0
  %1080 = vmatprep.mubr.f32.mxu0 0.0
  %1081 = vmatmul.mubr.f32.gmra.mrb[0].mxu0 %v1014
  %v1082 = vpop.f32.mrb[0].mxu0
  %v1083 = vadd.f32 0.0, %v1082
  %v1084 = vpop.f32.mrb[0].mxu0
  %1085 = vdwg.mxu0
  %v1087 = vrot.slane %v1083, 2
  %v1089 = vadd.f32 %v141, %v1087
  %v1090 = vxor.u32 %v1089, 2147483648
  %v1091 = vmul.f32 %v1090, 1.442695
  %v1092 = vpow.pop %v1091
  %v1093 = vadd.f32 %v1092, 1.0
  %v1094 = vrcp.pop %v1093
  %v1095 = vmul.f32 1.0, %v1094
  %v1096 = vtanh.pop %v1089
  %v1098 = vrot.slane %v999, 6
  %v1100 = vmul.f32 %v1095, %v1098
  %1102 = vrot.lane.b32.xlu0 %v1096, 96
  %v1103 = vpop.permute.xlu0 %1102
  %v1105 = vmul.f32 %v1095, %v1103
  %1107 = vrot.lane.b32.xlu0 %v1105, 16
  %v1108 = vpop.permute.xlu0 %1107
  %v1110 = vadd.f32 %v1100, %v1108
  %v1111 = vtanh.pop %v1110
  %1113 = vrot.lane.b32.xlu0 %v1111, 32
  %v1114 = vpop.permute.xlu0 %1113
  %v1116 = vmul.f32 %v1095, %v1114
  %1118 = vrot.lane.b32.xlu0 %v1116, 80
  %v1119 = vpop.permute.xlu0 %1118
  %1121 = vst.msk [vmem:[%s13 + $0x8] sm:$0xc0] %vm682, %v1119
  %1122 = vmatprep.subr.mxu0 0.0
  %1123 = vmatpush1.msra.mxu0 %v244
  %1124 = vmatprep.subr.mxu0 0.0
  %1125 = vmatpush1.msra.mxu0 %v245
  %1126 = vmatprep.subr.mxu0 0.0
  %1127 = vmatpush1.msra.mxu0 0.0
  %1128 = vmatprep.subr.mxu0 0.0
  %1129 = vmatpush1.msra.mxu0 0.0
  %1130 = vmatprep.subr.mxu0 0.0
  %1131 = vmatpush1.msra.mxu0 0.0
  %1132 = vmatprep.subr.mxu0 0.0
  %1133 = vmatpush1.msra.mxu0 0.0
  %1134 = vmatprep.subr.mxu0 0.0
  %1135 = vmatpush1.msra.mxu0 0.0
  %1136 = vmatprep.subr.mxu0 0.0
  %1137 = vmatpush1.msra.mxu0 0.0
  %1138 = vmatprep.subr.mxu0 0.0
  %1139 = vmatpush1.msra.mxu0 0.0
  %1140 = vmatprep.subr.mxu0 0.0
  %1141 = vmatpush1.msra.mxu0 0.0
  %1142 = vmatprep.subr.mxu0 0.0
  %1143 = vmatpush1.msra.mxu0 0.0
  %1144 = vmatprep.subr.mxu0 0.0
  %1145 = vmatpush1.msra.mxu0 0.0
  %1146 = vmatprep.subr.mxu0 0.0
  %1147 = vmatpush1.msra.mxu0 0.0
  %1148 = vmatprep.subr.mxu0 0.0
  %1149 = vmatpush1.msra.mxu0 0.0
  %1150 = vmatprep.subr.mxu0 0.0
  %1151 = vmatpush1.msra.mxu0 0.0
  %1152 = vmatprep.subr.mxu0 0.0
  %1153 = vmatpush1.msra.mxu0 0.0
  %1154 = vmatprep.subr.mxu0 0.0
  %1155 = vmatpush1.msra.mxu0 0.0
  %1156 = vmatprep.subr.mxu0 0.0
  %1157 = vmatpush1.msra.mxu0 0.0
  %1158 = vmatprep.subr.mxu0 0.0
  %1159 = vmatpush1.msra.mxu0 0.0
  %1160 = vmatprep.subr.mxu0 0.0
  %1161 = vmatpush1.msra.mxu0 0.0
  %1162 = vmatprep.subr.mxu0 0.0
  %1163 = vmatpush1.msra.mxu0 0.0
  %1164 = vmatprep.subr.mxu0 0.0
  %1165 = vmatpush1.msra.mxu0 0.0
  %1166 = vmatprep.subr.mxu0 0.0
  %1167 = vmatpush1.msra.mxu0 0.0
  %1168 = vmatprep.subr.mxu0 0.0
  %1169 = vmatpush1.msra.mxu0 0.0
  %1170 = vmatprep.subr.mxu0 0.0
  %1171 = vmatpush1.msra.mxu0 0.0
  %1172 = vmatprep.subr.mxu0 0.0
  %1173 = vmatpush1.msra.mxu0 0.0
  %1174 = vmatprep.subr.mxu0 0.0
  %1175 = vmatpush1.msra.mxu0 0.0
  %1176 = vmatprep.subr.mxu0 0.0
  %1177 = vmatpush1.msra.mxu0 0.0
  %1178 = vmatprep.subr.mxu0 0.0
  %1179 = vmatpush1.msra.mxu0 0.0
  %1180 = vmatprep.subr.mxu0 0.0
  %1181 = vmatpush1.msra.mxu0 0.0
  %1182 = vmatprep.subr.mxu0 0.0
  %1183 = vmatpush1.msra.mxu0 0.0
  %1184 = vmatprep.subr.mxu0 0.0
  %1185 = vmatpush1.msra.mxu0 0.0
  %1186 = vmatprep.mubr.f32.mxu0 0.0
  %1187 = vmatmul.mubr.f32.gmra.mrb[0].mxu0 %v248
  %v1188 = vpop.f32.mrb[0].mxu0
  %v1189 = vadd.f32 0.0, %v1188
  %v1190 = vpop.f32.mrb[0].mxu0
  %1191 = vdwg.mxu0
  %v1193 = vrot.slane %v1189, 2
  %v1195 = vadd.f32 %v239, %v1193
  %v1196 = vxor.u32 %v1195, 2147483648
  %v1197 = vmul.f32 %v1196, 1.442695
  %v1198 = vpow.pop %v1197
  %v1199 = vadd.f32 %v1198, 1.0
  %v1200 = vrcp.pop %v1199
  %v1201 = vmul.f32 1.0, %v1200
  %v1202 = vtanh.pop %v1195
  %v1203 = vmul.f32 %v1201, 0.0
  %1205 = vrot.lane.b32.xlu0 %v1202, 96
  %v1206 = vpop.permute.xlu0 %1205
  %v1208 = vmul.f32 %v1201, %v1206
  %1210 = vrot.lane.b32.xlu0 %v1208, 16
  %v1211 = vpop.permute.xlu0 %1210
  %v1213 = vadd.f32 %v1203, %v1211
  %v1214 = vtanh.pop %v1213
  %1216 = vrot.lane.b32.xlu0 %v1214, 32
  %v1217 = vpop.permute.xlu0 %1216
  %v1219 = vmul.f32 %v1201, %v1217
  %1221 = vrot.lane.b32.xlu0 %v1219, 96
  %v1222 = vpop.permute.xlu0 %1221
  %vm1224 = vcmask 261254
  %1225 = vst.msk [vmem:[%s13 + $0x8] sm:$0xc0] %vm1224, %v1222
  %v1226 = vrot.slane %v1219, 6
  %1227 = vrot.lane.b32.xlu0 %v1226, 80
  %v1228 = vpop.permute.xlu0 %1227
  %v1229 = vsel %vm246, %v1228, 0
  %1231 = vmatprep.subr.mxu0 0.0
  %1232 = vmatpush1.msra.mxu0 %v244
  %1233 = vmatprep.subr.mxu0 0.0
  %1234 = vmatpush1.msra.mxu0 %v245
  %1235 = vmatprep.subr.mxu0 0.0
  %1236 = vmatpush1.msra.mxu0 0.0
  %1237 = vmatprep.subr.mxu0 0.0
  %1238 = vmatpush1.msra.mxu0 0.0
  %1239 = vmatprep.subr.mxu0 0.0
  %1240 = vmatpush1.msra.mxu0 0.0
  %1241 = vmatprep.subr.mxu0 0.0
  %1242 = vmatpush1.msra.mxu0 0.0
  %1243 = vmatprep.subr.mxu0 0.0
  %1244 = vmatpush1.msra.mxu0 0.0
  %1245 = vmatprep.subr.mxu0 0.0
  %1246 = vmatpush1.msra.mxu0 0.0
  %1247 = vmatprep.subr.mxu0 0.0
  %1248 = vmatpush1.msra.mxu0 0.0
  %1249 = vmatprep.subr.mxu0 0.0
  %1250 = vmatpush1.msra.mxu0 0.0
  %1251 = vmatprep.subr.mxu0 0.0
  %1252 = vmatpush1.msra.mxu0 0.0
  %1253 = vmatprep.subr.mxu0 0.0
  %1254 = vmatpush1.msra.mxu0 0.0
  %1255 = vmatprep.subr.mxu0 0.0
  %1256 = vmatpush1.msra.mxu0 0.0
  %1257 = vmatprep.subr.mxu0 0.0
  %1258 = vmatpush1.msra.mxu0 0.0
  %1259 = vmatprep.subr.mxu0 0.0
  %1260 = vmatpush1.msra.mxu0 0.0
  %1261 = vmatprep.subr.mxu0 0.0
  %1262 = vmatpush1.msra.mxu0 0.0
  %1263 = vmatprep.subr.mxu0 0.0
  %1264 = vmatpush1.msra.mxu0 0.0
  %1265 = vmatprep.subr.mxu0 0.0
  %1266 = vmatpush1.msra.mxu0 0.0
  %1267 = vmatprep.subr.mxu0 0.0
  %1268 = vmatpush1.msra.mxu0 0.0
  %1269 = vmatprep.subr.mxu0 0.0
  %1270 = vmatpush1.msra.mxu0 0.0
  %1271 = vmatprep.subr.mxu0 0.0
  %1272 = vmatpush1.msra.mxu0 0.0
  %1273 = vmatprep.subr.mxu0 0.0
  %1274 = vmatpush1.msra.mxu0 0.0
  %1275 = vmatprep.subr.mxu0 0.0
  %1276 = vmatpush1.msra.mxu0 0.0
  %1277 = vmatprep.subr.mxu0 0.0
  %1278 = vmatpush1.msra.mxu0 0.0
  %1279 = vmatprep.subr.mxu0 0.0
  %1280 = vmatpush1.msra.mxu0 0.0
  %1281 = vmatprep.subr.mxu0 0.0
  %1282 = vmatpush1.msra.mxu0 0.0
  %1283 = vmatprep.subr.mxu0 0.0
  %1284 = vmatpush1.msra.mxu0 0.0
  %1285 = vmatprep.subr.mxu0 0.0
  %1286 = vmatpush1.msra.mxu0 0.0
  %1287 = vmatprep.subr.mxu0 0.0
  %1288 = vmatpush1.msra.mxu0 0.0
  %1289 = vmatprep.subr.mxu0 0.0
  %1290 = vmatpush1.msra.mxu0 0.0
  %1291 = vmatprep.subr.mxu0 0.0
  %1292 = vmatpush1.msra.mxu0 0.0
  %1293 = vmatprep.subr.mxu0 0.0
  %1294 = vmatpush1.msra.mxu0 0.0
  %1295 = vmatprep.mubr.f32.mxu0 0.0
  %1296 = vmatmul.mubr.f32.gmra.mrb[0].mxu0 %v1229
  %v1297 = vpop.f32.mrb[0].mxu0
  %v1298 = vadd.f32 0.0, %v1297
  %v1299 = vpop.f32.mrb[0].mxu0
  %1300 = vdwg.mxu0
  %v1302 = vrot.slane %v1298, 4
  %v1304 = vadd.f32 %v239, %v1302
  %v1305 = vxor.u32 %v1304, 2147483648
  %v1306 = vmul.f32 %v1305, 1.442695
  %v1307 = vpow.pop %v1306
  %v1308 = vadd.f32 %v1307, 1.0
  %v1309 = vrcp.pop %v1308
  %v1310 = vmul.f32 1.0, %v1309
  %v1311 = vtanh.pop %v1304
  %v1313 = vrot.slane %v1213, 2
  %v1315 = vmul.f32 %v1310, %v1313
  %1317 = vrot.lane.b32.xlu0 %v1311, 96
  %v1318 = vpop.permute.xlu0 %1317
  %v1320 = vmul.f32 %v1310, %v1318
  %1322 = vrot.lane.b32.xlu0 %v1320, 16
  %v1323 = vpop.permute.xlu0 %1322
  %v1325 = vadd.f32 %v1315, %v1323
  %v1326 = vtanh.pop %v1325
  %1328 = vrot.lane.b32.xlu0 %v1326, 32
  %v1329 = vpop.permute.xlu0 %1328
  %v1331 = vmul.f32 %v1310, %v1329
  %1333 = vrot.lane.b32.xlu0 %v1331, 96
  %v1334 = vpop.permute.xlu0 %1333
  %vm1336 = vcmask 259204
  %1337 = vst.msk [vmem:[%s13 + $0x8] sm:$0x30] %vm1336, %v1334
  %v1338 = vrot.slane %v1331, 4
  %1339 = vrot.lane.b32.xlu0 %v1338, 80
  %v1340 = vpop.permute.xlu0 %1339
  %v1341 = vsel %vm246, %v1340, 0
  %1343 = vmatprep.subr.mxu0 0.0
  %1344 = vmatpush1.msra.mxu0 %v244
  %1345 = vmatprep.subr.mxu0 0.0
  %1346 = vmatpush1.msra.mxu0 %v245
  %1347 = vmatprep.subr.mxu0 0.0
  %1348 = vmatpush1.msra.mxu0 0.0
  %1349 = vmatprep.subr.mxu0 0.0
  %1350 = vmatpush1.msra.mxu0 0.0
  %1351 = vmatprep.subr.mxu0 0.0
  %1352 = vmatpush1.msra.mxu0 0.0
  %1353 = vmatprep.subr.mxu0 0.0
  %1354 = vmatpush1.msra.mxu0 0.0
  %1355 = vmatprep.subr.mxu0 0.0
  %1356 = vmatpush1.msra.mxu0 0.0
  %1357 = vmatprep.subr.mxu0 0.0
  %1358 = vmatpush1.msra.mxu0 0.0
  %1359 = vmatprep.subr.mxu0 0.0
  %1360 = vmatpush1.msra.mxu0 0.0
  %1361 = vmatprep.subr.mxu0 0.0
  %1362 = vmatpush1.msra.mxu0 0.0
  %1363 = vmatprep.subr.mxu0 0.0
  %1364 = vmatpush1.msra.mxu0 0.0
  %1365 = vmatprep.subr.mxu0 0.0
  %1366 = vmatpush1.msra.mxu0 0.0
  %1367 = vmatprep.subr.mxu0 0.0
  %1368 = vmatpush1.msra.mxu0 0.0
  %1369 = vmatprep.subr.mxu0 0.0
  %1370 = vmatpush1.msra.mxu0 0.0
  %1371 = vmatprep.subr.mxu0 0.0
  %1372 = vmatpush1.msra.mxu0 0.0
  %1373 = vmatprep.subr.mxu0 0.0
  %1374 = vmatpush1.msra.mxu0 0.0
  %1375 = vmatprep.subr.mxu0 0.0
  %1376 = vmatpush1.msra.mxu0 0.0
  %1377 = vmatprep.subr.mxu0 0.0
  %1378 = vmatpush1.msra.mxu0 0.0
  %1379 = vmatprep.subr.mxu0 0.0
  %1380 = vmatpush1.msra.mxu0 0.0
  %1381 = vmatprep.subr.mxu0 0.0
  %1382 = vmatpush1.msra.mxu0 0.0
  %1383 = vmatprep.subr.mxu0 0.0
  %1384 = vmatpush1.msra.mxu0 0.0
  %1385 = vmatprep.subr.mxu0 0.0
  %1386 = vmatpush1.msra.mxu0 0.0
  %1387 = vmatprep.subr.mxu0 0.0
  %1388 = vmatpush1.msra.mxu0 0.0
  %1389 = vmatprep.subr.mxu0 0.0
  %1390 = vmatpush1.msra.mxu0 0.0
  %1391 = vmatprep.subr.mxu0 0.0
  %1392 = vmatpush1.msra.mxu0 0.0
  %1393 = vmatprep.subr.mxu0 0.0
  %1394 = vmatpush1.msra.mxu0 0.0
  %1395 = vmatprep.subr.mxu0 0.0
  %1396 = vmatpush1.msra.mxu0 0.0
  %1397 = vmatprep.subr.mxu0 0.0
  %1398 = vmatpush1.msra.mxu0 0.0
  %1399 = vmatprep.subr.mxu0 0.0
  %1400 = vmatpush1.msra.mxu0 0.0
  %1401 = vmatprep.subr.mxu0 0.0
  %1402 = vmatpush1.msra.mxu0 0.0
  %1403 = vmatprep.subr.mxu0 0.0
  %1404 = vmatpush1.msra.mxu0 0.0
  %1405 = vmatprep.subr.mxu0 0.0
  %1406 = vmatpush1.msra.mxu0 0.0
  %1407 = vmatprep.mubr.f32.mxu0 0.0
  %1408 = vmatmul.mubr.f32.gmra.mrb[0].mxu0 %v1341
  %v1409 = vpop.f32.mrb[0].mxu0
  %v1410 = vadd.f32 0.0, %v1409
  %v1411 = vpop.f32.mrb[0].mxu0
  %1412 = vdwg.mxu0
  %v1414 = vrot.slane %v1410, 6
  %v1416 = vadd.f32 %v239, %v1414
  %v1417 = vxor.u32 %v1416, 2147483648
  %v1418 = vmul.f32 %v1417, 1.442695
  %v1419 = vpow.pop %v1418
  %v1420 = vadd.f32 %v1419, 1.0
  %v1421 = vrcp.pop %v1420
  %v1422 = vmul.f32 1.0, %v1421
  %v1423 = vtanh.pop %v1416
  %v1425 = vrot.slane %v1325, 2
  %v1427 = vmul.f32 %v1422, %v1425
  %1429 = vrot.lane.b32.xlu0 %v1423, 96
  %v1430 = vpop.permute.xlu0 %1429
  %v1432 = vmul.f32 %v1422, %v1430
  %1434 = vrot.lane.b32.xlu0 %v1432, 16
  %v1435 = vpop.permute.xlu0 %1434
  %v1437 = vadd.f32 %v1427, %v1435
  %v1438 = vtanh.pop %v1437
  %1440 = vrot.lane.b32.xlu0 %v1438, 32
  %v1441 = vpop.permute.xlu0 %1440
  %v1443 = vmul.f32 %v1422, %v1441
  %1445 = vrot.lane.b32.xlu0 %v1443, 96
  %v1446 = vpop.permute.xlu0 %1445
  %vm1448 = vcmask 257154
  %1449 = vst.msk [vmem:[%s13 + $0x8] sm:$0xc] %vm1448, %v1446
  %v1450 = vrot.slane %v1443, 2
  %1451 = vrot.lane.b32.xlu0 %v1450, 80
  %v1452 = vpop.permute.xlu0 %1451
  %v1453 = vsel %vm246, %v1452, 0
  %1455 = vmatprep.subr.mxu0 0.0
  %1456 = vmatpush1.msra.mxu0 %v244
  %1457 = vmatprep.subr.mxu0 0.0
  %1458 = vmatpush1.msra.mxu0 %v245
  %1459 = vmatprep.subr.mxu0 0.0
  %1460 = vmatpush1.msra.mxu0 0.0
  %1461 = vmatprep.subr.mxu0 0.0
  %1462 = vmatpush1.msra.mxu0 0.0
  %1463 = vmatprep.subr.mxu0 0.0
  %1464 = vmatpush1.msra.mxu0 0.0
  %1465 = vmatprep.subr.mxu0 0.0
  %1466 = vmatpush1.msra.mxu0 0.0
  %1467 = vmatprep.subr.mxu0 0.0
  %1468 = vmatpush1.msra.mxu0 0.0
  %1469 = vmatprep.subr.mxu0 0.0
  %1470 = vmatpush1.msra.mxu0 0.0
  %1471 = vmatprep.subr.mxu0 0.0
  %1472 = vmatpush1.msra.mxu0 0.0
  %1473 = vmatprep.subr.mxu0 0.0
  %1474 = vmatpush1.msra.mxu0 0.0
  %1475 = vmatprep.subr.mxu0 0.0
  %1476 = vmatpush1.msra.mxu0 0.0
  %1477 = vmatprep.subr.mxu0 0.0
  %1478 = vmatpush1.msra.mxu0 0.0
  %1479 = vmatprep.subr.mxu0 0.0
  %1480 = vmatpush1.msra.mxu0 0.0
  %1481 = vmatprep.subr.mxu0 0.0
  %1482 = vmatpush1.msra.mxu0 0.0
  %1483 = vmatprep.subr.mxu0 0.0
  %1484 = vmatpush1.msra.mxu0 0.0
  %1485 = vmatprep.subr.mxu0 0.0
  %1486 = vmatpush1.msra.mxu0 0.0
  %1487 = vmatprep.subr.mxu0 0.0
  %1488 = vmatpush1.msra.mxu0 0.0
  %1489 = vmatprep.subr.mxu0 0.0
  %1490 = vmatpush1.msra.mxu0 0.0
  %1491 = vmatprep.subr.mxu0 0.0
  %1492 = vmatpush1.msra.mxu0 0.0
  %1493 = vmatprep.subr.mxu0 0.0
  %1494 = vmatpush1.msra.mxu0 0.0
  %1495 = vmatprep.subr.mxu0 0.0
  %1496 = vmatpush1.msra.mxu0 0.0
  %1497 = vmatprep.subr.mxu0 0.0
  %1498 = vmatpush1.msra.mxu0 0.0
  %1499 = vmatprep.subr.mxu0 0.0
  %1500 = vmatpush1.msra.mxu0 0.0
  %1501 = vmatprep.subr.mxu0 0.0
  %1502 = vmatpush1.msra.mxu0 0.0
  %1503 = vmatprep.subr.mxu0 0.0
  %1504 = vmatpush1.msra.mxu0 0.0
  %1505 = vmatprep.subr.mxu0 0.0
  %1506 = vmatpush1.msra.mxu0 0.0
  %1507 = vmatprep.subr.mxu0 0.0
  %1508 = vmatpush1.msra.mxu0 0.0
  %1509 = vmatprep.subr.mxu0 0.0
  %1510 = vmatpush1.msra.mxu0 0.0
  %1511 = vmatprep.subr.mxu0 0.0
  %1512 = vmatpush1.msra.mxu0 0.0
  %1513 = vmatprep.subr.mxu0 0.0
  %1514 = vmatpush1.msra.mxu0 0.0
  %1515 = vmatprep.subr.mxu0 0.0
  %1516 = vmatpush1.msra.mxu0 0.0
  %1517 = vmatprep.subr.mxu0 0.0
  %1518 = vmatpush1.msra.mxu0 0.0
  %1519 = vmatprep.mubr.f32.mxu0 0.0
  %1520 = vmatmul.mubr.f32.gmra.mrb[0].mxu0 %v1453
  %v1521 = vpop.f32.mrb[0].mxu0
  %v1522 = vadd.f32 0.0, %v1521
  %v1523 = vpop.f32.mrb[0].mxu0
  %1524 = vdwg.mxu0
  %v1525 = vadd.f32 %v239, %v1522
  %v1526 = vxor.u32 %v1525, 2147483648
  %v1527 = vmul.f32 %v1526, 1.442695
  %v1528 = vpow.pop %v1527
  %v1529 = vadd.f32 %v1528, 1.0
  %v1530 = vrcp.pop %v1529
  %v1531 = vmul.f32 1.0, %v1530
  %v1532 = vtanh.pop %v1525
  %v1534 = vrot.slane %v1437, 2
  %v1536 = vmul.f32 %v1531, %v1534
  %1538 = vrot.lane.b32.xlu0 %v1532, 96
  %v1539 = vpop.permute.xlu0 %1538
  %v1541 = vmul.f32 %v1531, %v1539
  %1543 = vrot.lane.b32.xlu0 %v1541, 16
  %v1544 = vpop.permute.xlu0 %1543
  %v1546 = vadd.f32 %v1536, %v1544
  %v1547 = vtanh.pop %v1546
  %1549 = vrot.lane.b32.xlu0 %v1547, 32
  %v1550 = vpop.permute.xlu0 %1549
  %v1552 = vmul.f32 %v1531, %v1550
  %1554 = vrot.lane.b32.xlu0 %v1552, 96
  %v1555 = vpop.permute.xlu0 %1554
  %vm1557 = vcmask 255104
  %1558 = vst.msk [vmem:[%s13 + $0x8] sm:$0x3] %vm1557, %v1555
  %1559 = vrot.lane.b32.xlu0 %v1552, 80
  %v1560 = vpop.permute.xlu0 %1559
  %v1561 = vsel %vm246, %v1560, 0
  %1563 = vmatprep.subr.mxu0 0.0
  %1564 = vmatpush1.msra.mxu0 %v244
  %1565 = vmatprep.subr.mxu0 0.0
  %1566 = vmatpush1.msra.mxu0 %v245
  %1567 = vmatprep.subr.mxu0 0.0
  %1568 = vmatpush1.msra.mxu0 0.0
  %1569 = vmatprep.subr.mxu0 0.0
  %1570 = vmatpush1.msra.mxu0 0.0
  %1571 = vmatprep.subr.mxu0 0.0
  %1572 = vmatpush1.msra.mxu0 0.0
  %1573 = vmatprep.subr.mxu0 0.0
  %1574 = vmatpush1.msra.mxu0 0.0
  %1575 = vmatprep.subr.mxu0 0.0
  %1576 = vmatpush1.msra.mxu0 0.0
  %1577 = vmatprep.subr.mxu0 0.0
  %1578 = vmatpush1.msra.mxu0 0.0
  %1579 = vmatprep.subr.mxu0 0.0
  %1580 = vmatpush1.msra.mxu0 0.0
  %1581 = vmatprep.subr.mxu0 0.0
  %1582 = vmatpush1.msra.mxu0 0.0
  %1583 = vmatprep.subr.mxu0 0.0
  %1584 = vmatpush1.msra.mxu0 0.0
  %1585 = vmatprep.subr.mxu0 0.0
  %1586 = vmatpush1.msra.mxu0 0.0
  %1587 = vmatprep.subr.mxu0 0.0
  %1588 = vmatpush1.msra.mxu0 0.0
  %1589 = vmatprep.subr.mxu0 0.0
  %1590 = vmatpush1.msra.mxu0 0.0
  %1591 = vmatprep.subr.mxu0 0.0
  %1592 = vmatpush1.msra.mxu0 0.0
  %1593 = vmatprep.subr.mxu0 0.0
  %1594 = vmatpush1.msra.mxu0 0.0
  %1595 = vmatprep.subr.mxu0 0.0
  %1596 = vmatpush1.msra.mxu0 0.0
  %1597 = vmatprep.subr.mxu0 0.0
  %1598 = vmatpush1.msra.mxu0 0.0
  %1599 = vmatprep.subr.mxu0 0.0
  %1600 = vmatpush1.msra.mxu0 0.0
  %1601 = vmatprep.subr.mxu0 0.0
  %1602 = vmatpush1.msra.mxu0 0.0
  %1603 = vmatprep.subr.mxu0 0.0
  %1604 = vmatpush1.msra.mxu0 0.0
  %1605 = vmatprep.subr.mxu0 0.0
  %1606 = vmatpush1.msra.mxu0 0.0
  %1607 = vmatprep.subr.mxu0 0.0
  %1608 = vmatpush1.msra.mxu0 0.0
  %1609 = vmatprep.subr.mxu0 0.0
  %1610 = vmatpush1.msra.mxu0 0.0
  %1611 = vmatprep.subr.mxu0 0.0
  %1612 = vmatpush1.msra.mxu0 0.0
  %1613 = vmatprep.subr.mxu0 0.0
  %1614 = vmatpush1.msra.mxu0 0.0
  %1615 = vmatprep.subr.mxu0 0.0
  %1616 = vmatpush1.msra.mxu0 0.0
  %1617 = vmatprep.subr.mxu0 0.0
  %1618 = vmatpush1.msra.mxu0 0.0
  %1619 = vmatprep.subr.mxu0 0.0
  %1620 = vmatpush1.msra.mxu0 0.0
  %1621 = vmatprep.subr.mxu0 0.0
  %1622 = vmatpush1.msra.mxu0 0.0
  %1623 = vmatprep.subr.mxu0 0.0
  %1624 = vmatpush1.msra.mxu0 0.0
  %1625 = vmatprep.subr.mxu0 0.0
  %1626 = vmatpush1.msra.mxu0 0.0
  %1627 = vmatprep.mubr.f32.mxu0 0.0
  %1628 = vmatmul.mubr.f32.gmra.mrb[0].mxu0 %v1561
  %v1629 = vpop.f32.mrb[0].mxu0
  %v1630 = vadd.f32 0.0, %v1629
  %v1631 = vpop.f32.mrb[0].mxu0
  %1632 = vdwg.mxu0
  %v1634 = vrot.slane %v1630, 2
  %v1636 = vadd.f32 %v234, %v1634
  %v1637 = vxor.u32 %v1636, 2147483648
  %v1638 = vmul.f32 %v1637, 1.442695
  %v1639 = vpow.pop %v1638
  %v1640 = vadd.f32 %v1639, 1.0
  %v1641 = vrcp.pop %v1640
  %v1642 = vmul.f32 1.0, %v1641
  %v1643 = vtanh.pop %v1636
  %v1645 = vrot.slane %v1546, 2
  %v1647 = vmul.f32 %v1642, %v1645
  %1649 = vrot.lane.b32.xlu0 %v1643, 96
  %v1650 = vpop.permute.xlu0 %1649
  %v1652 = vmul.f32 %v1642, %v1650
  %1654 = vrot.lane.b32.xlu0 %v1652, 16
  %v1655 = vpop.permute.xlu0 %1654
  %v1657 = vadd.f32 %v1647, %v1655
  %v1658 = vtanh.pop %v1657
  %1660 = vrot.lane.b32.xlu0 %v1658, 32
  %v1661 = vpop.permute.xlu0 %1660
  %v1663 = vmul.f32 %v1642, %v1661
  %1665 = vrot.lane.b32.xlu0 %v1663, 96
  %v1666 = vpop.permute.xlu0 %1665
  %1668 = vst.msk [vmem:[%s13] sm:$0xc0] %vm1224, %v1666
  %v1669 = vrot.slane %v1663, 6
  %1670 = vrot.lane.b32.xlu0 %v1669, 80
  %v1671 = vpop.permute.xlu0 %1670
  %v1672 = vsel %vm246, %v1671, 0
  %1674 = vmatprep.subr.mxu0 0.0
  %1675 = vmatpush1.msra.mxu0 %v244
  %1676 = vmatprep.subr.mxu0 0.0
  %1677 = vmatpush1.msra.mxu0 %v245
  %1678 = vmatprep.subr.mxu0 0.0
  %1679 = vmatpush1.msra.mxu0 0.0
  %1680 = vmatprep.subr.mxu0 0.0
  %1681 = vmatpush1.msra.mxu0 0.0
  %1682 = vmatprep.subr.mxu0 0.0
  %1683 = vmatpush1.msra.mxu0 0.0
  %1684 = vmatprep.subr.mxu0 0.0
  %1685 = vmatpush1.msra.mxu0 0.0
  %1686 = vmatprep.subr.mxu0 0.0
  %1687 = vmatpush1.msra.mxu0 0.0
  %1688 = vmatprep.subr.mxu0 0.0
  %1689 = vmatpush1.msra.mxu0 0.0
  %1690 = vmatprep.subr.mxu0 0.0
  %1691 = vmatpush1.msra.mxu0 0.0
  %1692 = vmatprep.subr.mxu0 0.0
  %1693 = vmatpush1.msra.mxu0 0.0
  %1694 = vmatprep.subr.mxu0 0.0
  %1695 = vmatpush1.msra.mxu0 0.0
  %1696 = vmatprep.subr.mxu0 0.0
  %1697 = vmatpush1.msra.mxu0 0.0
  %1698 = vmatprep.subr.mxu0 0.0
  %1699 = vmatpush1.msra.mxu0 0.0
  %1700 = vmatprep.subr.mxu0 0.0
  %1701 = vmatpush1.msra.mxu0 0.0
  %1702 = vmatprep.subr.mxu0 0.0
  %1703 = vmatpush1.msra.mxu0 0.0
  %1704 = vmatprep.subr.mxu0 0.0
  %1705 = vmatpush1.msra.mxu0 0.0
  %1706 = vmatprep.subr.mxu0 0.0
  %1707 = vmatpush1.msra.mxu0 0.0
  %1708 = vmatprep.subr.mxu0 0.0
  %1709 = vmatpush1.msra.mxu0 0.0
  %1710 = vmatprep.subr.mxu0 0.0
  %1711 = vmatpush1.msra.mxu0 0.0
  %1712 = vmatprep.subr.mxu0 0.0
  %1713 = vmatpush1.msra.mxu0 0.0
  %1714 = vmatprep.subr.mxu0 0.0
  %1715 = vmatpush1.msra.mxu0 0.0
  %1716 = vmatprep.subr.mxu0 0.0
  %1717 = vmatpush1.msra.mxu0 0.0
  %1718 = vmatprep.subr.mxu0 0.0
  %1719 = vmatpush1.msra.mxu0 0.0
  %1720 = vmatprep.subr.mxu0 0.0
  %1721 = vmatpush1.msra.mxu0 0.0
  %1722 = vmatprep.subr.mxu0 0.0
  %1723 = vmatpush1.msra.mxu0 0.0
  %1724 = vmatprep.subr.mxu0 0.0
  %1725 = vmatpush1.msra.mxu0 0.0
  %1726 = vmatprep.subr.mxu0 0.0
  %1727 = vmatpush1.msra.mxu0 0.0
  %1728 = vmatprep.subr.mxu0 0.0
  %1729 = vmatpush1.msra.mxu0 0.0
  %1730 = vmatprep.subr.mxu0 0.0
  %1731 = vmatpush1.msra.mxu0 0.0
  %1732 = vmatprep.subr.mxu0 0.0
  %1733 = vmatpush1.msra.mxu0 0.0
  %1734 = vmatprep.subr.mxu0 0.0
  %1735 = vmatpush1.msra.mxu0 0.0
  %1736 = vmatprep.subr.mxu0 0.0
  %1737 = vmatpush1.msra.mxu0 0.0
  %1738 = vmatprep.mubr.f32.mxu0 0.0
  %1739 = vmatmul.mubr.f32.gmra.mrb[0].mxu0 %v1672
  %v1740 = vpop.f32.mrb[0].mxu0
  %v1741 = vadd.f32 0.0, %v1740
  %v1742 = vpop.f32.mrb[0].mxu0
  %1743 = vdwg.mxu0
  %v1745 = vrot.slane %v1741, 4
  %v1747 = vadd.f32 %v234, %v1745
  %v1748 = vxor.u32 %v1747, 2147483648
  %v1749 = vmul.f32 %v1748, 1.442695
  %v1750 = vpow.pop %v1749
  %v1751 = vadd.f32 %v1750, 1.0
  %v1752 = vrcp.pop %v1751
  %v1753 = vmul.f32 1.0, %v1752
  %v1754 = vtanh.pop %v1747
  %v1756 = vrot.slane %v1657, 2
  %v1758 = vmul.f32 %v1753, %v1756
  %1760 = vrot.lane.b32.xlu0 %v1754, 96
  %v1761 = vpop.permute.xlu0 %1760
  %v1763 = vmul.f32 %v1753, %v1761
  %1765 = vrot.lane.b32.xlu0 %v1763, 16
  %v1766 = vpop.permute.xlu0 %1765
  %v1768 = vadd.f32 %v1758, %v1766
  %v1769 = vtanh.pop %v1768
  %1771 = vrot.lane.b32.xlu0 %v1769, 32
  %v1772 = vpop.permute.xlu0 %1771
  %v1774 = vmul.f32 %v1753, %v1772
  %1776 = vrot.lane.b32.xlu0 %v1774, 96
  %v1777 = vpop.permute.xlu0 %1776
  %1779 = vst.msk [vmem:[%s13] sm:$0x30] %vm1336, %v1777
  %v1780 = vrot.slane %v1774, 4
  %1781 = vrot.lane.b32.xlu0 %v1780, 80
  %v1782 = vpop.permute.xlu0 %1781
  %v1783 = vsel %vm246, %v1782, 0
  %1785 = vmatprep.subr.mxu0 0.0
  %1786 = vmatpush1.msra.mxu0 %v244
  %1787 = vmatprep.subr.mxu0 0.0
  %1788 = vmatpush1.msra.mxu0 %v245
  %1789 = vmatprep.subr.mxu0 0.0
  %1790 = vmatpush1.msra.mxu0 0.0
  %1791 = vmatprep.subr.mxu0 0.0
  %1792 = vmatpush1.msra.mxu0 0.0
  %1793 = vmatprep.subr.mxu0 0.0
  %1794 = vmatpush1.msra.mxu0 0.0
  %1795 = vmatprep.subr.mxu0 0.0
  %1796 = vmatpush1.msra.mxu0 0.0
  %1797 = vmatprep.subr.mxu0 0.0
  %1798 = vmatpush1.msra.mxu0 0.0
  %1799 = vmatprep.subr.mxu0 0.0
  %1800 = vmatpush1.msra.mxu0 0.0
  %1801 = vmatprep.subr.mxu0 0.0
  %1802 = vmatpush1.msra.mxu0 0.0
  %1803 = vmatprep.subr.mxu0 0.0
  %1804 = vmatpush1.msra.mxu0 0.0
  %1805 = vmatprep.subr.mxu0 0.0
  %1806 = vmatpush1.msra.mxu0 0.0
  %1807 = vmatprep.subr.mxu0 0.0
  %1808 = vmatpush1.msra.mxu0 0.0
  %1809 = vmatprep.subr.mxu0 0.0
  %1810 = vmatpush1.msra.mxu0 0.0
  %1811 = vmatprep.subr.mxu0 0.0
  %1812 = vmatpush1.msra.mxu0 0.0
  %1813 = vmatprep.subr.mxu0 0.0
  %1814 = vmatpush1.msra.mxu0 0.0
  %1815 = vmatprep.subr.mxu0 0.0
  %1816 = vmatpush1.msra.mxu0 0.0
  %1817 = vmatprep.subr.mxu0 0.0
  %1818 = vmatpush1.msra.mxu0 0.0
  %1819 = vmatprep.subr.mxu0 0.0
  %1820 = vmatpush1.msra.mxu0 0.0
  %1821 = vmatprep.subr.mxu0 0.0
  %1822 = vmatpush1.msra.mxu0 0.0
  %1823 = vmatprep.subr.mxu0 0.0
  %1824 = vmatpush1.msra.mxu0 0.0
  %1825 = vmatprep.subr.mxu0 0.0
  %1826 = vmatpush1.msra.mxu0 0.0
  %1827 = vmatprep.subr.mxu0 0.0
  %1828 = vmatpush1.msra.mxu0 0.0
  %1829 = vmatprep.subr.mxu0 0.0
  %1830 = vmatpush1.msra.mxu0 0.0
  %1831 = vmatprep.subr.mxu0 0.0
  %1832 = vmatpush1.msra.mxu0 0.0
  %1833 = vmatprep.subr.mxu0 0.0
  %1834 = vmatpush1.msra.mxu0 0.0
  %1835 = vmatprep.subr.mxu0 0.0
  %1836 = vmatpush1.msra.mxu0 0.0
  %1837 = vmatprep.subr.mxu0 0.0
  %1838 = vmatpush1.msra.mxu0 0.0
  %1839 = vmatprep.subr.mxu0 0.0
  %1840 = vmatpush1.msra.mxu0 0.0
  %1841 = vmatprep.subr.mxu0 0.0
  %1842 = vmatpush1.msra.mxu0 0.0
  %1843 = vmatprep.subr.mxu0 0.0
  %1844 = vmatpush1.msra.mxu0 0.0
  %1845 = vmatprep.subr.mxu0 0.0
  %1846 = vmatpush1.msra.mxu0 0.0
  %1847 = vmatprep.subr.mxu0 0.0
  %1848 = vmatpush1.msra.mxu0 0.0
  %1849 = vmatprep.mubr.f32.mxu0 0.0
  %1850 = vmatmul.mubr.f32.gmra.mrb[0].mxu0 %v1783
  %v1851 = vpop.f32.mrb[0].mxu0
  %v1852 = vadd.f32 0.0, %v1851
  %v1853 = vpop.f32.mrb[0].mxu0
  %1854 = vdwg.mxu0
  %v1856 = vrot.slane %v1852, 6
  %v1858 = vadd.f32 %v234, %v1856
  %v1859 = vxor.u32 %v1858, 2147483648
  %v1860 = vmul.f32 %v1859, 1.442695
  %v1861 = vpow.pop %v1860
  %v1862 = vadd.f32 %v1861, 1.0
  %v1863 = vrcp.pop %v1862
  %v1864 = vmul.f32 1.0, %v1863
  %v1865 = vtanh.pop %v1858
  %v1867 = vrot.slane %v1768, 2
  %v1869 = vmul.f32 %v1864, %v1867
  %1871 = vrot.lane.b32.xlu0 %v1865, 96
  %v1872 = vpop.permute.xlu0 %1871
  %v1874 = vmul.f32 %v1864, %v1872
  %1876 = vrot.lane.b32.xlu0 %v1874, 16
  %v1877 = vpop.permute.xlu0 %1876
  %v1879 = vadd.f32 %v1869, %v1877
  %v1880 = vtanh.pop %v1879
  %1882 = vrot.lane.b32.xlu0 %v1880, 32
  %v1883 = vpop.permute.xlu0 %1882
  %v1885 = vmul.f32 %v1864, %v1883
  %1887 = vrot.lane.b32.xlu0 %v1885, 96
  %v1888 = vpop.permute.xlu0 %1887
  %1890 = vst.msk [vmem:[%s13] sm:$0xc] %vm1448, %v1888
  %v1891 = vrot.slane %v1885, 2
  %1892 = vrot.lane.b32.xlu0 %v1891, 80
  %v1893 = vpop.permute.xlu0 %1892
  %v1894 = vsel %vm246, %v1893, 0
  %1896 = vmatprep.subr.mxu0 0.0
  %1897 = vmatpush1.msra.mxu0 %v244
  %1898 = vmatprep.subr.mxu0 0.0
  %1899 = vmatpush1.msra.mxu0 %v245
  %1900 = vmatprep.subr.mxu0 0.0
  %1901 = vmatpush1.msra.mxu0 0.0
  %1902 = vmatprep.subr.mxu0 0.0
  %1903 = vmatpush1.msra.mxu0 0.0
  %1904 = vmatprep.subr.mxu0 0.0
  %1905 = vmatpush1.msra.mxu0 0.0
  %1906 = vmatprep.subr.mxu0 0.0
  %1907 = vmatpush1.msra.mxu0 0.0
  %1908 = vmatprep.subr.mxu0 0.0
  %1909 = vmatpush1.msra.mxu0 0.0
  %1910 = vmatprep.subr.mxu0 0.0
  %1911 = vmatpush1.msra.mxu0 0.0
  %1912 = vmatprep.subr.mxu0 0.0
  %1913 = vmatpush1.msra.mxu0 0.0
  %1914 = vmatprep.subr.mxu0 0.0
  %1915 = vmatpush1.msra.mxu0 0.0
  %1916 = vmatprep.subr.mxu0 0.0
  %1917 = vmatpush1.msra.mxu0 0.0
  %1918 = vmatprep.subr.mxu0 0.0
  %1919 = vmatpush1.msra.mxu0 0.0
  %1920 = vmatprep.subr.mxu0 0.0
  %1921 = vmatpush1.msra.mxu0 0.0
  %1922 = vmatprep.subr.mxu0 0.0
  %1923 = vmatpush1.msra.mxu0 0.0
  %1924 = vmatprep.subr.mxu0 0.0
  %1925 = vmatpush1.msra.mxu0 0.0
  %1926 = vmatprep.subr.mxu0 0.0
  %1927 = vmatpush1.msra.mxu0 0.0
  %1928 = vmatprep.subr.mxu0 0.0
  %1929 = vmatpush1.msra.mxu0 0.0
  %1930 = vmatprep.subr.mxu0 0.0
  %1931 = vmatpush1.msra.mxu0 0.0
  %1932 = vmatprep.subr.mxu0 0.0
  %1933 = vmatpush1.msra.mxu0 0.0
  %1934 = vmatprep.subr.mxu0 0.0
  %1935 = vmatpush1.msra.mxu0 0.0
  %1936 = vmatprep.subr.mxu0 0.0
  %1937 = vmatpush1.msra.mxu0 0.0
  %1938 = vmatprep.subr.mxu0 0.0
  %1939 = vmatpush1.msra.mxu0 0.0
  %1940 = vmatprep.subr.mxu0 0.0
  %1941 = vmatpush1.msra.mxu0 0.0
  %1942 = vmatprep.subr.mxu0 0.0
  %1943 = vmatpush1.msra.mxu0 0.0
  %1944 = vmatprep.subr.mxu0 0.0
  %1945 = vmatpush1.msra.mxu0 0.0
  %1946 = vmatprep.subr.mxu0 0.0
  %1947 = vmatpush1.msra.mxu0 0.0
  %1948 = vmatprep.subr.mxu0 0.0
  %1949 = vmatpush1.msra.mxu0 0.0
  %1950 = vmatprep.subr.mxu0 0.0
  %1951 = vmatpush1.msra.mxu0 0.0
  %1952 = vmatprep.subr.mxu0 0.0
  %1953 = vmatpush1.msra.mxu0 0.0
  %1954 = vmatprep.subr.mxu0 0.0
  %1955 = vmatpush1.msra.mxu0 0.0
  %1956 = vmatprep.subr.mxu0 0.0
  %1957 = vmatpush1.msra.mxu0 0.0
  %1958 = vmatprep.subr.mxu0 0.0
  %1959 = vmatpush1.msra.mxu0 0.0
  %1960 = vmatprep.mubr.f32.mxu0 0.0
  %1961 = vmatmul.mubr.f32.gmra.mrb[0].mxu0 %v1894
  %v1962 = vpop.f32.mrb[0].mxu0
  %v1963 = vadd.f32 0.0, %v1962
  %v1964 = vpop.f32.mrb[0].mxu0
  %1965 = vdwg.mxu0
  %v1966 = vadd.f32 %v234, %v1963
  %v1967 = vxor.u32 %v1966, 2147483648
  %v1968 = vmul.f32 %v1967, 1.442695
  %v1969 = vpow.pop %v1968
  %v1970 = vadd.f32 %v1969, 1.0
  %v1971 = vrcp.pop %v1970
  %v1972 = vmul.f32 1.0, %v1971
  %v1973 = vtanh.pop %v1966
  %v1975 = vrot.slane %v1879, 2
  %v1977 = vmul.f32 %v1972, %v1975
  %1979 = vrot.lane.b32.xlu0 %v1973, 96
  %v1980 = vpop.permute.xlu0 %1979
  %v1982 = vmul.f32 %v1972, %v1980
  %1984 = vrot.lane.b32.xlu0 %v1982, 16
  %v1985 = vpop.permute.xlu0 %1984
  %v1987 = vadd.f32 %v1977, %v1985
  %v1988 = vtanh.pop %v1987
  %1990 = vrot.lane.b32.xlu0 %v1988, 32
  %v1991 = vpop.permute.xlu0 %1990
  %v1993 = vmul.f32 %v1972, %v1991
  %1995 = vrot.lane.b32.xlu0 %v1993, 96
  %v1996 = vpop.permute.xlu0 %1995
  %1998 = vst.msk [vmem:[%s13] sm:$0x3] %vm1557, %v1996
  %v1999 = vld [vmem:[%s13] sm:$0xff]
  %v2000 = vld [vmem:[%s13 + $0x8] sm:$0xff]
  %v2001 = vld [vmem:[%s7] sm:$0xff]
  %v2002 = vld [vmem:[%s7 + $0x8] sm:$0xff]
  %v2003 = vld [vmem:[%s7 + $0x10] sm:$0xff]
  %v2004 = vld [vmem:[%s7 + $0x18] sm:$0xff]
  %v2005 = vld [vmem:[%s9] sm:$0x1]
  %v2007 = vlaneseq
  %v2008 = vshrl.u32 %v2007, 7
  %v2009 = vsub.s32 0, %v2008
  %v2010 = vrot.slane %v2005, %v2009
  %vm2012 = vcmask 261120
  %v2014 = vsel %vm2012, %v1999, 0
  %v2017 = vsel %vm2012, %v2000, 0
  %2019 = vmatprep.subr.mxu0 0.0
  %2020 = vmatpush1.msra.mxu0 %v2001
  %2021 = vmatprep.subr.mxu0 0.0
  %2022 = vmatpush1.msra.mxu0 %v2002
  %2023 = vmatprep.subr.mxu0 0.0
  %2024 = vmatpush1.msra.mxu0 %v2003
  %2025 = vmatprep.subr.mxu0 0.0
  %2026 = vmatpush1.msra.mxu0 %v2004
  %2027 = vmatprep.subr.mxu0 0.0
  %2028 = vmatpush1.msra.mxu0 0.0
  %2029 = vmatprep.subr.mxu0 0.0
  %2030 = vmatpush1.msra.mxu0 0.0
  %2031 = vmatprep.subr.mxu0 0.0
  %2032 = vmatpush1.msra.mxu0 0.0
  %2033 = vmatprep.subr.mxu0 0.0
  %2034 = vmatpush1.msra.mxu0 0.0
  %2035 = vmatprep.subr.mxu0 0.0
  %2036 = vmatpush1.msra.mxu0 0.0
  %2037 = vmatprep.subr.mxu0 0.0
  %2038 = vmatpush1.msra.mxu0 0.0
  %2039 = vmatprep.subr.mxu0 0.0
  %2040 = vmatpush1.msra.mxu0 0.0
  %2041 = vmatprep.subr.mxu0 0.0
  %2042 = vmatpush1.msra.mxu0 0.0
  %2043 = vmatprep.subr.mxu0 0.0
  %2044 = vmatpush1.msra.mxu0 0.0
  %2045 = vmatprep.subr.mxu0 0.0
  %2046 = vmatpush1.msra.mxu0 0.0
  %2047 = vmatprep.subr.mxu0 0.0
  %2048 = vmatpush1.msra.mxu0 0.0
  %2049 = vmatprep.subr.mxu0 0.0
  %2050 = vmatpush1.msra.mxu0 0.0
  %2051 = vmatprep.subr.mxu0 0.0
  %2052 = vmatpush1.msra.mxu0 0.0
  %2053 = vmatprep.subr.mxu0 0.0
  %2054 = vmatpush1.msra.mxu0 0.0
  %2055 = vmatprep.subr.mxu0 0.0
  %2056 = vmatpush1.msra.mxu0 0.0
  %2057 = vmatprep.subr.mxu0 0.0
  %2058 = vmatpush1.msra.mxu0 0.0
  %2059 = vmatprep.subr.mxu0 0.0
  %2060 = vmatpush1.msra.mxu0 0.0
  %2061 = vmatprep.subr.mxu0 0.0
  %2062 = vmatpush1.msra.mxu0 0.0
  %2063 = vmatprep.subr.mxu0 0.0
  %2064 = vmatpush1.msra.mxu0 0.0
  %2065 = vmatprep.subr.mxu0 0.0
  %2066 = vmatpush1.msra.mxu0 0.0
  %2067 = vmatprep.subr.mxu0 0.0
  %2068 = vmatpush1.msra.mxu0 0.0
  %2069 = vmatprep.subr.mxu0 0.0
  %2070 = vmatpush1.msra.mxu0 0.0
  %2071 = vmatprep.subr.mxu0 0.0
  %2072 = vmatpush1.msra.mxu0 0.0
  %2073 = vmatprep.subr.mxu0 0.0
  %2074 = vmatpush1.msra.mxu0 0.0
  %2075 = vmatprep.subr.mxu0 0.0
  %2076 = vmatpush1.msra.mxu0 0.0
  %2077 = vmatprep.subr.mxu0 0.0
  %2078 = vmatpush1.msra.mxu0 0.0
  %2079 = vmatprep.subr.mxu0 0.0
  %2080 = vmatpush1.msra.mxu0 0.0
  %2081 = vmatprep.subr.mxu0 0.0
  %2082 = vmatpush1.msra.mxu0 0.0
  %2083 = vmatprep.mubr.f32.mxu0 0.0
  %2084 = vmatmul.mubr.f32.gmra.mrb[0].mxu0 %v2014
  %v2085 = vpop.f32.mrb[0].mxu0
  %v2086 = vadd.f32 %v2010, %v2085
  %v2087 = vpop.f32.mrb[0].mxu0
  %2088 = vmatprep.mubr.f32.mxu0 0.0
  %2089 = vmatmul.mubr.f32.gmra.mrb[0].mxu0 %v2017
  %v2090 = vpop.f32.mrb[0].mxu0
  %v2091 = vadd.f32 %v2010, %v2090
  %v2092 = vpop.f32.mrb[0].mxu0
  %2093 = vdwg.mxu0
  %v2094 = vld [vmem:[%s10] sm:$0xff]
  %v2095 = vld [vmem:[%s10 + $0x8] sm:$0xff]
  %v2096 = vld [vmem:[%s10 + $0x10] sm:$0xff]
  %v2097 = vld [vmem:[%s10 + $0x18] sm:$0xff]
  %v2098 = vld [vmem:[%s12] sm:$0x1]
  %v2100 = vlaneseq
  %v2101 = vshrl.u32 %v2100, 7
  %v2102 = vsub.s32 0, %v2101
  %v2103 = vrot.slane %v2098, %v2102
  %2105 = vmatprep.subr.mxu0 0.0
  %2106 = vmatpush1.msra.mxu0 %v2094
  %2107 = vmatprep.subr.mxu0 0.0
  %2108 = vmatpush1.msra.mxu0 %v2095
  %2109 = vmatprep.subr.mxu0 0.0
  %2110 = vmatpush1.msra.mxu0 %v2096
  %2111 = vmatprep.subr.mxu0 0.0
  %2112 = vmatpush1.msra.mxu0 %v2097
  %2113 = vmatprep.subr.mxu0 0.0
  %2114 = vmatpush1.msra.mxu0 0.0
  %2115 = vmatprep.subr.mxu0 0.0
  %2116 = vmatpush1.msra.mxu0 0.0
  %2117 = vmatprep.subr.mxu0 0.0
  %2118 = vmatpush1.msra.mxu0 0.0
  %2119 = vmatprep.subr.mxu0 0.0
  %2120 = vmatpush1.msra.mxu0 0.0
  %2121 = vmatprep.subr.mxu0 0.0
  %2122 = vmatpush1.msra.mxu0 0.0
  %2123 = vmatprep.subr.mxu0 0.0
  %2124 = vmatpush1.msra.mxu0 0.0
  %2125 = vmatprep.subr.mxu0 0.0
  %2126 = vmatpush1.msra.mxu0 0.0
  %2127 = vmatprep.subr.mxu0 0.0
  %2128 = vmatpush1.msra.mxu0 0.0
  %2129 = vmatprep.subr.mxu0 0.0
  %2130 = vmatpush1.msra.mxu0 0.0
  %2131 = vmatprep.subr.mxu0 0.0
  %2132 = vmatpush1.msra.mxu0 0.0
  %2133 = vmatprep.subr.mxu0 0.0
  %2134 = vmatpush1.msra.mxu0 0.0
  %2135 = vmatprep.subr.mxu0 0.0
  %2136 = vmatpush1.msra.mxu0 0.0
  %2137 = vmatprep.subr.mxu0 0.0
  %2138 = vmatpush1.msra.mxu0 0.0
  %2139 = vmatprep.subr.mxu0 0.0
  %2140 = vmatpush1.msra.mxu0 0.0
  %2141 = vmatprep.subr.mxu0 0.0
  %2142 = vmatpush1.msra.mxu0 0.0
  %2143 = vmatprep.subr.mxu0 0.0
  %2144 = vmatpush1.msra.mxu0 0.0
  %2145 = vmatprep.subr.mxu0 0.0
  %2146 = vmatpush1.msra.mxu0 0.0
  %2147 = vmatprep.subr.mxu0 0.0
  %2148 = vmatpush1.msra.mxu0 0.0
  %2149 = vmatprep.subr.mxu0 0.0
  %2150 = vmatpush1.msra.mxu0 0.0
  %2151 = vmatprep.subr.mxu0 0.0
  %2152 = vmatpush1.msra.mxu0 0.0
  %2153 = vmatprep.subr.mxu0 0.0
  %2154 = vmatpush1.msra.mxu0 0.0
  %2155 = vmatprep.subr.mxu0 0.0
  %2156 = vmatpush1.msra.mxu0 0.0
  %2157 = vmatprep.subr.mxu0 0.0
  %2158 = vmatpush1.msra.mxu0 0.0
  %2159 = vmatprep.subr.mxu0 0.0
  %2160 = vmatpush1.msra.mxu0 0.0
  %2161 = vmatprep.subr.mxu0 0.0
  %2162 = vmatpush1.msra.mxu0 0.0
  %2163 = vmatprep.subr.mxu0 0.0
  %2164 = vmatpush1.msra.mxu0 0.0
  %2165 = vmatprep.subr.mxu0 0.0
  %2166 = vmatpush1.msra.mxu0 0.0
  %2167 = vmatprep.subr.mxu0 0.0
  %2168 = vmatpush1.msra.mxu0 0.0
  %2169 = vmatprep.mubr.f32.mxu0 0.0
  %2170 = vmatmul.mubr.f32.gmra.mrb[0].mxu0 %v2014
  %v2171 = vpop.f32.mrb[0].mxu0
  %v2172 = vadd.f32 %v2103, %v2171
  %v2173 = vpop.f32.mrb[0].mxu0
  %2174 = vmatprep.mubr.f32.mxu0 0.0
  %2175 = vmatmul.mubr.f32.gmra.mrb[0].mxu0 %v2017
  %v2176 = vpop.f32.mrb[0].mxu0
  %v2177 = vadd.f32 %v2103, %v2176
  %v2178 = vpop.f32.mrb[0].mxu0
  %2179 = vdwg.mxu0
  %v2180 = vld [vmem:[%s8] sm:$0xff]
  %v2181 = vld [vmem:[%s8 + $0x8] sm:$0xff]
  %v2182 = vld [vmem:[%s11] sm:$0xff]
  %v2183 = vld [vmem:[%s11 + $0x8] sm:$0xff]
  %2184 = vmatprep.subr.mxu0 0.0
  %2185 = vmatpush1.msra.mxu0 %v2180
  %2186 = vmatprep.subr.mxu0 0.0
  %2187 = vmatpush1.msra.mxu0 %v2181
  %2188 = vmatprep.subr.mxu0 0.0
  %2189 = vmatpush1.msra.mxu0 0.0
  %2190 = vmatprep.subr.mxu0 0.0
  %2191 = vmatpush1.msra.mxu0 0.0
  %2192 = vmatprep.subr.mxu0 0.0
  %2193 = vmatpush1.msra.mxu0 0.0
  %2194 = vmatprep.subr.mxu0 0.0
  %2195 = vmatpush1.msra.mxu0 0.0
  %2196 = vmatprep.subr.mxu0 0.0
  %2197 = vmatpush1.msra.mxu0 0.0
  %2198 = vmatprep.subr.mxu0 0.0
  %2199 = vmatpush1.msra.mxu0 0.0
  %2200 = vmatprep.subr.mxu0 0.0
  %2201 = vmatpush1.msra.mxu0 0.0
  %2202 = vmatprep.subr.mxu0 0.0
  %2203 = vmatpush1.msra.mxu0 0.0
  %2204 = vmatprep.subr.mxu0 0.0
  %2205 = vmatpush1.msra.mxu0 0.0
  %2206 = vmatprep.subr.mxu0 0.0
  %2207 = vmatpush1.msra.mxu0 0.0
  %2208 = vmatprep.subr.mxu0 0.0
  %2209 = vmatpush1.msra.mxu0 0.0
  %2210 = vmatprep.subr.mxu0 0.0
  %2211 = vmatpush1.msra.mxu0 0.0
  %2212 = vmatprep.subr.mxu0 0.0
  %2213 = vmatpush1.msra.mxu0 0.0
  %2214 = vmatprep.subr.mxu0 0.0
  %2215 = vmatpush1.msra.mxu0 0.0
  %2216 = vmatprep.subr.mxu0 0.0
  %2217 = vmatpush1.msra.mxu0 0.0
  %2218 = vmatprep.subr.mxu0 0.0
  %2219 = vmatpush1.msra.mxu0 0.0
  %2220 = vmatprep.subr.mxu0 0.0
  %2221 = vmatpush1.msra.mxu0 0.0
  %2222 = vmatprep.subr.mxu0 0.0
  %2223 = vmatpush1.msra.mxu0 0.0
  %2224 = vmatprep.subr.mxu0 0.0
  %2225 = vmatpush1.msra.mxu0 0.0
  %2226 = vmatprep.subr.mxu0 0.0
  %2227 = vmatpush1.msra.mxu0 0.0
  %2228 = vmatprep.subr.mxu0 0.0
  %2229 = vmatpush1.msra.mxu0 0.0
  %2230 = vmatprep.subr.mxu0 0.0
  %2231 = vmatpush1.msra.mxu0 0.0
  %2232 = vmatprep.subr.mxu0 0.0
  %2233 = vmatpush1.msra.mxu0 0.0
  %2234 = vmatprep.subr.mxu0 0.0
  %2235 = vmatpush1.msra.mxu0 0.0
  %2236 = vmatprep.subr.mxu0 0.0
  %2237 = vmatpush1.msra.mxu0 0.0
  %2238 = vmatprep.subr.mxu0 0.0
  %2239 = vmatpush1.msra.mxu0 0.0
  %2240 = vmatprep.subr.mxu0 0.0
  %2241 = vmatpush1.msra.mxu0 0.0
  %2242 = vmatprep.subr.mxu0 0.0
  %2243 = vmatpush1.msra.mxu0 0.0
  %2244 = vmatprep.subr.mxu0 0.0
  %2245 = vmatpush1.msra.mxu0 0.0
  %2246 = vmatprep.subr.mxu0 0.0
  %2247 = vmatpush1.msra.mxu0 0.0
  %2248 = vmatprep.mubr.f32.mxu0 0.0
  %2249 = vmatmul.mubr.f32.gmra.mrb[0].mxu0 %v248
  %v2250 = vpop.f32.mrb[0].mxu0
  %v2251 = vadd.f32 0.0, %v2250
  %v2252 = vpop.f32.mrb[0].mxu0
  %2253 = vdwg.mxu0
  %v2254 = vadd.f32 %v2086, %v2251
  %v2255 = vxor.u32 %v2254, 2147483648
  %v2256 = vmul.f32 %v2255, 1.442695
  %v2257 = vpow.pop %v2256
  %v2258 = vadd.f32 %v2257, 1.0
  %v2259 = vrcp.pop %v2258
  %v2260 = vmul.f32 1.0, %v2259
  %v2261 = vtanh.pop %v2254
  %v2262 = vmul.f32 %v2260, 0.0
  %2264 = vrot.lane.b32.xlu0 %v2261, 96
  %v2265 = vpop.permute.xlu0 %2264
  %v2267 = vmul.f32 %v2260, %v2265
  %2269 = vrot.lane.b32.xlu0 %v2267, 16
  %v2270 = vpop.permute.xlu0 %2269
  %v2272 = vadd.f32 %v2262, %v2270
  %v2273 = vtanh.pop %v2272
  %2275 = vrot.lane.b32.xlu0 %v2273, 32
  %v2276 = vpop.permute.xlu0 %2275
  %v2278 = vmul.f32 %v2260, %v2276
  %2280 = vrot.lane.b32.xlu0 %v2278, 80
  %v2281 = vpop.permute.xlu0 %2280
  %2283 = vst.msk [vmem:[%s13] sm:$0x3] %vm349, %v2281
  %v2284 = vsel %vm246, %v2281, 0
  %2286 = vmatprep.subr.mxu0 0.0
  %2287 = vmatpush1.msra.mxu0 %v2180
  %2288 = vmatprep.subr.mxu0 0.0
  %2289 = vmatpush1.msra.mxu0 %v2181
  %2290 = vmatprep.subr.mxu0 0.0
  %2291 = vmatpush1.msra.mxu0 0.0
  %2292 = vmatprep.subr.mxu0 0.0
  %2293 = vmatpush1.msra.mxu0 0.0
  %2294 = vmatprep.subr.mxu0 0.0
  %2295 = vmatpush1.msra.mxu0 0.0
  %2296 = vmatprep.subr.mxu0 0.0
  %2297 = vmatpush1.msra.mxu0 0.0
  %2298 = vmatprep.subr.mxu0 0.0
  %2299 = vmatpush1.msra.mxu0 0.0
  %2300 = vmatprep.subr.mxu0 0.0
  %2301 = vmatpush1.msra.mxu0 0.0
  %2302 = vmatprep.subr.mxu0 0.0
  %2303 = vmatpush1.msra.mxu0 0.0
  %2304 = vmatprep.subr.mxu0 0.0
  %2305 = vmatpush1.msra.mxu0 0.0
  %2306 = vmatprep.subr.mxu0 0.0
  %2307 = vmatpush1.msra.mxu0 0.0
  %2308 = vmatprep.subr.mxu0 0.0
  %2309 = vmatpush1.msra.mxu0 0.0
  %2310 = vmatprep.subr.mxu0 0.0
  %2311 = vmatpush1.msra.mxu0 0.0
  %2312 = vmatprep.subr.mxu0 0.0
  %2313 = vmatpush1.msra.mxu0 0.0
  %2314 = vmatprep.subr.mxu0 0.0
  %2315 = vmatpush1.msra.mxu0 0.0
  %2316 = vmatprep.subr.mxu0 0.0
  %2317 = vmatpush1.msra.mxu0 0.0
  %2318 = vmatprep.subr.mxu0 0.0
  %2319 = vmatpush1.msra.mxu0 0.0
  %2320 = vmatprep.subr.mxu0 0.0
  %2321 = vmatpush1.msra.mxu0 0.0
  %2322 = vmatprep.subr.mxu0 0.0
  %2323 = vmatpush1.msra.mxu0 0.0
  %2324 = vmatprep.subr.mxu0 0.0
  %2325 = vmatpush1.msra.mxu0 0.0
  %2326 = vmatprep.subr.mxu0 0.0
  %2327 = vmatpush1.msra.mxu0 0.0
  %2328 = vmatprep.subr.mxu0 0.0
  %2329 = vmatpush1.msra.mxu0 0.0
  %2330 = vmatprep.subr.mxu0 0.0
  %2331 = vmatpush1.msra.mxu0 0.0
  %2332 = vmatprep.subr.mxu0 0.0
  %2333 = vmatpush1.msra.mxu0 0.0
  %2334 = vmatprep.subr.mxu0 0.0
  %2335 = vmatpush1.msra.mxu0 0.0
  %2336 = vmatprep.subr.mxu0 0.0
  %2337 = vmatpush1.msra.mxu0 0.0
  %2338 = vmatprep.subr.mxu0 0.0
  %2339 = vmatpush1.msra.mxu0 0.0
  %2340 = vmatprep.subr.mxu0 0.0
  %2341 = vmatpush1.msra.mxu0 0.0
  %2342 = vmatprep.subr.mxu0 0.0
  %2343 = vmatpush1.msra.mxu0 0.0
  %2344 = vmatprep.subr.mxu0 0.0
  %2345 = vmatpush1.msra.mxu0 0.0
  %2346 = vmatprep.subr.mxu0 0.0
  %2347 = vmatpush1.msra.mxu0 0.0
  %2348 = vmatprep.subr.mxu0 0.0
  %2349 = vmatpush1.msra.mxu0 0.0
  %2350 = vmatprep.mubr.f32.mxu0 0.0
  %2351 = vmatmul.mubr.f32.gmra.mrb[0].mxu0 %v2284
  %v2352 = vpop.f32.mrb[0].mxu0
  %v2353 = vadd.f32 0.0, %v2352
  %v2354 = vpop.f32.mrb[0].mxu0
  %2355 = vdwg.mxu0
  %v2357 = vrot.slane %v2353, 6
  %v2359 = vadd.f32 %v2086, %v2357
  %v2360 = vxor.u32 %v2359, 2147483648
  %v2361 = vmul.f32 %v2360, 1.442695
  %v2362 = vpow.pop %v2361
  %v2363 = vadd.f32 %v2362, 1.0
  %v2364 = vrcp.pop %v2363
  %v2365 = vmul.f32 1.0, %v2364
  %v2366 = vtanh.pop %v2359
  %v2368 = vrot.slane %v2272, 6
  %v2370 = vmul.f32 %v2365, %v2368
  %2372 = vrot.lane.b32.xlu0 %v2366, 96
  %v2373 = vpop.permute.xlu0 %2372
  %v2375 = vmul.f32 %v2365, %v2373
  %2377 = vrot.lane.b32.xlu0 %v2375, 16
  %v2378 = vpop.permute.xlu0 %2377
  %v2380 = vadd.f32 %v2370, %v2378
  %v2381 = vtanh.pop %v2380
  %2383 = vrot.lane.b32.xlu0 %v2381, 32
  %v2384 = vpop.permute.xlu0 %2383
  %v2386 = vmul.f32 %v2365, %v2384
  %2388 = vrot.lane.b32.xlu0 %v2386, 80
  %v2389 = vpop.permute.xlu0 %2388
  %2391 = vst.msk [vmem:[%s13] sm:$0xc] %vm458, %v2389
  %v2392 = vrot.slane %v2386, 2
  %2393 = vrot.lane.b32.xlu0 %v2392, 80
  %v2394 = vpop.permute.xlu0 %2393
  %v2395 = vsel %vm246, %v2394, 0
  %2397 = vmatprep.subr.mxu0 0.0
  %2398 = vmatpush1.msra.mxu0 %v2180
  %2399 = vmatprep.subr.mxu0 0.0
  %2400 = vmatpush1.msra.mxu0 %v2181
  %2401 = vmatprep.subr.mxu0 0.0
  %2402 = vmatpush1.msra.mxu0 0.0
  %2403 = vmatprep.subr.mxu0 0.0
  %2404 = vmatpush1.msra.mxu0 0.0
  %2405 = vmatprep.subr.mxu0 0.0
  %2406 = vmatpush1.msra.mxu0 0.0
  %2407 = vmatprep.subr.mxu0 0.0
  %2408 = vmatpush1.msra.mxu0 0.0
  %2409 = vmatprep.subr.mxu0 0.0
  %2410 = vmatpush1.msra.mxu0 0.0
  %2411 = vmatprep.subr.mxu0 0.0
  %2412 = vmatpush1.msra.mxu0 0.0
  %2413 = vmatprep.subr.mxu0 0.0
  %2414 = vmatpush1.msra.mxu0 0.0
  %2415 = vmatprep.subr.mxu0 0.0
  %2416 = vmatpush1.msra.mxu0 0.0
  %2417 = vmatprep.subr.mxu0 0.0
  %2418 = vmatpush1.msra.mxu0 0.0
  %2419 = vmatprep.subr.mxu0 0.0
  %2420 = vmatpush1.msra.mxu0 0.0
  %2421 = vmatprep.subr.mxu0 0.0
  %2422 = vmatpush1.msra.mxu0 0.0
  %2423 = vmatprep.subr.mxu0 0.0
  %2424 = vmatpush1.msra.mxu0 0.0
  %2425 = vmatprep.subr.mxu0 0.0
  %2426 = vmatpush1.msra.mxu0 0.0
  %2427 = vmatprep.subr.mxu0 0.0
  %2428 = vmatpush1.msra.mxu0 0.0
  %2429 = vmatprep.subr.mxu0 0.0
  %2430 = vmatpush1.msra.mxu0 0.0
  %2431 = vmatprep.subr.mxu0 0.0
  %2432 = vmatpush1.msra.mxu0 0.0
  %2433 = vmatprep.subr.mxu0 0.0
  %2434 = vmatpush1.msra.mxu0 0.0
  %2435 = vmatprep.subr.mxu0 0.0
  %2436 = vmatpush1.msra.mxu0 0.0
  %2437 = vmatprep.subr.mxu0 0.0
  %2438 = vmatpush1.msra.mxu0 0.0
  %2439 = vmatprep.subr.mxu0 0.0
  %2440 = vmatpush1.msra.mxu0 0.0
  %2441 = vmatprep.subr.mxu0 0.0
  %2442 = vmatpush1.msra.mxu0 0.0
  %2443 = vmatprep.subr.mxu0 0.0
  %2444 = vmatpush1.msra.mxu0 0.0
  %2445 = vmatprep.subr.mxu0 0.0
  %2446 = vmatpush1.msra.mxu0 0.0
  %2447 = vmatprep.subr.mxu0 0.0
  %2448 = vmatpush1.msra.mxu0 0.0
  %2449 = vmatprep.subr.mxu0 0.0
  %2450 = vmatpush1.msra.mxu0 0.0
  %2451 = vmatprep.subr.mxu0 0.0
  %2452 = vmatpush1.msra.mxu0 0.0
  %2453 = vmatprep.subr.mxu0 0.0
  %2454 = vmatpush1.msra.mxu0 0.0
  %2455 = vmatprep.subr.mxu0 0.0
  %2456 = vmatpush1.msra.mxu0 0.0
  %2457 = vmatprep.subr.mxu0 0.0
  %2458 = vmatpush1.msra.mxu0 0.0
  %2459 = vmatprep.subr.mxu0 0.0
  %2460 = vmatpush1.msra.mxu0 0.0
  %2461 = vmatprep.mubr.f32.mxu0 0.0
  %2462 = vmatmul.mubr.f32.gmra.mrb[0].mxu0 %v2395
  %v2463 = vpop.f32.mrb[0].mxu0
  %v2464 = vadd.f32 0.0, %v2463
  %v2465 = vpop.f32.mrb[0].mxu0
  %2466 = vdwg.mxu0
  %v2468 = vrot.slane %v2464, 4
  %v2470 = vadd.f32 %v2086, %v2468
  %v2471 = vxor.u32 %v2470, 2147483648
  %v2472 = vmul.f32 %v2471, 1.442695
  %v2473 = vpow.pop %v2472
  %v2474 = vadd.f32 %v2473, 1.0
  %v2475 = vrcp.pop %v2474
  %v2476 = vmul.f32 1.0, %v2475
  %v2477 = vtanh.pop %v2470
  %v2479 = vrot.slane %v2380, 6
  %v2481 = vmul.f32 %v2476, %v2479
  %2483 = vrot.lane.b32.xlu0 %v2477, 96
  %v2484 = vpop.permute.xlu0 %2483
  %v2486 = vmul.f32 %v2476, %v2484
  %2488 = vrot.lane.b32.xlu0 %v2486, 16
  %v2489 = vpop.permute.xlu0 %2488
  %v2491 = vadd.f32 %v2481, %v2489
  %v2492 = vtanh.pop %v2491
  %2494 = vrot.lane.b32.xlu0 %v2492, 32
  %v2495 = vpop.permute.xlu0 %2494
  %v2497 = vmul.f32 %v2476, %v2495
  %2499 = vrot.lane.b32.xlu0 %v2497, 80
  %v2500 = vpop.permute.xlu0 %2499
  %2502 = vst.msk [vmem:[%s13] sm:$0x30] %vm570, %v2500
  %v2503 = vrot.slane %v2497, 4
  %2504 = vrot.lane.b32.xlu0 %v2503, 80
  %v2505 = vpop.permute.xlu0 %2504
  %v2506 = vsel %vm246, %v2505, 0
  %2508 = vmatprep.subr.mxu0 0.0
  %2509 = vmatpush1.msra.mxu0 %v2180
  %2510 = vmatprep.subr.mxu0 0.0
  %2511 = vmatpush1.msra.mxu0 %v2181
  %2512 = vmatprep.subr.mxu0 0.0
  %2513 = vmatpush1.msra.mxu0 0.0
  %2514 = vmatprep.subr.mxu0 0.0
  %2515 = vmatpush1.msra.mxu0 0.0
  %2516 = vmatprep.subr.mxu0 0.0
  %2517 = vmatpush1.msra.mxu0 0.0
  %2518 = vmatprep.subr.mxu0 0.0
  %2519 = vmatpush1.msra.mxu0 0.0
  %2520 = vmatprep.subr.mxu0 0.0
  %2521 = vmatpush1.msra.mxu0 0.0
  %2522 = vmatprep.subr.mxu0 0.0
  %2523 = vmatpush1.msra.mxu0 0.0
  %2524 = vmatprep.subr.mxu0 0.0
  %2525 = vmatpush1.msra.mxu0 0.0
  %2526 = vmatprep.subr.mxu0 0.0
  %2527 = vmatpush1.msra.mxu0 0.0
  %2528 = vmatprep.subr.mxu0 0.0
  %2529 = vmatpush1.msra.mxu0 0.0
  %2530 = vmatprep.subr.mxu0 0.0
  %2531 = vmatpush1.msra.mxu0 0.0
  %2532 = vmatprep.subr.mxu0 0.0
  %2533 = vmatpush1.msra.mxu0 0.0
  %2534 = vmatprep.subr.mxu0 0.0
  %2535 = vmatpush1.msra.mxu0 0.0
  %2536 = vmatprep.subr.mxu0 0.0
  %2537 = vmatpush1.msra.mxu0 0.0
  %2538 = vmatprep.subr.mxu0 0.0
  %2539 = vmatpush1.msra.mxu0 0.0
  %2540 = vmatprep.subr.mxu0 0.0
  %2541 = vmatpush1.msra.mxu0 0.0
  %2542 = vmatprep.subr.mxu0 0.0
  %2543 = vmatpush1.msra.mxu0 0.0
  %2544 = vmatprep.subr.mxu0 0.0
  %2545 = vmatpush1.msra.mxu0 0.0
  %2546 = vmatprep.subr.mxu0 0.0
  %2547 = vmatpush1.msra.mxu0 0.0
  %2548 = vmatprep.subr.mxu0 0.0
  %2549 = vmatpush1.msra.mxu0 0.0
  %2550 = vmatprep.subr.mxu0 0.0
  %2551 = vmatpush1.msra.mxu0 0.0
  %2552 = vmatprep.subr.mxu0 0.0
  %2553 = vmatpush1.msra.mxu0 0.0
  %2554 = vmatprep.subr.mxu0 0.0
  %2555 = vmatpush1.msra.mxu0 0.0
  %2556 = vmatprep.subr.mxu0 0.0
  %2557 = vmatpush1.msra.mxu0 0.0
  %2558 = vmatprep.subr.mxu0 0.0
  %2559 = vmatpush1.msra.mxu0 0.0
  %2560 = vmatprep.subr.mxu0 0.0
  %2561 = vmatpush1.msra.mxu0 0.0
  %2562 = vmatprep.subr.mxu0 0.0
  %2563 = vmatpush1.msra.mxu0 0.0
  %2564 = vmatprep.subr.mxu0 0.0
  %2565 = vmatpush1.msra.mxu0 0.0
  %2566 = vmatprep.subr.mxu0 0.0
  %2567 = vmatpush1.msra.mxu0 0.0
  %2568 = vmatprep.subr.mxu0 0.0
  %2569 = vmatpush1.msra.mxu0 0.0
  %2570 = vmatprep.subr.mxu0 0.0
  %2571 = vmatpush1.msra.mxu0 0.0
  %2572 = vmatprep.mubr.f32.mxu0 0.0
  %2573 = vmatmul.mubr.f32.gmra.mrb[0].mxu0 %v2506
  %v2574 = vpop.f32.mrb[0].mxu0
  %v2575 = vadd.f32 0.0, %v2574
  %v2576 = vpop.f32.mrb[0].mxu0
  %2577 = vdwg.mxu0
  %v2579 = vrot.slane %v2575, 2
  %v2581 = vadd.f32 %v2086, %v2579
  %v2582 = vxor.u32 %v2581, 2147483648
  %v2583 = vmul.f32 %v2582, 1.442695
  %v2584 = vpow.pop %v2583
  %v2585 = vadd.f32 %v2584, 1.0
  %v2586 = vrcp.pop %v2585
  %v2587 = vmul.f32 1.0, %v2586
  %v2588 = vtanh.pop %v2581
  %v2590 = vrot.slane %v2491, 6
  %v2592 = vmul.f32 %v2587, %v2590
  %2594 = vrot.lane.b32.xlu0 %v2588, 96
  %v2595 = vpop.permute.xlu0 %2594
  %v2597 = vmul.f32 %v2587, %v2595
  %2599 = vrot.lane.b32.xlu0 %v2597, 16
  %v2600 = vpop.permute.xlu0 %2599
  %v2602 = vadd.f32 %v2592, %v2600
  %v2603 = vtanh.pop %v2602
  %2605 = vrot.lane.b32.xlu0 %v2603, 32
  %v2606 = vpop.permute.xlu0 %2605
  %v2608 = vmul.f32 %v2587, %v2606
  %2610 = vrot.lane.b32.xlu0 %v2608, 80
  %v2611 = vpop.permute.xlu0 %2610
  %2613 = vst.msk [vmem:[%s13] sm:$0xc0] %vm682, %v2611
  %v2614 = vrot.slane %v2608, 6
  %2615 = vrot.lane.b32.xlu0 %v2614, 80
  %v2616 = vpop.permute.xlu0 %2615
  %v2617 = vsel %vm246, %v2616, 0
  %2619 = vmatprep.subr.mxu0 0.0
  %2620 = vmatpush1.msra.mxu0 %v2180
  %2621 = vmatprep.subr.mxu0 0.0
  %2622 = vmatpush1.msra.mxu0 %v2181
  %2623 = vmatprep.subr.mxu0 0.0
  %2624 = vmatpush1.msra.mxu0 0.0
  %2625 = vmatprep.subr.mxu0 0.0
  %2626 = vmatpush1.msra.mxu0 0.0
  %2627 = vmatprep.subr.mxu0 0.0
  %2628 = vmatpush1.msra.mxu0 0.0
  %2629 = vmatprep.subr.mxu0 0.0
  %2630 = vmatpush1.msra.mxu0 0.0
  %2631 = vmatprep.subr.mxu0 0.0
  %2632 = vmatpush1.msra.mxu0 0.0
  %2633 = vmatprep.subr.mxu0 0.0
  %2634 = vmatpush1.msra.mxu0 0.0
  %2635 = vmatprep.subr.mxu0 0.0
  %2636 = vmatpush1.msra.mxu0 0.0
  %2637 = vmatprep.subr.mxu0 0.0
  %2638 = vmatpush1.msra.mxu0 0.0
  %2639 = vmatprep.subr.mxu0 0.0
  %2640 = vmatpush1.msra.mxu0 0.0
  %2641 = vmatprep.subr.mxu0 0.0
  %2642 = vmatpush1.msra.mxu0 0.0
  %2643 = vmatprep.subr.mxu0 0.0
  %2644 = vmatpush1.msra.mxu0 0.0
  %2645 = vmatprep.subr.mxu0 0.0
  %2646 = vmatpush1.msra.mxu0 0.0
  %2647 = vmatprep.subr.mxu0 0.0
  %2648 = vmatpush1.msra.mxu0 0.0
  %2649 = vmatprep.subr.mxu0 0.0
  %2650 = vmatpush1.msra.mxu0 0.0
  %2651 = vmatprep.subr.mxu0 0.0
  %2652 = vmatpush1.msra.mxu0 0.0
  %2653 = vmatprep.subr.mxu0 0.0
  %2654 = vmatpush1.msra.mxu0 0.0
  %2655 = vmatprep.subr.mxu0 0.0
  %2656 = vmatpush1.msra.mxu0 0.0
  %2657 = vmatprep.subr.mxu0 0.0
  %2658 = vmatpush1.msra.mxu0 0.0
  %2659 = vmatprep.subr.mxu0 0.0
  %2660 = vmatpush1.msra.mxu0 0.0
  %2661 = vmatprep.subr.mxu0 0.0
  %2662 = vmatpush1.msra.mxu0 0.0
  %2663 = vmatprep.subr.mxu0 0.0
  %2664 = vmatpush1.msra.mxu0 0.0
  %2665 = vmatprep.subr.mxu0 0.0
  %2666 = vmatpush1.msra.mxu0 0.0
  %2667 = vmatprep.subr.mxu0 0.0
  %2668 = vmatpush1.msra.mxu0 0.0
  %2669 = vmatprep.subr.mxu0 0.0
  %2670 = vmatpush1.msra.mxu0 0.0
  %2671 = vmatprep.subr.mxu0 0.0
  %2672 = vmatpush1.msra.mxu0 0.0
  %2673 = vmatprep.subr.mxu0 0.0
  %2674 = vmatpush1.msra.mxu0 0.0
  %2675 = vmatprep.subr.mxu0 0.0
  %2676 = vmatpush1.msra.mxu0 0.0
  %2677 = vmatprep.subr.mxu0 0.0
  %2678 = vmatpush1.msra.mxu0 0.0
  %2679 = vmatprep.subr.mxu0 0.0
  %2680 = vmatpush1.msra.mxu0 0.0
  %2681 = vmatprep.subr.mxu0 0.0
  %2682 = vmatpush1.msra.mxu0 0.0
  %2683 = vmatprep.mubr.f32.mxu0 0.0
  %2684 = vmatmul.mubr.f32.gmra.mrb[0].mxu0 %v2617
  %v2685 = vpop.f32.mrb[0].mxu0
  %v2686 = vadd.f32 0.0, %v2685
  %v2687 = vpop.f32.mrb[0].mxu0
  %2688 = vdwg.mxu0
  %v2689 = vadd.f32 %v2091, %v2686
  %v2690 = vxor.u32 %v2689, 2147483648
  %v2691 = vmul.f32 %v2690, 1.442695
  %v2692 = vpow.pop %v2691
  %v2693 = vadd.f32 %v2692, 1.0
  %v2694 = vrcp.pop %v2693
  %v2695 = vmul.f32 1.0, %v2694
  %v2696 = vtanh.pop %v2689
  %v2698 = vrot.slane %v2602, 6
  %v2700 = vmul.f32 %v2695, %v2698
  %2702 = vrot.lane.b32.xlu0 %v2696, 96
  %v2703 = vpop.permute.xlu0 %2702
  %v2705 = vmul.f32 %v2695, %v2703
  %2707 = vrot.lane.b32.xlu0 %v2705, 16
  %v2708 = vpop.permute.xlu0 %2707
  %v2710 = vadd.f32 %v2700, %v2708
  %v2711 = vtanh.pop %v2710
  %2713 = vrot.lane.b32.xlu0 %v2711, 32
  %v2714 = vpop.permute.xlu0 %2713
  %v2716 = vmul.f32 %v2695, %v2714
  %2718 = vrot.lane.b32.xlu0 %v2716, 80
  %v2719 = vpop.permute.xlu0 %2718
  %2721 = vst.msk [vmem:[%s13 + $0x8] sm:$0x3] %vm349, %v2719
  %v2722 = vsel %vm246, %v2719, 0
  %2724 = vmatprep.subr.mxu0 0.0
  %2725 = vmatpush1.msra.mxu0 %v2180
  %2726 = vmatprep.subr.mxu0 0.0
  %2727 = vmatpush1.msra.mxu0 %v2181
  %2728 = vmatprep.subr.mxu0 0.0
  %2729 = vmatpush1.msra.mxu0 0.0
  %2730 = vmatprep.subr.mxu0 0.0
  %2731 = vmatpush1.msra.mxu0 0.0
  %2732 = vmatprep.subr.mxu0 0.0
  %2733 = vmatpush1.msra.mxu0 0.0
  %2734 = vmatprep.subr.mxu0 0.0
  %2735 = vmatpush1.msra.mxu0 0.0
  %2736 = vmatprep.subr.mxu0 0.0
  %2737 = vmatpush1.msra.mxu0 0.0
  %2738 = vmatprep.subr.mxu0 0.0
  %2739 = vmatpush1.msra.mxu0 0.0
  %2740 = vmatprep.subr.mxu0 0.0
  %2741 = vmatpush1.msra.mxu0 0.0
  %2742 = vmatprep.subr.mxu0 0.0
  %2743 = vmatpush1.msra.mxu0 0.0
  %2744 = vmatprep.subr.mxu0 0.0
  %2745 = vmatpush1.msra.mxu0 0.0
  %2746 = vmatprep.subr.mxu0 0.0
  %2747 = vmatpush1.msra.mxu0 0.0
  %2748 = vmatprep.subr.mxu0 0.0
  %2749 = vmatpush1.msra.mxu0 0.0
  %2750 = vmatprep.subr.mxu0 0.0
  %2751 = vmatpush1.msra.mxu0 0.0
  %2752 = vmatprep.subr.mxu0 0.0
  %2753 = vmatpush1.msra.mxu0 0.0
  %2754 = vmatprep.subr.mxu0 0.0
  %2755 = vmatpush1.msra.mxu0 0.0
  %2756 = vmatprep.subr.mxu0 0.0
  %2757 = vmatpush1.msra.mxu0 0.0
  %2758 = vmatprep.subr.mxu0 0.0
  %2759 = vmatpush1.msra.mxu0 0.0
  %2760 = vmatprep.subr.mxu0 0.0
  %2761 = vmatpush1.msra.mxu0 0.0
  %2762 = vmatprep.subr.mxu0 0.0
  %2763 = vmatpush1.msra.mxu0 0.0
  %2764 = vmatprep.subr.mxu0 0.0
  %2765 = vmatpush1.msra.mxu0 0.0
  %2766 = vmatprep.subr.mxu0 0.0
  %2767 = vmatpush1.msra.mxu0 0.0
  %2768 = vmatprep.subr.mxu0 0.0
  %2769 = vmatpush1.msra.mxu0 0.0
  %2770 = vmatprep.subr.mxu0 0.0
  %2771 = vmatpush1.msra.mxu0 0.0
  %2772 = vmatprep.subr.mxu0 0.0
  %2773 = vmatpush1.msra.mxu0 0.0
  %2774 = vmatprep.subr.mxu0 0.0
  %2775 = vmatpush1.msra.mxu0 0.0
  %2776 = vmatprep.subr.mxu0 0.0
  %2777 = vmatpush1.msra.mxu0 0.0
  %2778 = vmatprep.subr.mxu0 0.0
  %2779 = vmatpush1.msra.mxu0 0.0
  %2780 = vmatprep.subr.mxu0 0.0
  %2781 = vmatpush1.msra.mxu0 0.0
  %2782 = vmatprep.subr.mxu0 0.0
  %2783 = vmatpush1.msra.mxu0 0.0
  %2784 = vmatprep.subr.mxu0 0.0
  %2785 = vmatpush1.msra.mxu0 0.0
  %2786 = vmatprep.subr.mxu0 0.0
  %2787 = vmatpush1.msra.mxu0 0.0
  %2788 = vmatprep.mubr.f32.mxu0 0.0
  %2789 = vmatmul.mubr.f32.gmra.mrb[0].mxu0 %v2722
  %v2790 = vpop.f32.mrb[0].mxu0
  %v2791 = vadd.f32 0.0, %v2790
  %v2792 = vpop.f32.mrb[0].mxu0
  %2793 = vdwg.mxu0
  %v2795 = vrot.slane %v2791, 6
  %v2797 = vadd.f32 %v2091, %v2795
  %v2798 = vxor.u32 %v2797, 2147483648
  %v2799 = vmul.f32 %v2798, 1.442695
  %v2800 = vpow.pop %v2799
  %v2801 = vadd.f32 %v2800, 1.0
  %v2802 = vrcp.pop %v2801
  %v2803 = vmul.f32 1.0, %v2802
  %v2804 = vtanh.pop %v2797
  %v2806 = vrot.slane %v2710, 6
  %v2808 = vmul.f32 %v2803, %v2806
  %2810 = vrot.lane.b32.xlu0 %v2804, 96
  %v2811 = vpop.permute.xlu0 %2810
  %v2813 = vmul.f32 %v2803, %v2811
  %2815 = vrot.lane.b32.xlu0 %v2813, 16
  %v2816 = vpop.permute.xlu0 %2815
  %v2818 = vadd.f32 %v2808, %v2816
  %v2819 = vtanh.pop %v2818
  %2821 = vrot.lane.b32.xlu0 %v2819, 32
  %v2822 = vpop.permute.xlu0 %2821
  %v2824 = vmul.f32 %v2803, %v2822
  %2826 = vrot.lane.b32.xlu0 %v2824, 80
  %v2827 = vpop.permute.xlu0 %2826
  %2829 = vst.msk [vmem:[%s13 + $0x8] sm:$0xc] %vm458, %v2827
  %v2830 = vrot.slane %v2824, 2
  %2831 = vrot.lane.b32.xlu0 %v2830, 80
  %v2832 = vpop.permute.xlu0 %2831
  %v2833 = vsel %vm246, %v2832, 0
  %2835 = vmatprep.subr.mxu0 0.0
  %2836 = vmatpush1.msra.mxu0 %v2180
  %2837 = vmatprep.subr.mxu0 0.0
  %2838 = vmatpush1.msra.mxu0 %v2181
  %2839 = vmatprep.subr.mxu0 0.0
  %2840 = vmatpush1.msra.mxu0 0.0
  %2841 = vmatprep.subr.mxu0 0.0
  %2842 = vmatpush1.msra.mxu0 0.0
  %2843 = vmatprep.subr.mxu0 0.0
  %2844 = vmatpush1.msra.mxu0 0.0
  %2845 = vmatprep.subr.mxu0 0.0
  %2846 = vmatpush1.msra.mxu0 0.0
  %2847 = vmatprep.subr.mxu0 0.0
  %2848 = vmatpush1.msra.mxu0 0.0
  %2849 = vmatprep.subr.mxu0 0.0
  %2850 = vmatpush1.msra.mxu0 0.0
  %2851 = vmatprep.subr.mxu0 0.0
  %2852 = vmatpush1.msra.mxu0 0.0
  %2853 = vmatprep.subr.mxu0 0.0
  %2854 = vmatpush1.msra.mxu0 0.0
  %2855 = vmatprep.subr.mxu0 0.0
  %2856 = vmatpush1.msra.mxu0 0.0
  %2857 = vmatprep.subr.mxu0 0.0
  %2858 = vmatpush1.msra.mxu0 0.0
  %2859 = vmatprep.subr.mxu0 0.0
  %2860 = vmatpush1.msra.mxu0 0.0
  %2861 = vmatprep.subr.mxu0 0.0
  %2862 = vmatpush1.msra.mxu0 0.0
  %2863 = vmatprep.subr.mxu0 0.0
  %2864 = vmatpush1.msra.mxu0 0.0
  %2865 = vmatprep.subr.mxu0 0.0
  %2866 = vmatpush1.msra.mxu0 0.0
  %2867 = vmatprep.subr.mxu0 0.0
  %2868 = vmatpush1.msra.mxu0 0.0
  %2869 = vmatprep.subr.mxu0 0.0
  %2870 = vmatpush1.msra.mxu0 0.0
  %2871 = vmatprep.subr.mxu0 0.0
  %2872 = vmatpush1.msra.mxu0 0.0
  %2873 = vmatprep.subr.mxu0 0.0
  %2874 = vmatpush1.msra.mxu0 0.0
  %2875 = vmatprep.subr.mxu0 0.0
  %2876 = vmatpush1.msra.mxu0 0.0
  %2877 = vmatprep.subr.mxu0 0.0
  %2878 = vmatpush1.msra.mxu0 0.0
  %2879 = vmatprep.subr.mxu0 0.0
  %2880 = vmatpush1.msra.mxu0 0.0
  %2881 = vmatprep.subr.mxu0 0.0
  %2882 = vmatpush1.msra.mxu0 0.0
  %2883 = vmatprep.subr.mxu0 0.0
  %2884 = vmatpush1.msra.mxu0 0.0
  %2885 = vmatprep.subr.mxu0 0.0
  %2886 = vmatpush1.msra.mxu0 0.0
  %2887 = vmatprep.subr.mxu0 0.0
  %2888 = vmatpush1.msra.mxu0 0.0
  %2889 = vmatprep.subr.mxu0 0.0
  %2890 = vmatpush1.msra.mxu0 0.0
  %2891 = vmatprep.subr.mxu0 0.0
  %2892 = vmatpush1.msra.mxu0 0.0
  %2893 = vmatprep.subr.mxu0 0.0
  %2894 = vmatpush1.msra.mxu0 0.0
  %2895 = vmatprep.subr.mxu0 0.0
  %2896 = vmatpush1.msra.mxu0 0.0
  %2897 = vmatprep.subr.mxu0 0.0
  %2898 = vmatpush1.msra.mxu0 0.0
  %2899 = vmatprep.mubr.f32.mxu0 0.0
  %2900 = vmatmul.mubr.f32.gmra.mrb[0].mxu0 %v2833
  %v2901 = vpop.f32.mrb[0].mxu0
  %v2902 = vadd.f32 0.0, %v2901
  %v2903 = vpop.f32.mrb[0].mxu0
  %2904 = vdwg.mxu0
  %v2906 = vrot.slane %v2902, 4
  %v2908 = vadd.f32 %v2091, %v2906
  %v2909 = vxor.u32 %v2908, 2147483648
  %v2910 = vmul.f32 %v2909, 1.442695
  %v2911 = vpow.pop %v2910
  %v2912 = vadd.f32 %v2911, 1.0
  %v2913 = vrcp.pop %v2912
  %v2914 = vmul.f32 1.0, %v2913
  %v2915 = vtanh.pop %v2908
  %v2917 = vrot.slane %v2818, 6
  %v2919 = vmul.f32 %v2914, %v2917
  %2921 = vrot.lane.b32.xlu0 %v2915, 96
  %v2922 = vpop.permute.xlu0 %2921
  %v2924 = vmul.f32 %v2914, %v2922
  %2926 = vrot.lane.b32.xlu0 %v2924, 16
  %v2927 = vpop.permute.xlu0 %2926
  %v2929 = vadd.f32 %v2919, %v2927
  %v2930 = vtanh.pop %v2929
  %2932 = vrot.lane.b32.xlu0 %v2930, 32
  %v2933 = vpop.permute.xlu0 %2932
  %v2935 = vmul.f32 %v2914, %v2933
  %2937 = vrot.lane.b32.xlu0 %v2935, 80
  %v2938 = vpop.permute.xlu0 %2937
  %2940 = vst.msk [vmem:[%s13 + $0x8] sm:$0x30] %vm570, %v2938
  %v2941 = vrot.slane %v2935, 4
  %2942 = vrot.lane.b32.xlu0 %v2941, 80
  %v2943 = vpop.permute.xlu0 %2942
  %v2944 = vsel %vm246, %v2943, 0
  %2946 = vmatprep.subr.mxu0 0.0
  %2947 = vmatpush1.msra.mxu0 %v2180
  %2948 = vmatprep.subr.mxu0 0.0
  %2949 = vmatpush1.msra.mxu0 %v2181
  %2950 = vmatprep.subr.mxu0 0.0
  %2951 = vmatpush1.msra.mxu0 0.0
  %2952 = vmatprep.subr.mxu0 0.0
  %2953 = vmatpush1.msra.mxu0 0.0
  %2954 = vmatprep.subr.mxu0 0.0
  %2955 = vmatpush1.msra.mxu0 0.0
  %2956 = vmatprep.subr.mxu0 0.0
  %2957 = vmatpush1.msra.mxu0 0.0
  %2958 = vmatprep.subr.mxu0 0.0
  %2959 = vmatpush1.msra.mxu0 0.0
  %2960 = vmatprep.subr.mxu0 0.0
  %2961 = vmatpush1.msra.mxu0 0.0
  %2962 = vmatprep.subr.mxu0 0.0
  %2963 = vmatpush1.msra.mxu0 0.0
  %2964 = vmatprep.subr.mxu0 0.0
  %2965 = vmatpush1.msra.mxu0 0.0
  %2966 = vmatprep.subr.mxu0 0.0
  %2967 = vmatpush1.msra.mxu0 0.0
  %2968 = vmatprep.subr.mxu0 0.0
  %2969 = vmatpush1.msra.mxu0 0.0
  %2970 = vmatprep.subr.mxu0 0.0
  %2971 = vmatpush1.msra.mxu0 0.0
  %2972 = vmatprep.subr.mxu0 0.0
  %2973 = vmatpush1.msra.mxu0 0.0
  %2974 = vmatprep.subr.mxu0 0.0
  %2975 = vmatpush1.msra.mxu0 0.0
  %2976 = vmatprep.subr.mxu0 0.0
  %2977 = vmatpush1.msra.mxu0 0.0
  %2978 = vmatprep.subr.mxu0 0.0
  %2979 = vmatpush1.msra.mxu0 0.0
  %2980 = vmatprep.subr.mxu0 0.0
  %2981 = vmatpush1.msra.mxu0 0.0
  %2982 = vmatprep.subr.mxu0 0.0
  %2983 = vmatpush1.msra.mxu0 0.0
  %2984 = vmatprep.subr.mxu0 0.0
  %2985 = vmatpush1.msra.mxu0 0.0
  %2986 = vmatprep.subr.mxu0 0.0
  %2987 = vmatpush1.msra.mxu0 0.0
  %2988 = vmatprep.subr.mxu0 0.0
  %2989 = vmatpush1.msra.mxu0 0.0
  %2990 = vmatprep.subr.mxu0 0.0
  %2991 = vmatpush1.msra.mxu0 0.0
  %2992 = vmatprep.subr.mxu0 0.0
  %2993 = vmatpush1.msra.mxu0 0.0
  %2994 = vmatprep.subr.mxu0 0.0
  %2995 = vmatpush1.msra.mxu0 0.0
  %2996 = vmatprep.subr.mxu0 0.0
  %2997 = vmatpush1.msra.mxu0 0.0
  %2998 = vmatprep.subr.mxu0 0.0
  %2999 = vmatpush1.msra.mxu0 0.0
  %3000 = vmatprep.subr.mxu0 0.0
  %3001 = vmatpush1.msra.mxu0 0.0
  %3002 = vmatprep.subr.mxu0 0.0
  %3003 = vmatpush1.msra.mxu0 0.0
  %3004 = vmatprep.subr.mxu0 0.0
  %3005 = vmatpush1.msra.mxu0 0.0
  %3006 = vmatprep.subr.mxu0 0.0
  %3007 = vmatpush1.msra.mxu0 0.0
  %3008 = vmatprep.subr.mxu0 0.0
  %3009 = vmatpush1.msra.mxu0 0.0
  %3010 = vmatprep.mubr.f32.mxu0 0.0
  %3011 = vmatmul.mubr.f32.gmra.mrb[0].mxu0 %v2944
  %v3012 = vpop.f32.mrb[0].mxu0
  %v3013 = vadd.f32 0.0, %v3012
  %v3014 = vpop.f32.mrb[0].mxu0
  %3015 = vdwg.mxu0
  %v3017 = vrot.slane %v3013, 2
  %v3019 = vadd.f32 %v2091, %v3017
  %v3020 = vxor.u32 %v3019, 2147483648
  %v3021 = vmul.f32 %v3020, 1.442695
  %v3022 = vpow.pop %v3021
  %v3023 = vadd.f32 %v3022, 1.0
  %v3024 = vrcp.pop %v3023
  %v3025 = vmul.f32 1.0, %v3024
  %v3026 = vtanh.pop %v3019
  %v3028 = vrot.slane %v2929, 6
  %v3030 = vmul.f32 %v3025, %v3028
  %3032 = vrot.lane.b32.xlu0 %v3026, 96
  %v3033 = vpop.permute.xlu0 %3032
  %v3035 = vmul.f32 %v3025, %v3033
  %3037 = vrot.lane.b32.xlu0 %v3035, 16
  %v3038 = vpop.permute.xlu0 %3037
  %v3040 = vadd.f32 %v3030, %v3038
  %v3041 = vtanh.pop %v3040
  %3043 = vrot.lane.b32.xlu0 %v3041, 32
  %v3044 = vpop.permute.xlu0 %3043
  %v3046 = vmul.f32 %v3025, %v3044
  %3048 = vrot.lane.b32.xlu0 %v3046, 80
  %v3049 = vpop.permute.xlu0 %3048
  %3051 = vst.msk [vmem:[%s13 + $0x8] sm:$0xc0] %vm682, %v3049
  %3052 = vmatprep.subr.mxu0 0.0
  %3053 = vmatpush1.msra.mxu0 %v2182
  %3054 = vmatprep.subr.mxu0 0.0
  %3055 = vmatpush1.msra.mxu0 %v2183
  %3056 = vmatprep.subr.mxu0 0.0
  %3057 = vmatpush1.msra.mxu0 0.0
  %3058 = vmatprep.subr.mxu0 0.0
  %3059 = vmatpush1.msra.mxu0 0.0
  %3060 = vmatprep.subr.mxu0 0.0
  %3061 = vmatpush1.msra.mxu0 0.0
  %3062 = vmatprep.subr.mxu0 0.0
  %3063 = vmatpush1.msra.mxu0 0.0
  %3064 = vmatprep.subr.mxu0 0.0
  %3065 = vmatpush1.msra.mxu0 0.0
  %3066 = vmatprep.subr.mxu0 0.0
  %3067 = vmatpush1.msra.mxu0 0.0
  %3068 = vmatprep.subr.mxu0 0.0
  %3069 = vmatpush1.msra.mxu0 0.0
  %3070 = vmatprep.subr.mxu0 0.0
  %3071 = vmatpush1.msra.mxu0 0.0
  %3072 = vmatprep.subr.mxu0 0.0
  %3073 = vmatpush1.msra.mxu0 0.0
  %3074 = vmatprep.subr.mxu0 0.0
  %3075 = vmatpush1.msra.mxu0 0.0
  %3076 = vmatprep.subr.mxu0 0.0
  %3077 = vmatpush1.msra.mxu0 0.0
  %3078 = vmatprep.subr.mxu0 0.0
  %3079 = vmatpush1.msra.mxu0 0.0
  %3080 = vmatprep.subr.mxu0 0.0
  %3081 = vmatpush1.msra.mxu0 0.0
  %3082 = vmatprep.subr.mxu0 0.0
  %3083 = vmatpush1.msra.mxu0 0.0
  %3084 = vmatprep.subr.mxu0 0.0
  %3085 = vmatpush1.msra.mxu0 0.0
  %3086 = vmatprep.subr.mxu0 0.0
  %3087 = vmatpush1.msra.mxu0 0.0
  %3088 = vmatprep.subr.mxu0 0.0
  %3089 = vmatpush1.msra.mxu0 0.0
  %3090 = vmatprep.subr.mxu0 0.0
  %3091 = vmatpush1.msra.mxu0 0.0
  %3092 = vmatprep.subr.mxu0 0.0
  %3093 = vmatpush1.msra.mxu0 0.0
  %3094 = vmatprep.subr.mxu0 0.0
  %3095 = vmatpush1.msra.mxu0 0.0
  %3096 = vmatprep.subr.mxu0 0.0
  %3097 = vmatpush1.msra.mxu0 0.0
  %3098 = vmatprep.subr.mxu0 0.0
  %3099 = vmatpush1.msra.mxu0 0.0
  %3100 = vmatprep.subr.mxu0 0.0
  %3101 = vmatpush1.msra.mxu0 0.0
  %3102 = vmatprep.subr.mxu0 0.0
  %3103 = vmatpush1.msra.mxu0 0.0
  %3104 = vmatprep.subr.mxu0 0.0
  %3105 = vmatpush1.msra.mxu0 0.0
  %3106 = vmatprep.subr.mxu0 0.0
  %3107 = vmatpush1.msra.mxu0 0.0
  %3108 = vmatprep.subr.mxu0 0.0
  %3109 = vmatpush1.msra.mxu0 0.0
  %3110 = vmatprep.subr.mxu0 0.0
  %3111 = vmatpush1.msra.mxu0 0.0
  %3112 = vmatprep.subr.mxu0 0.0
  %3113 = vmatpush1.msra.mxu0 0.0
  %3114 = vmatprep.subr.mxu0 0.0
  %3115 = vmatpush1.msra.mxu0 0.0
  %3116 = vmatprep.mubr.f32.mxu0 0.0
  %3117 = vmatmul.mubr.f32.gmra.mrb[0].mxu0 %v248
  %v3118 = vpop.f32.mrb[0].mxu0
  %v3119 = vadd.f32 0.0, %v3118
  %v3120 = vpop.f32.mrb[0].mxu0
  %3121 = vdwg.mxu0
  %v3123 = vrot.slane %v3119, 2
  %v3125 = vadd.f32 %v2177, %v3123
  %v3126 = vxor.u32 %v3125, 2147483648
  %v3127 = vmul.f32 %v3126, 1.442695
  %v3128 = vpow.pop %v3127
  %v3129 = vadd.f32 %v3128, 1.0
  %v3130 = vrcp.pop %v3129
  %v3131 = vmul.f32 1.0, %v3130
  %v3132 = vtanh.pop %v3125
  %v3133 = vmul.f32 %v3131, 0.0
  %3135 = vrot.lane.b32.xlu0 %v3132, 96
  %v3136 = vpop.permute.xlu0 %3135
  %v3138 = vmul.f32 %v3131, %v3136
  %3140 = vrot.lane.b32.xlu0 %v3138, 16
  %v3141 = vpop.permute.xlu0 %3140
  %v3143 = vadd.f32 %v3133, %v3141
  %v3144 = vtanh.pop %v3143
  %3146 = vrot.lane.b32.xlu0 %v3144, 32
  %v3147 = vpop.permute.xlu0 %3146
  %v3149 = vmul.f32 %v3131, %v3147
  %3151 = vrot.lane.b32.xlu0 %v3149, 96
  %v3152 = vpop.permute.xlu0 %3151
  %3154 = vst.msk [vmem:[%s13 + $0x8] sm:$0xc0] %vm1224, %v3152
  %v3155 = vrot.slane %v3149, 6
  %3156 = vrot.lane.b32.xlu0 %v3155, 80
  %v3157 = vpop.permute.xlu0 %3156
  %v3158 = vsel %vm246, %v3157, 0
  %3160 = vmatprep.subr.mxu0 0.0
  %3161 = vmatpush1.msra.mxu0 %v2182
  %3162 = vmatprep.subr.mxu0 0.0
  %3163 = vmatpush1.msra.mxu0 %v2183
  %3164 = vmatprep.subr.mxu0 0.0
  %3165 = vmatpush1.msra.mxu0 0.0
  %3166 = vmatprep.subr.mxu0 0.0
  %3167 = vmatpush1.msra.mxu0 0.0
  %3168 = vmatprep.subr.mxu0 0.0
  %3169 = vmatpush1.msra.mxu0 0.0
  %3170 = vmatprep.subr.mxu0 0.0
  %3171 = vmatpush1.msra.mxu0 0.0
  %3172 = vmatprep.subr.mxu0 0.0
  %3173 = vmatpush1.msra.mxu0 0.0
  %3174 = vmatprep.subr.mxu0 0.0
  %3175 = vmatpush1.msra.mxu0 0.0
  %3176 = vmatprep.subr.mxu0 0.0
  %3177 = vmatpush1.msra.mxu0 0.0
  %3178 = vmatprep.subr.mxu0 0.0
  %3179 = vmatpush1.msra.mxu0 0.0
  %3180 = vmatprep.subr.mxu0 0.0
  %3181 = vmatpush1.msra.mxu0 0.0
  %3182 = vmatprep.subr.mxu0 0.0
  %3183 = vmatpush1.msra.mxu0 0.0
  %3184 = vmatprep.subr.mxu0 0.0
  %3185 = vmatpush1.msra.mxu0 0.0
  %3186 = vmatprep.subr.mxu0 0.0
  %3187 = vmatpush1.msra.mxu0 0.0
  %3188 = vmatprep.subr.mxu0 0.0
  %3189 = vmatpush1.msra.mxu0 0.0
  %3190 = vmatprep.subr.mxu0 0.0
  %3191 = vmatpush1.msra.mxu0 0.0
  %3192 = vmatprep.subr.mxu0 0.0
  %3193 = vmatpush1.msra.mxu0 0.0
  %3194 = vmatprep.subr.mxu0 0.0
  %3195 = vmatpush1.msra.mxu0 0.0
  %3196 = vmatprep.subr.mxu0 0.0
  %3197 = vmatpush1.msra.mxu0 0.0
  %3198 = vmatprep.subr.mxu0 0.0
  %3199 = vmatpush1.msra.mxu0 0.0
  %3200 = vmatprep.subr.mxu0 0.0
  %3201 = vmatpush1.msra.mxu0 0.0
  %3202 = vmatprep.subr.mxu0 0.0
  %3203 = vmatpush1.msra.mxu0 0.0
  %3204 = vmatprep.subr.mxu0 0.0
  %3205 = vmatpush1.msra.mxu0 0.0
  %3206 = vmatprep.subr.mxu0 0.0
  %3207 = vmatpush1.msra.mxu0 0.0
  %3208 = vmatprep.subr.mxu0 0.0
  %3209 = vmatpush1.msra.mxu0 0.0
  %3210 = vmatprep.subr.mxu0 0.0
  %3211 = vmatpush1.msra.mxu0 0.0
  %3212 = vmatprep.subr.mxu0 0.0
  %3213 = vmatpush1.msra.mxu0 0.0
  %3214 = vmatprep.subr.mxu0 0.0
  %3215 = vmatpush1.msra.mxu0 0.0
  %3216 = vmatprep.subr.mxu0 0.0
  %3217 = vmatpush1.msra.mxu0 0.0
  %3218 = vmatprep.subr.mxu0 0.0
  %3219 = vmatpush1.msra.mxu0 0.0
  %3220 = vmatprep.subr.mxu0 0.0
  %3221 = vmatpush1.msra.mxu0 0.0
  %3222 = vmatprep.subr.mxu0 0.0
  %3223 = vmatpush1.msra.mxu0 0.0
  %3224 = vmatprep.mubr.f32.mxu0 0.0
  %3225 = vmatmul.mubr.f32.gmra.mrb[0].mxu0 %v3158
  %v3226 = vpop.f32.mrb[0].mxu0
  %v3227 = vadd.f32 0.0, %v3226
  %v3228 = vpop.f32.mrb[0].mxu0
  %3229 = vdwg.mxu0
  %v3231 = vrot.slane %v3227, 4
  %v3233 = vadd.f32 %v2177, %v3231
  %v3234 = vxor.u32 %v3233, 2147483648
  %v3235 = vmul.f32 %v3234, 1.442695
  %v3236 = vpow.pop %v3235
  %v3237 = vadd.f32 %v3236, 1.0
  %v3238 = vrcp.pop %v3237
  %v3239 = vmul.f32 1.0, %v3238
  %v3240 = vtanh.pop %v3233
  %v3242 = vrot.slane %v3143, 2
  %v3244 = vmul.f32 %v3239, %v3242
  %3246 = vrot.lane.b32.xlu0 %v3240, 96
  %v3247 = vpop.permute.xlu0 %3246
  %v3249 = vmul.f32 %v3239, %v3247
  %3251 = vrot.lane.b32.xlu0 %v3249, 16
  %v3252 = vpop.permute.xlu0 %3251
  %v3254 = vadd.f32 %v3244, %v3252
  %v3255 = vtanh.pop %v3254
  %3257 = vrot.lane.b32.xlu0 %v3255, 32
  %v3258 = vpop.permute.xlu0 %3257
  %v3260 = vmul.f32 %v3239, %v3258
  %3262 = vrot.lane.b32.xlu0 %v3260, 96
  %v3263 = vpop.permute.xlu0 %3262
  %3265 = vst.msk [vmem:[%s13 + $0x8] sm:$0x30] %vm1336, %v3263
  %v3266 = vrot.slane %v3260, 4
  %3267 = vrot.lane.b32.xlu0 %v3266, 80
  %v3268 = vpop.permute.xlu0 %3267
  %v3269 = vsel %vm246, %v3268, 0
  %3271 = vmatprep.subr.mxu0 0.0
  %3272 = vmatpush1.msra.mxu0 %v2182
  %3273 = vmatprep.subr.mxu0 0.0
  %3274 = vmatpush1.msra.mxu0 %v2183
  %3275 = vmatprep.subr.mxu0 0.0
  %3276 = vmatpush1.msra.mxu0 0.0
  %3277 = vmatprep.subr.mxu0 0.0
  %3278 = vmatpush1.msra.mxu0 0.0
  %3279 = vmatprep.subr.mxu0 0.0
  %3280 = vmatpush1.msra.mxu0 0.0
  %3281 = vmatprep.subr.mxu0 0.0
  %3282 = vmatpush1.msra.mxu0 0.0
  %3283 = vmatprep.subr.mxu0 0.0
  %3284 = vmatpush1.msra.mxu0 0.0
  %3285 = vmatprep.subr.mxu0 0.0
  %3286 = vmatpush1.msra.mxu0 0.0
  %3287 = vmatprep.subr.mxu0 0.0
  %3288 = vmatpush1.msra.mxu0 0.0
  %3289 = vmatprep.subr.mxu0 0.0
  %3290 = vmatpush1.msra.mxu0 0.0
  %3291 = vmatprep.subr.mxu0 0.0
  %3292 = vmatpush1.msra.mxu0 0.0
  %3293 = vmatprep.subr.mxu0 0.0
  %3294 = vmatpush1.msra.mxu0 0.0
  %3295 = vmatprep.subr.mxu0 0.0
  %3296 = vmatpush1.msra.mxu0 0.0
  %3297 = vmatprep.subr.mxu0 0.0
  %3298 = vmatpush1.msra.mxu0 0.0
  %3299 = vmatprep.subr.mxu0 0.0
  %3300 = vmatpush1.msra.mxu0 0.0
  %3301 = vmatprep.subr.mxu0 0.0
  %3302 = vmatpush1.msra.mxu0 0.0
  %3303 = vmatprep.subr.mxu0 0.0
  %3304 = vmatpush1.msra.mxu0 0.0
  %3305 = vmatprep.subr.mxu0 0.0
  %3306 = vmatpush1.msra.mxu0 0.0
  %3307 = vmatprep.subr.mxu0 0.0
  %3308 = vmatpush1.msra.mxu0 0.0
  %3309 = vmatprep.subr.mxu0 0.0
  %3310 = vmatpush1.msra.mxu0 0.0
  %3311 = vmatprep.subr.mxu0 0.0
  %3312 = vmatpush1.msra.mxu0 0.0
  %3313 = vmatprep.subr.mxu0 0.0
  %3314 = vmatpush1.msra.mxu0 0.0
  %3315 = vmatprep.subr.mxu0 0.0
  %3316 = vmatpush1.msra.mxu0 0.0
  %3317 = vmatprep.subr.mxu0 0.0
  %3318 = vmatpush1.msra.mxu0 0.0
  %3319 = vmatprep.subr.mxu0 0.0
  %3320 = vmatpush1.msra.mxu0 0.0
  %3321 = vmatprep.subr.mxu0 0.0
  %3322 = vmatpush1.msra.mxu0 0.0
  %3323 = vmatprep.subr.mxu0 0.0
  %3324 = vmatpush1.msra.mxu0 0.0
  %3325 = vmatprep.subr.mxu0 0.0
  %3326 = vmatpush1.msra.mxu0 0.0
  %3327 = vmatprep.subr.mxu0 0.0
  %3328 = vmatpush1.msra.mxu0 0.0
  %3329 = vmatprep.subr.mxu0 0.0
  %3330 = vmatpush1.msra.mxu0 0.0
  %3331 = vmatprep.subr.mxu0 0.0
  %3332 = vmatpush1.msra.mxu0 0.0
  %3333 = vmatprep.subr.mxu0 0.0
  %3334 = vmatpush1.msra.mxu0 0.0
  %3335 = vmatprep.mubr.f32.mxu0 0.0
  %3336 = vmatmul.mubr.f32.gmra.mrb[0].mxu0 %v3269
  %v3337 = vpop.f32.mrb[0].mxu0
  %v3338 = vadd.f32 0.0, %v3337
  %v3339 = vpop.f32.mrb[0].mxu0
  %3340 = vdwg.mxu0
  %v3342 = vrot.slane %v3338, 6
  %v3344 = vadd.f32 %v2177, %v3342
  %v3345 = vxor.u32 %v3344, 2147483648
  %v3346 = vmul.f32 %v3345, 1.442695
  %v3347 = vpow.pop %v3346
  %v3348 = vadd.f32 %v3347, 1.0
  %v3349 = vrcp.pop %v3348
  %v3350 = vmul.f32 1.0, %v3349
  %v3351 = vtanh.pop %v3344
  %v3353 = vrot.slane %v3254, 2
  %v3355 = vmul.f32 %v3350, %v3353
  %3357 = vrot.lane.b32.xlu0 %v3351, 96
  %v3358 = vpop.permute.xlu0 %3357
  %v3360 = vmul.f32 %v3350, %v3358
  %3362 = vrot.lane.b32.xlu0 %v3360, 16
  %v3363 = vpop.permute.xlu0 %3362
  %v3365 = vadd.f32 %v3355, %v3363
  %v3366 = vtanh.pop %v3365
  %3368 = vrot.lane.b32.xlu0 %v3366, 32
  %v3369 = vpop.permute.xlu0 %3368
  %v3371 = vmul.f32 %v3350, %v3369
  %3373 = vrot.lane.b32.xlu0 %v3371, 96
  %v3374 = vpop.permute.xlu0 %3373
  %3376 = vst.msk [vmem:[%s13 + $0x8] sm:$0xc] %vm1448, %v3374
  %v3377 = vrot.slane %v3371, 2
  %3378 = vrot.lane.b32.xlu0 %v3377, 80
  %v3379 = vpop.permute.xlu0 %3378
  %v3380 = vsel %vm246, %v3379, 0
  %3382 = vmatprep.subr.mxu0 0.0
  %3383 = vmatpush1.msra.mxu0 %v2182
  %3384 = vmatprep.subr.mxu0 0.0
  %3385 = vmatpush1.msra.mxu0 %v2183
  %3386 = vmatprep.subr.mxu0 0.0
  %3387 = vmatpush1.msra.mxu0 0.0
  %3388 = vmatprep.subr.mxu0 0.0
  %3389 = vmatpush1.msra.mxu0 0.0
  %3390 = vmatprep.subr.mxu0 0.0
  %3391 = vmatpush1.msra.mxu0 0.0
  %3392 = vmatprep.subr.mxu0 0.0
  %3393 = vmatpush1.msra.mxu0 0.0
  %3394 = vmatprep.subr.mxu0 0.0
  %3395 = vmatpush1.msra.mxu0 0.0
  %3396 = vmatprep.subr.mxu0 0.0
  %3397 = vmatpush1.msra.mxu0 0.0
  %3398 = vmatprep.subr.mxu0 0.0
  %3399 = vmatpush1.msra.mxu0 0.0
  %3400 = vmatprep.subr.mxu0 0.0
  %3401 = vmatpush1.msra.mxu0 0.0
  %3402 = vmatprep.subr.mxu0 0.0
  %3403 = vmatpush1.msra.mxu0 0.0
  %3404 = vmatprep.subr.mxu0 0.0
  %3405 = vmatpush1.msra.mxu0 0.0
  %3406 = vmatprep.subr.mxu0 0.0
  %3407 = vmatpush1.msra.mxu0 0.0
  %3408 = vmatprep.subr.mxu0 0.0
  %3409 = vmatpush1.msra.mxu0 0.0
  %3410 = vmatprep.subr.mxu0 0.0
  %3411 = vmatpush1.msra.mxu0 0.0
  %3412 = vmatprep.subr.mxu0 0.0
  %3413 = vmatpush1.msra.mxu0 0.0
  %3414 = vmatprep.subr.mxu0 0.0
  %3415 = vmatpush1.msra.mxu0 0.0
  %3416 = vmatprep.subr.mxu0 0.0
  %3417 = vmatpush1.msra.mxu0 0.0
  %3418 = vmatprep.subr.mxu0 0.0
  %3419 = vmatpush1.msra.mxu0 0.0
  %3420 = vmatprep.subr.mxu0 0.0
  %3421 = vmatpush1.msra.mxu0 0.0
  %3422 = vmatprep.subr.mxu0 0.0
  %3423 = vmatpush1.msra.mxu0 0.0
  %3424 = vmatprep.subr.mxu0 0.0
  %3425 = vmatpush1.msra.mxu0 0.0
  %3426 = vmatprep.subr.mxu0 0.0
  %3427 = vmatpush1.msra.mxu0 0.0
  %3428 = vmatprep.subr.mxu0 0.0
  %3429 = vmatpush1.msra.mxu0 0.0
  %3430 = vmatprep.subr.mxu0 0.0
  %3431 = vmatpush1.msra.mxu0 0.0
  %3432 = vmatprep.subr.mxu0 0.0
  %3433 = vmatpush1.msra.mxu0 0.0
  %3434 = vmatprep.subr.mxu0 0.0
  %3435 = vmatpush1.msra.mxu0 0.0
  %3436 = vmatprep.subr.mxu0 0.0
  %3437 = vmatpush1.msra.mxu0 0.0
  %3438 = vmatprep.subr.mxu0 0.0
  %3439 = vmatpush1.msra.mxu0 0.0
  %3440 = vmatprep.subr.mxu0 0.0
  %3441 = vmatpush1.msra.mxu0 0.0
  %3442 = vmatprep.subr.mxu0 0.0
  %3443 = vmatpush1.msra.mxu0 0.0
  %3444 = vmatprep.subr.mxu0 0.0
  %3445 = vmatpush1.msra.mxu0 0.0
  %3446 = vmatprep.mubr.f32.mxu0 0.0
  %3447 = vmatmul.mubr.f32.gmra.mrb[0].mxu0 %v3380
  %v3448 = vpop.f32.mrb[0].mxu0
  %v3449 = vadd.f32 0.0, %v3448
  %v3450 = vpop.f32.mrb[0].mxu0
  %3451 = vdwg.mxu0
  %v3452 = vadd.f32 %v2177, %v3449
  %v3453 = vxor.u32 %v3452, 2147483648
  %v3454 = vmul.f32 %v3453, 1.442695
  %v3455 = vpow.pop %v3454
  %v3456 = vadd.f32 %v3455, 1.0
  %v3457 = vrcp.pop %v3456
  %v3458 = vmul.f32 1.0, %v3457
  %v3459 = vtanh.pop %v3452
  %v3461 = vrot.slane %v3365, 2
  %v3463 = vmul.f32 %v3458, %v3461
  %3465 = vrot.lane.b32.xlu0 %v3459, 96
  %v3466 = vpop.permute.xlu0 %3465
  %v3468 = vmul.f32 %v3458, %v3466
  %3470 = vrot.lane.b32.xlu0 %v3468, 16
  %v3471 = vpop.permute.xlu0 %3470
  %v3473 = vadd.f32 %v3463, %v3471
  %v3474 = vtanh.pop %v3473
  %3476 = vrot.lane.b32.xlu0 %v3474, 32
  %v3477 = vpop.permute.xlu0 %3476
  %v3479 = vmul.f32 %v3458, %v3477
  %3481 = vrot.lane.b32.xlu0 %v3479, 96
  %v3482 = vpop.permute.xlu0 %3481
  %3484 = vst.msk [vmem:[%s13 + $0x8] sm:$0x3] %vm1557, %v3482
  %3485 = vrot.lane.b32.xlu0 %v3479, 80
  %v3486 = vpop.permute.xlu0 %3485
  %v3487 = vsel %vm246, %v3486, 0
  %3489 = vmatprep.subr.mxu0 0.0
  %3490 = vmatpush1.msra.mxu0 %v2182
  %3491 = vmatprep.subr.mxu0 0.0
  %3492 = vmatpush1.msra.mxu0 %v2183
  %3493 = vmatprep.subr.mxu0 0.0
  %3494 = vmatpush1.msra.mxu0 0.0
  %3495 = vmatprep.subr.mxu0 0.0
  %3496 = vmatpush1.msra.mxu0 0.0
  %3497 = vmatprep.subr.mxu0 0.0
  %3498 = vmatpush1.msra.mxu0 0.0
  %3499 = vmatprep.subr.mxu0 0.0
  %3500 = vmatpush1.msra.mxu0 0.0
  %3501 = vmatprep.subr.mxu0 0.0
  %3502 = vmatpush1.msra.mxu0 0.0
  %3503 = vmatprep.subr.mxu0 0.0
  %3504 = vmatpush1.msra.mxu0 0.0
  %3505 = vmatprep.subr.mxu0 0.0
  %3506 = vmatpush1.msra.mxu0 0.0
  %3507 = vmatprep.subr.mxu0 0.0
  %3508 = vmatpush1.msra.mxu0 0.0
  %3509 = vmatprep.subr.mxu0 0.0
  %3510 = vmatpush1.msra.mxu0 0.0
  %3511 = vmatprep.subr.mxu0 0.0
  %3512 = vmatpush1.msra.mxu0 0.0
  %3513 = vmatprep.subr.mxu0 0.0
  %3514 = vmatpush1.msra.mxu0 0.0
  %3515 = vmatprep.subr.mxu0 0.0
  %3516 = vmatpush1.msra.mxu0 0.0
  %3517 = vmatprep.subr.mxu0 0.0
  %3518 = vmatpush1.msra.mxu0 0.0
  %3519 = vmatprep.subr.mxu0 0.0
  %3520 = vmatpush1.msra.mxu0 0.0
  %3521 = vmatprep.subr.mxu0 0.0
  %3522 = vmatpush1.msra.mxu0 0.0
  %3523 = vmatprep.subr.mxu0 0.0
  %3524 = vmatpush1.msra.mxu0 0.0
  %3525 = vmatprep.subr.mxu0 0.0
  %3526 = vmatpush1.msra.mxu0 0.0
  %3527 = vmatprep.subr.mxu0 0.0
  %3528 = vmatpush1.msra.mxu0 0.0
  %3529 = vmatprep.subr.mxu0 0.0
  %3530 = vmatpush1.msra.mxu0 0.0
  %3531 = vmatprep.subr.mxu0 0.0
  %3532 = vmatpush1.msra.mxu0 0.0
  %3533 = vmatprep.subr.mxu0 0.0
  %3534 = vmatpush1.msra.mxu0 0.0
  %3535 = vmatprep.subr.mxu0 0.0
  %3536 = vmatpush1.msra.mxu0 0.0
  %3537 = vmatprep.subr.mxu0 0.0
  %3538 = vmatpush1.msra.mxu0 0.0
  %3539 = vmatprep.subr.mxu0 0.0
  %3540 = vmatpush1.msra.mxu0 0.0
  %3541 = vmatprep.subr.mxu0 0.0
  %3542 = vmatpush1.msra.mxu0 0.0
  %3543 = vmatprep.subr.mxu0 0.0
  %3544 = vmatpush1.msra.mxu0 0.0
  %3545 = vmatprep.subr.mxu0 0.0
  %3546 = vmatpush1.msra.mxu0 0.0
  %3547 = vmatprep.subr.mxu0 0.0
  %3548 = vmatpush1.msra.mxu0 0.0
  %3549 = vmatprep.subr.mxu0 0.0
  %3550 = vmatpush1.msra.mxu0 0.0
  %3551 = vmatprep.subr.mxu0 0.0
  %3552 = vmatpush1.msra.mxu0 0.0
  %3553 = vmatprep.mubr.f32.mxu0 0.0
  %3554 = vmatmul.mubr.f32.gmra.mrb[0].mxu0 %v3487
  %v3555 = vpop.f32.mrb[0].mxu0
  %v3556 = vadd.f32 0.0, %v3555
  %v3557 = vpop.f32.mrb[0].mxu0
  %3558 = vdwg.mxu0
  %v3560 = vrot.slane %v3556, 2
  %v3562 = vadd.f32 %v2172, %v3560
  %v3563 = vxor.u32 %v3562, 2147483648
  %v3564 = vmul.f32 %v3563, 1.442695
  %v3565 = vpow.pop %v3564
  %v3566 = vadd.f32 %v3565, 1.0
  %v3567 = vrcp.pop %v3566
  %v3568 = vmul.f32 1.0, %v3567
  %v3569 = vtanh.pop %v3562
  %v3571 = vrot.slane %v3473, 2
  %v3573 = vmul.f32 %v3568, %v3571
  %3575 = vrot.lane.b32.xlu0 %v3569, 96
  %v3576 = vpop.permute.xlu0 %3575
  %v3578 = vmul.f32 %v3568, %v3576
  %3580 = vrot.lane.b32.xlu0 %v3578, 16
  %v3581 = vpop.permute.xlu0 %3580
  %v3583 = vadd.f32 %v3573, %v3581
  %v3584 = vtanh.pop %v3583
  %3586 = vrot.lane.b32.xlu0 %v3584, 32
  %v3587 = vpop.permute.xlu0 %3586
  %v3589 = vmul.f32 %v3568, %v3587
  %3591 = vrot.lane.b32.xlu0 %v3589, 96
  %v3592 = vpop.permute.xlu0 %3591
  %3594 = vst.msk [vmem:[%s13] sm:$0xc0] %vm1224, %v3592
  %v3595 = vrot.slane %v3589, 6
  %3596 = vrot.lane.b32.xlu0 %v3595, 80
  %v3597 = vpop.permute.xlu0 %3596
  %v3598 = vsel %vm246, %v3597, 0
  %3600 = vmatprep.subr.mxu0 0.0
  %3601 = vmatpush1.msra.mxu0 %v2182
  %3602 = vmatprep.subr.mxu0 0.0
  %3603 = vmatpush1.msra.mxu0 %v2183
  %3604 = vmatprep.subr.mxu0 0.0
  %3605 = vmatpush1.msra.mxu0 0.0
  %3606 = vmatprep.subr.mxu0 0.0
  %3607 = vmatpush1.msra.mxu0 0.0
  %3608 = vmatprep.subr.mxu0 0.0
  %3609 = vmatpush1.msra.mxu0 0.0
  %3610 = vmatprep.subr.mxu0 0.0
  %3611 = vmatpush1.msra.mxu0 0.0
  %3612 = vmatprep.subr.mxu0 0.0
  %3613 = vmatpush1.msra.mxu0 0.0
  %3614 = vmatprep.subr.mxu0 0.0
  %3615 = vmatpush1.msra.mxu0 0.0
  %3616 = vmatprep.subr.mxu0 0.0
  %3617 = vmatpush1.msra.mxu0 0.0
  %3618 = vmatprep.subr.mxu0 0.0
  %3619 = vmatpush1.msra.mxu0 0.0
  %3620 = vmatprep.subr.mxu0 0.0
  %3621 = vmatpush1.msra.mxu0 0.0
  %3622 = vmatprep.subr.mxu0 0.0
  %3623 = vmatpush1.msra.mxu0 0.0
  %3624 = vmatprep.subr.mxu0 0.0
  %3625 = vmatpush1.msra.mxu0 0.0
  %3626 = vmatprep.subr.mxu0 0.0
  %3627 = vmatpush1.msra.mxu0 0.0
  %3628 = vmatprep.subr.mxu0 0.0
  %3629 = vmatpush1.msra.mxu0 0.0
  %3630 = vmatprep.subr.mxu0 0.0
  %3631 = vmatpush1.msra.mxu0 0.0
  %3632 = vmatprep.subr.mxu0 0.0
  %3633 = vmatpush1.msra.mxu0 0.0
  %3634 = vmatprep.subr.mxu0 0.0
  %3635 = vmatpush1.msra.mxu0 0.0
  %3636 = vmatprep.subr.mxu0 0.0
  %3637 = vmatpush1.msra.mxu0 0.0
  %3638 = vmatprep.subr.mxu0 0.0
  %3639 = vmatpush1.msra.mxu0 0.0
  %3640 = vmatprep.subr.mxu0 0.0
  %3641 = vmatpush1.msra.mxu0 0.0
  %3642 = vmatprep.subr.mxu0 0.0
  %3643 = vmatpush1.msra.mxu0 0.0
  %3644 = vmatprep.subr.mxu0 0.0
  %3645 = vmatpush1.msra.mxu0 0.0
  %3646 = vmatprep.subr.mxu0 0.0
  %3647 = vmatpush1.msra.mxu0 0.0
  %3648 = vmatprep.subr.mxu0 0.0
  %3649 = vmatpush1.msra.mxu0 0.0
  %3650 = vmatprep.subr.mxu0 0.0
  %3651 = vmatpush1.msra.mxu0 0.0
  %3652 = vmatprep.subr.mxu0 0.0
  %3653 = vmatpush1.msra.mxu0 0.0
  %3654 = vmatprep.subr.mxu0 0.0
  %3655 = vmatpush1.msra.mxu0 0.0
  %3656 = vmatprep.subr.mxu0 0.0
  %3657 = vmatpush1.msra.mxu0 0.0
  %3658 = vmatprep.subr.mxu0 0.0
  %3659 = vmatpush1.msra.mxu0 0.0
  %3660 = vmatprep.subr.mxu0 0.0
  %3661 = vmatpush1.msra.mxu0 0.0
  %3662 = vmatprep.subr.mxu0 0.0
  %3663 = vmatpush1.msra.mxu0 0.0
  %3664 = vmatprep.mubr.f32.mxu0 0.0
  %3665 = vmatmul.mubr.f32.gmra.mrb[0].mxu0 %v3598
  %v3666 = vpop.f32.mrb[0].mxu0
  %v3667 = vadd.f32 0.0, %v3666
  %v3668 = vpop.f32.mrb[0].mxu0
  %3669 = vdwg.mxu0
  %v3671 = vrot.slane %v3667, 4
  %v3673 = vadd.f32 %v2172, %v3671
  %v3674 = vxor.u32 %v3673, 2147483648
  %v3675 = vmul.f32 %v3674, 1.442695
  %v3676 = vpow.pop %v3675
  %v3677 = vadd.f32 %v3676, 1.0
  %v3678 = vrcp.pop %v3677
  %v3679 = vmul.f32 1.0, %v3678
  %v3680 = vtanh.pop %v3673
  %v3682 = vrot.slane %v3583, 2
  %v3684 = vmul.f32 %v3679, %v3682
  %3686 = vrot.lane.b32.xlu0 %v3680, 96
  %v3687 = vpop.permute.xlu0 %3686
  %v3689 = vmul.f32 %v3679, %v3687
  %3691 = vrot.lane.b32.xlu0 %v3689, 16
  %v3692 = vpop.permute.xlu0 %3691
  %v3694 = vadd.f32 %v3684, %v3692
  %v3695 = vtanh.pop %v3694
  %3697 = vrot.lane.b32.xlu0 %v3695, 32
  %v3698 = vpop.permute.xlu0 %3697
  %v3700 = vmul.f32 %v3679, %v3698
  %3702 = vrot.lane.b32.xlu0 %v3700, 96
  %v3703 = vpop.permute.xlu0 %3702
  %3705 = vst.msk [vmem:[%s13] sm:$0x30] %vm1336, %v3703
  %v3706 = vrot.slane %v3700, 4
  %3707 = vrot.lane.b32.xlu0 %v3706, 80
  %v3708 = vpop.permute.xlu0 %3707
  %v3709 = vsel %vm246, %v3708, 0
  %3711 = vmatprep.subr.mxu0 0.0
  %3712 = vmatpush1.msra.mxu0 %v2182
  %3713 = vmatprep.subr.mxu0 0.0
  %3714 = vmatpush1.msra.mxu0 %v2183
  %3715 = vmatprep.subr.mxu0 0.0
  %3716 = vmatpush1.msra.mxu0 0.0
  %3717 = vmatprep.subr.mxu0 0.0
  %3718 = vmatpush1.msra.mxu0 0.0
  %3719 = vmatprep.subr.mxu0 0.0
  %3720 = vmatpush1.msra.mxu0 0.0
  %3721 = vmatprep.subr.mxu0 0.0
  %3722 = vmatpush1.msra.mxu0 0.0
  %3723 = vmatprep.subr.mxu0 0.0
  %3724 = vmatpush1.msra.mxu0 0.0
  %3725 = vmatprep.subr.mxu0 0.0
  %3726 = vmatpush1.msra.mxu0 0.0
  %3727 = vmatprep.subr.mxu0 0.0
  %3728 = vmatpush1.msra.mxu0 0.0
  %3729 = vmatprep.subr.mxu0 0.0
  %3730 = vmatpush1.msra.mxu0 0.0
  %3731 = vmatprep.subr.mxu0 0.0
  %3732 = vmatpush1.msra.mxu0 0.0
  %3733 = vmatprep.subr.mxu0 0.0
  %3734 = vmatpush1.msra.mxu0 0.0
  %3735 = vmatprep.subr.mxu0 0.0
  %3736 = vmatpush1.msra.mxu0 0.0
  %3737 = vmatprep.subr.mxu0 0.0
  %3738 = vmatpush1.msra.mxu0 0.0
  %3739 = vmatprep.subr.mxu0 0.0
  %3740 = vmatpush1.msra.mxu0 0.0
  %3741 = vmatprep.subr.mxu0 0.0
  %3742 = vmatpush1.msra.mxu0 0.0
  %3743 = vmatprep.subr.mxu0 0.0
  %3744 = vmatpush1.msra.mxu0 0.0
  %3745 = vmatprep.subr.mxu0 0.0
  %3746 = vmatpush1.msra.mxu0 0.0
  %3747 = vmatprep.subr.mxu0 0.0
  %3748 = vmatpush1.msra.mxu0 0.0
  %3749 = vmatprep.subr.mxu0 0.0
  %3750 = vmatpush1.msra.mxu0 0.0
  %3751 = vmatprep.subr.mxu0 0.0
  %3752 = vmatpush1.msra.mxu0 0.0
  %3753 = vmatprep.subr.mxu0 0.0
  %3754 = vmatpush1.msra.mxu0 0.0
  %3755 = vmatprep.subr.mxu0 0.0
  %3756 = vmatpush1.msra.mxu0 0.0
  %3757 = vmatprep.subr.mxu0 0.0
  %3758 = vmatpush1.msra.mxu0 0.0
  %3759 = vmatprep.subr.mxu0 0.0
  %3760 = vmatpush1.msra.mxu0 0.0
  %3761 = vmatprep.subr.mxu0 0.0
  %3762 = vmatpush1.msra.mxu0 0.0
  %3763 = vmatprep.subr.mxu0 0.0
  %3764 = vmatpush1.msra.mxu0 0.0
  %3765 = vmatprep.subr.mxu0 0.0
  %3766 = vmatpush1.msra.mxu0 0.0
  %3767 = vmatprep.subr.mxu0 0.0
  %3768 = vmatpush1.msra.mxu0 0.0
  %3769 = vmatprep.subr.mxu0 0.0
  %3770 = vmatpush1.msra.mxu0 0.0
  %3771 = vmatprep.subr.mxu0 0.0
  %3772 = vmatpush1.msra.mxu0 0.0
  %3773 = vmatprep.subr.mxu0 0.0
  %3774 = vmatpush1.msra.mxu0 0.0
  %3775 = vmatprep.mubr.f32.mxu0 0.0
  %3776 = vmatmul.mubr.f32.gmra.mrb[0].mxu0 %v3709
  %v3777 = vpop.f32.mrb[0].mxu0
  %v3778 = vadd.f32 0.0, %v3777
  %v3779 = vpop.f32.mrb[0].mxu0
  %3780 = vdwg.mxu0
  %v3782 = vrot.slane %v3778, 6
  %v3784 = vadd.f32 %v2172, %v3782
  %v3785 = vxor.u32 %v3784, 2147483648
  %v3786 = vmul.f32 %v3785, 1.442695
  %v3787 = vpow.pop %v3786
  %v3788 = vadd.f32 %v3787, 1.0
  %v3789 = vrcp.pop %v3788
  %v3790 = vmul.f32 1.0, %v3789
  %v3791 = vtanh.pop %v3784
  %v3793 = vrot.slane %v3694, 2
  %v3795 = vmul.f32 %v3790, %v3793
  %3797 = vrot.lane.b32.xlu0 %v3791, 96
  %v3798 = vpop.permute.xlu0 %3797
  %v3800 = vmul.f32 %v3790, %v3798
  %3802 = vrot.lane.b32.xlu0 %v3800, 16
  %v3803 = vpop.permute.xlu0 %3802
  %v3805 = vadd.f32 %v3795, %v3803
  %v3806 = vtanh.pop %v3805
  %3808 = vrot.lane.b32.xlu0 %v3806, 32
  %v3809 = vpop.permute.xlu0 %3808
  %v3811 = vmul.f32 %v3790, %v3809
  %3813 = vrot.lane.b32.xlu0 %v3811, 96
  %v3814 = vpop.permute.xlu0 %3813
  %3816 = vst.msk [vmem:[%s13] sm:$0xc] %vm1448, %v3814
  %v3817 = vrot.slane %v3811, 2
  %3818 = vrot.lane.b32.xlu0 %v3817, 80
  %v3819 = vpop.permute.xlu0 %3818
  %v3820 = vsel %vm246, %v3819, 0
  %3822 = vmatprep.subr.mxu0 0.0
  %3823 = vmatpush1.msra.mxu0 %v2182
  %3824 = vmatprep.subr.mxu0 0.0
  %3825 = vmatpush1.msra.mxu0 %v2183
  %3826 = vmatprep.subr.mxu0 0.0
  %3827 = vmatpush1.msra.mxu0 0.0
  %3828 = vmatprep.subr.mxu0 0.0
  %3829 = vmatpush1.msra.mxu0 0.0
  %3830 = vmatprep.subr.mxu0 0.0
  %3831 = vmatpush1.msra.mxu0 0.0
  %3832 = vmatprep.subr.mxu0 0.0
  %3833 = vmatpush1.msra.mxu0 0.0
  %3834 = vmatprep.subr.mxu0 0.0
  %3835 = vmatpush1.msra.mxu0 0.0
  %3836 = vmatprep.subr.mxu0 0.0
  %3837 = vmatpush1.msra.mxu0 0.0
  %3838 = vmatprep.subr.mxu0 0.0
  %3839 = vmatpush1.msra.mxu0 0.0
  %3840 = vmatprep.subr.mxu0 0.0
  %3841 = vmatpush1.msra.mxu0 0.0
  %3842 = vmatprep.subr.mxu0 0.0
  %3843 = vmatpush1.msra.mxu0 0.0
  %3844 = vmatprep.subr.mxu0 0.0
  %3845 = vmatpush1.msra.mxu0 0.0
  %3846 = vmatprep.subr.mxu0 0.0
  %3847 = vmatpush1.msra.mxu0 0.0
  %3848 = vmatprep.subr.mxu0 0.0
  %3849 = vmatpush1.msra.mxu0 0.0
  %3850 = vmatprep.subr.mxu0 0.0
  %3851 = vmatpush1.msra.mxu0 0.0
  %3852 = vmatprep.subr.mxu0 0.0
  %3853 = vmatpush1.msra.mxu0 0.0
  %3854 = vmatprep.subr.mxu0 0.0
  %3855 = vmatpush1.msra.mxu0 0.0
  %3856 = vmatprep.subr.mxu0 0.0
  %3857 = vmatpush1.msra.mxu0 0.0
  %3858 = vmatprep.subr.mxu0 0.0
  %3859 = vmatpush1.msra.mxu0 0.0
  %3860 = vmatprep.subr.mxu0 0.0
  %3861 = vmatpush1.msra.mxu0 0.0
  %3862 = vmatprep.subr.mxu0 0.0
  %3863 = vmatpush1.msra.mxu0 0.0
  %3864 = vmatprep.subr.mxu0 0.0
  %3865 = vmatpush1.msra.mxu0 0.0
  %3866 = vmatprep.subr.mxu0 0.0
  %3867 = vmatpush1.msra.mxu0 0.0
  %3868 = vmatprep.subr.mxu0 0.0
  %3869 = vmatpush1.msra.mxu0 0.0
  %3870 = vmatprep.subr.mxu0 0.0
  %3871 = vmatpush1.msra.mxu0 0.0
  %3872 = vmatprep.subr.mxu0 0.0
  %3873 = vmatpush1.msra.mxu0 0.0
  %3874 = vmatprep.subr.mxu0 0.0
  %3875 = vmatpush1.msra.mxu0 0.0
  %3876 = vmatprep.subr.mxu0 0.0
  %3877 = vmatpush1.msra.mxu0 0.0
  %3878 = vmatprep.subr.mxu0 0.0
  %3879 = vmatpush1.msra.mxu0 0.0
  %3880 = vmatprep.subr.mxu0 0.0
  %3881 = vmatpush1.msra.mxu0 0.0
  %3882 = vmatprep.subr.mxu0 0.0
  %3883 = vmatpush1.msra.mxu0 0.0
  %3884 = vmatprep.subr.mxu0 0.0
  %3885 = vmatpush1.msra.mxu0 0.0
  %3886 = vmatprep.mubr.f32.mxu0 0.0
  %3887 = vmatmul.mubr.f32.gmra.mrb[0].mxu0 %v3820
  %v3888 = vpop.f32.mrb[0].mxu0
  %v3889 = vadd.f32 0.0, %v3888
  %v3890 = vpop.f32.mrb[0].mxu0
  %3891 = vdwg.mxu0
  %v3892 = vadd.f32 %v2172, %v3889
  %v3893 = vxor.u32 %v3892, 2147483648
  %v3894 = vmul.f32 %v3893, 1.442695
  %v3895 = vpow.pop %v3894
  %v3896 = vadd.f32 %v3895, 1.0
  %v3897 = vrcp.pop %v3896
  %v3898 = vmul.f32 1.0, %v3897
  %v3899 = vtanh.pop %v3892
  %v3901 = vrot.slane %v3805, 2
  %v3903 = vmul.f32 %v3898, %v3901
  %3905 = vrot.lane.b32.xlu0 %v3899, 96
  %v3906 = vpop.permute.xlu0 %3905
  %v3908 = vmul.f32 %v3898, %v3906
  %3910 = vrot.lane.b32.xlu0 %v3908, 16
  %v3911 = vpop.permute.xlu0 %3910
  %v3913 = vadd.f32 %v3903, %v3911
  %v3914 = vtanh.pop %v3913
  %3916 = vrot.lane.b32.xlu0 %v3914, 32
  %v3917 = vpop.permute.xlu0 %3916
  %v3919 = vmul.f32 %v3898, %v3917
  %3921 = vrot.lane.b32.xlu0 %v3919, 96
  %v3922 = vpop.permute.xlu0 %3921
  %3924 = vst.msk [vmem:[%s13] sm:$0x3] %vm1557, %v3922
  // Predicated region
  $region54: #{reencoder_forward.1} parent=0 // pred_check
    _
  $region55: #{reencoder_forward.1} parent=0 // pred_check_branch
    %3926 = sbr.rel (0) target = $region57
  $region56: #{reencoder_forward.1} parent=0 // pred_region
    _
  $region57: #{reencoder_forward.1} parent=0 // pred_fallthru
    _
  // Predicated region
  $region58: #{reencoder_forward.1} parent=0 // pred_check
    _
  $region59: #{reencoder_forward.1} parent=0 // pred_check_branch
    %3928 = sbr.rel (0) target = $region61
  $region60: #{reencoder_forward.1} parent=0 // pred_region
    _
  $region61: #{reencoder_forward.1} parent=0 // pred_fallthru
    _

</llo_original>
